<compile_context>
chip_gen: v7x
topology: tpu7x:2x2x1
jax: 0.10.0
libtpu: 0.0.40
codegen_flags: <defaults>
</compile_context>

<pallas_src>
import functools

import jax
import jax.numpy as jnp
from jax.experimental import pallas as pl
from jax.experimental.pallas import tpu as pltpu

K = 7          # conv kernel size
PAD = 3        # reflect padding on each side
LANE = 128     # TPU lane width


def _round_up(x, m):
    return ((x + m - 1) // m) * m


def _conv7x7_kernel(x_ref, w_ref, b_ref, o_ref, shift_ref, *,
                    cin, cout, wp_pad, nw, shift_len):
    """One batch element per grid step.

    x_ref     : (1, Cin, Ltile)     flattened reflect-padded image; row stride
                                    Wp_pad (multiple of 128), zero tail pad
    w_ref     : (K, Cout, K*Cin)    per-kh weight matrices, rows ordered (kw, ci)
    b_ref     : (Cout, 1)           bias
    o_ref     : (1, Cout, NW)       lane-dense output, NW = H*Wp_pad
    shift_ref : (K*Cin, SHIFT_LEN)  VMEM scratch: 7 kw-shifted input copies
    """
    # --- the 7 kw lane-shifts, each done once and reused for every kh tap ---
    # shift_ref[kw*Cin + ci, q] = x_flat[ci, q + kw]
    for kw in range(K):
        shift_ref[kw * cin:(kw + 1) * cin, :] = (
            x_ref[0, :, kw:kw + shift_len].astype(shift_ref.dtype))

    # --- 7 accumulating MXU matmuls; every RHS is a 128-aligned static view
    # of the shift scratch, so no im2col patch is ever materialised.
    acc = jnp.zeros((cout, nw), jnp.float32)
    for kh in range(K):
        start = kh * wp_pad                                  # static, 128-aligned
        acc += jnp.dot(w_ref[kh], shift_ref[:, start:start + nw],
                       preferred_element_type=jnp.float32)

    o_ref[0] = (acc + b_ref[...]).astype(o_ref.dtype)        # bias over lanes


def feature_map_block(x_nchw, weight_oihw, bias):
    """Forward pass of FeatureMapBlock.

    x_nchw     : (B, Cin, H, W)      float32
    weight_oihw: (Cout, Cin, 7, 7)   float32  (torch Conv2d layout)
    bias       : (Cout,)             float32
    returns    : (B, Cout, H, W)     float32
    """
    B, Cin, H, W = x_nchw.shape
    Cout = weight_oihw.shape[0]
    assert H >= PAD + 1 and W >= PAD + 1, "reflect padding needs H, W >= 4"

    Hp, Wp = H + 2 * PAD, W + 2 * PAD
    Wp_pad = _round_up(Wp, LANE)            # lane-aligned row stride
    NW = H * Wp_pad                         # output lanes per image (dense vst)
    SHIFT_LEN = (K - 1) * Wp_pad + NW       # == Hp * Wp_pad
    # Invariant: tap reads stay inside the (zero-tail-padded) flat input:
    #   max read = (K-1) + SHIFT_LEN - 1  <  Ltile
    Ltile = _round_up(SHIFT_LEN + K - 1, LANE)

    # Per-block VMEM budget (v7x scoped default is 32 MiB): shift scratch +
    # double-buffered input and output blocks.
    vmem_est = 4 * (K * Cin * SHIFT_LEN + 2 * Cin * Ltile + 2 * Cout * NW)
    assert vmem_est < 24 * 1024 * 1024, (
        "image too large for the single-tile kernel; add row tiling")

    # ---------------- wrapper-side layout glue (no compute) ----------------
    x_pad = jnp.pad(x_nchw, ((0, 0), (0, 0), (PAD, PAD), (PAD, PAD)),
                    mode="reflect")                           # (B, Cin, Hp, Wp)
    x_pad = jnp.pad(x_pad, ((0, 0), (0, 0), (0, 0), (0, Wp_pad - Wp)))
    x_flat = x_pad.reshape(B, Cin, Hp * Wp_pad)
    x_flat = jnp.pad(x_flat, ((0, 0), (0, 0), (0, Ltile - Hp * Wp_pad)))

    # Per-kh weight matrices; contraction rows ordered (kw, ci) to match the
    # shift-scratch row order.
    w_mats = jnp.transpose(weight_oihw, (2, 0, 3, 1)).reshape(K, Cout, K * Cin)
    b2d = bias.reshape(Cout, 1)

    kernel = functools.partial(_conv7x7_kernel, cin=Cin, cout=Cout,
                               wp_pad=Wp_pad, nw=NW, shift_len=SHIFT_LEN)

    out_flat = pl.pallas_call(
        kernel,
        out_shape=jax.ShapeDtypeStruct((B, Cout, NW), x_nchw.dtype),
        grid=(B,),
        in_specs=[
            pl.BlockSpec((1, Cin, Ltile), lambda b: (b, 0, 0)),
            pl.BlockSpec((K, Cout, K * Cin), lambda b: (0, 0, 0)),
            pl.BlockSpec((Cout, 1), lambda b: (0, 0)),
        ],
        out_specs=pl.BlockSpec((1, Cout, NW), lambda b: (b, 0, 0)),
        scratch_shapes=[pltpu.VMEM((K * Cin, SHIFT_LEN), jnp.float32)],
        compiler_params=pltpu.CompilerParams(
            dimension_semantics=("parallel",)),
    )(x_flat, w_mats, b2d)

    # (B, Cout, NW) -> (B, Cout, H, Wp_pad) is a free row-major reshape; the
    # only remaining work is the cheap final W-slice (no transpose).
    return out_flat.reshape(B, Cout, H, Wp_pad)[..., :W]


def _reference(x_nchw, weight_oihw, bias):
    """Pure-JAX reference (reflect pad + conv, NCHW/OIHW)."""
    xp = jnp.pad(x_nchw, ((0, 0), (0, 0), (PAD, PAD), (PAD, PAD)),
                 mode="reflect")
    y = jax.lax.conv_general_dilated(
        xp, weight_oihw, window_strides=(1, 1), padding="VALID",
        dimension_numbers=("NCHW", "OIHW", "NCHW"))
    return y + bias[None, :, None, None]


if __name__ == "__main__":
    # Small shapes consistent with the module: batch=2, Cin=4, Cout=8, 16x16.
    B, Cin, Cout, H, W = 2, 4, 8, 16, 16

    key = jax.random.PRNGKey(0)
    kx, kw, kb = jax.random.split(key, 3)

    x = jax.random.normal(kx, (B, Cin, H, W), dtype=jnp.float32)
    # Deterministic synthetic parameters (Conv2d(Cin, Cout, 7) shapes).
    fan_in = Cin * K * K
    bound = 1.0 / jnp.sqrt(fan_in)
    weight = jax.random.uniform(kw, (Cout, Cin, K, K), jnp.float32, -bound, bound)
    bias = jax.random.uniform(kb, (Cout,), jnp.float32, -bound, bound)

    out = jax.block_until_ready(jax.jit(feature_map_block)(x, weight, bias))

    ref = _reference(x, weight, bias)
    assert out.shape == (B, Cout, H, W)
    assert jnp.allclose(out, ref, atol=1e-4, rtol=1e-4), \
        float(jnp.max(jnp.abs(out - ref)))

    print("KERNEL_OK")
</pallas_src>

<mosaic_0001>
module attributes {stable_mosaic.version = 11 : i64} {
  func.func @_conv7x7_kernel(%arg0: i32, %arg1: memref<1x4x2944xf32, #tpu.memory_space<vmem>>, %arg2: memref<7x8x28xf32, #tpu.memory_space<vmem>>, %arg3: memref<8x1xf32, #tpu.memory_space<vmem>>, %arg4: memref<1x8x2048xf32, #tpu.memory_space<vmem>>, %arg5: memref<28x2816xf32, #tpu.memory_space<vmem>>) attributes {dimension_semantics = [#tpu.dimension_semantics<parallel>], iteration_bounds = array<i64: 2>, scalar_prefetch = 0 : i64, scratch_operands = 1 : i64, tpu.core_type = #tpu.core_type<tc>, window_params = [{transform_indices = @transform_0, window_bounds = array<i64: 1, 4, 2944>}, {pipeline_mode = #tpu.pipeline_mode<synchronous>, transform_indices = @transform_1, window_bounds = array<i64: 7, 8, 28>}, {pipeline_mode = #tpu.pipeline_mode<synchronous>, transform_indices = @transform_2, window_bounds = array<i64: 8, 1>}, {transform_indices = @transform_3, window_bounds = array<i64: 1, 8, 2048>}]} {
    %c0 = arith.constant 0 : index
    %c0_0 = arith.constant 0 : index
    %c0_1 = arith.constant 0 : index
    %0 = vector.load %arg1[%c0, %c0_0, %c0_1] : memref<1x4x2944xf32, #tpu.memory_space<vmem>>, vector<1x4x2816xf32>
    %1 = vector.shape_cast %0 : vector<1x4x2816xf32> to vector<4x2816xf32>
    %c0_2 = arith.constant 0 : index
    %c0_3 = arith.constant 0 : index
    %2 = vector.load %arg5[%c0_2, %c0_3] : memref<28x2816xf32, #tpu.memory_space<vmem>>, vector<4x2816xf32>
    tpu.vector_store %arg5[%c0_2, %c0_3], %1 {strides = array<i32>} : memref<28x2816xf32, #tpu.memory_space<vmem>>, vector<4x2816xf32>,
    %c0_4 = arith.constant 0 : index
    %c0_5 = arith.constant 0 : index
    %c1 = arith.constant 1 : index
    %3 = vector.load %arg1[%c0_4, %c0_5, %c1] : memref<1x4x2944xf32, #tpu.memory_space<vmem>>, vector<1x4x2816xf32>
    %4 = vector.shape_cast %3 : vector<1x4x2816xf32> to vector<4x2816xf32>
    %c4 = arith.constant 4 : index
    %c0_6 = arith.constant 0 : index
    %5 = vector.load %arg5[%c4, %c0_6] : memref<28x2816xf32, #tpu.memory_space<vmem>>, vector<4x2816xf32>
    tpu.vector_store %arg5[%c4, %c0_6], %4 {strides = array<i32>} : memref<28x2816xf32, #tpu.memory_space<vmem>>, vector<4x2816xf32>,
    %c0_7 = arith.constant 0 : index
    %c0_8 = arith.constant 0 : index
    %c2 = arith.constant 2 : index
    %6 = vector.load %arg1[%c0_7, %c0_8, %c2] : memref<1x4x2944xf32, #tpu.memory_space<vmem>>, vector<1x4x2816xf32>
    %7 = vector.shape_cast %6 : vector<1x4x2816xf32> to vector<4x2816xf32>
    %c8 = arith.constant 8 : index
    %c0_9 = arith.constant 0 : index
    %8 = vector.load %arg5[%c8, %c0_9] : memref<28x2816xf32, #tpu.memory_space<vmem>>, vector<4x2816xf32>
    tpu.vector_store %arg5[%c8, %c0_9], %7 {strides = array<i32>} : memref<28x2816xf32, #tpu.memory_space<vmem>>, vector<4x2816xf32>,
    %c0_10 = arith.constant 0 : index
    %c0_11 = arith.constant 0 : index
    %c3 = arith.constant 3 : index
    %9 = vector.load %arg1[%c0_10, %c0_11, %c3] : memref<1x4x2944xf32, #tpu.memory_space<vmem>>, vector<1x4x2816xf32>
    %10 = vector.shape_cast %9 : vector<1x4x2816xf32> to vector<4x2816xf32>
    %c12 = arith.constant 12 : index
    %c0_12 = arith.constant 0 : index
    %11 = vector.load %arg5[%c12, %c0_12] : memref<28x2816xf32, #tpu.memory_space<vmem>>, vector<4x2816xf32>
    tpu.vector_store %arg5[%c12, %c0_12], %10 {strides = array<i32>} : memref<28x2816xf32, #tpu.memory_space<vmem>>, vector<4x2816xf32>,
    %c0_13 = arith.constant 0 : index
    %c0_14 = arith.constant 0 : index
    %c4_15 = arith.constant 4 : index
    %12 = vector.load %arg1[%c0_13, %c0_14, %c4_15] : memref<1x4x2944xf32, #tpu.memory_space<vmem>>, vector<1x4x2816xf32>
    %13 = vector.shape_cast %12 : vector<1x4x2816xf32> to vector<4x2816xf32>
    %c16 = arith.constant 16 : index
    %c0_16 = arith.constant 0 : index
    %14 = vector.load %arg5[%c16, %c0_16] : memref<28x2816xf32, #tpu.memory_space<vmem>>, vector<4x2816xf32>
    tpu.vector_store %arg5[%c16, %c0_16], %13 {strides = array<i32>} : memref<28x2816xf32, #tpu.memory_space<vmem>>, vector<4x2816xf32>,
    %c0_17 = arith.constant 0 : index
    %c0_18 = arith.constant 0 : index
    %c5 = arith.constant 5 : index
    %15 = vector.load %arg1[%c0_17, %c0_18, %c5] : memref<1x4x2944xf32, #tpu.memory_space<vmem>>, vector<1x4x2816xf32>
    %16 = vector.shape_cast %15 : vector<1x4x2816xf32> to vector<4x2816xf32>
    %c20 = arith.constant 20 : index
    %c0_19 = arith.constant 0 : index
    %17 = vector.load %arg5[%c20, %c0_19] : memref<28x2816xf32, #tpu.memory_space<vmem>>, vector<4x2816xf32>
    tpu.vector_store %arg5[%c20, %c0_19], %16 {strides = array<i32>} : memref<28x2816xf32, #tpu.memory_space<vmem>>, vector<4x2816xf32>,
    %c0_20 = arith.constant 0 : index
    %c0_21 = arith.constant 0 : index
    %c6 = arith.constant 6 : index
    %18 = vector.load %arg1[%c0_20, %c0_21, %c6] : memref<1x4x2944xf32, #tpu.memory_space<vmem>>, vector<1x4x2816xf32>
    %19 = vector.shape_cast %18 : vector<1x4x2816xf32> to vector<4x2816xf32>
    %c24 = arith.constant 24 : index
    %c0_22 = arith.constant 0 : index
    %20 = vector.load %arg5[%c24, %c0_22] : memref<28x2816xf32, #tpu.memory_space<vmem>>, vector<4x2816xf32>
    tpu.vector_store %arg5[%c24, %c0_22], %19 {strides = array<i32>} : memref<28x2816xf32, #tpu.memory_space<vmem>>, vector<4x2816xf32>,
    %cst = arith.constant 0.000000e+00 : f32
    %21 = vector.broadcast %cst : f32 to vector<8x2048xf32>
    %c0_23 = arith.constant 0 : index
    %c0_24 = arith.constant 0 : index
    %c0_25 = arith.constant 0 : index
    %22 = vector.load %arg2[%c0_23, %c0_24, %c0_25] : memref<7x8x28xf32, #tpu.memory_space<vmem>>, vector<1x8x28xf32>
    %23 = vector.shape_cast %22 : vector<1x8x28xf32> to vector<8x28xf32>
    %c0_26 = arith.constant 0 : index
    %c0_27 = arith.constant 0 : index
    %24 = vector.load %arg5[%c0_26, %c0_27] : memref<28x2816xf32, #tpu.memory_space<vmem>>, vector<28x2048xf32>
    %cst_28 = arith.constant dense<0.000000e+00> : vector<8x2048xf32>
    %25 = tpu.matmul %23, %24, %cst_28 {dimension_numbers = #tpu.dot_dimension_numbers<[1], [0], [0], [1], [0, 0, 1, 1], [], []>} : vector<8x28xf32>, vector<28x2048xf32>, vector<8x2048xf32> -> vector<8x2048xf32>
    %26 = arith.addf %21, %25 : vector<8x2048xf32>
    %c1_29 = arith.constant 1 : index
    %c0_30 = arith.constant 0 : index
    %c0_31 = arith.constant 0 : index
    %27 = vector.load %arg2[%c1_29, %c0_30, %c0_31] : memref<7x8x28xf32, #tpu.memory_space<vmem>>, vector<1x8x28xf32>
    %28 = vector.shape_cast %27 : vector<1x8x28xf32> to vector<8x28xf32>
    %c0_32 = arith.constant 0 : index
    %c128 = arith.constant 128 : index
    %29 = vector.load %arg5[%c0_32, %c128] : memref<28x2816xf32, #tpu.memory_space<vmem>>, vector<28x2048xf32>
    %cst_33 = arith.constant dense<0.000000e+00> : vector<8x2048xf32>
    %30 = tpu.matmul %28, %29, %cst_33 {dimension_numbers = #tpu.dot_dimension_numbers<[1], [0], [0], [1], [0, 0, 1, 1], [], []>} : vector<8x28xf32>, vector<28x2048xf32>, vector<8x2048xf32> -> vector<8x2048xf32>
    %31 = arith.addf %26, %30 : vector<8x2048xf32>
    %c2_34 = arith.constant 2 : index
    %c0_35 = arith.constant 0 : index
    %c0_36 = arith.constant 0 : index
    %32 = vector.load %arg2[%c2_34, %c0_35, %c0_36] : memref<7x8x28xf32, #tpu.memory_space<vmem>>, vector<1x8x28xf32>
    %33 = vector.shape_cast %32 : vector<1x8x28xf32> to vector<8x28xf32>
    %c0_37 = arith.constant 0 : index
    %c256 = arith.constant 256 : index
    %34 = vector.load %arg5[%c0_37, %c256] : memref<28x2816xf32, #tpu.memory_space<vmem>>, vector<28x2048xf32>
    %cst_38 = arith.constant dense<0.000000e+00> : vector<8x2048xf32>
    %35 = tpu.matmul %33, %34, %cst_38 {dimension_numbers = #tpu.dot_dimension_numbers<[1], [0], [0], [1], [0, 0, 1, 1], [], []>} : vector<8x28xf32>, vector<28x2048xf32>, vector<8x2048xf32> -> vector<8x2048xf32>
    %36 = arith.addf %31, %35 : vector<8x2048xf32>
    %c3_39 = arith.constant 3 : index
    %c0_40 = arith.constant 0 : index
    %c0_41 = arith.constant 0 : index
    %37 = vector.load %arg2[%c3_39, %c0_40, %c0_41] : memref<7x8x28xf32, #tpu.memory_space<vmem>>, vector<1x8x28xf32>
    %38 = vector.shape_cast %37 : vector<1x8x28xf32> to vector<8x28xf32>
    %c0_42 = arith.constant 0 : index
    %c384 = arith.constant 384 : index
    %39 = vector.load %arg5[%c0_42, %c384] : memref<28x2816xf32, #tpu.memory_space<vmem>>, vector<28x2048xf32>
    %cst_43 = arith.constant dense<0.000000e+00> : vector<8x2048xf32>
    %40 = tpu.matmul %38, %39, %cst_43 {dimension_numbers = #tpu.dot_dimension_numbers<[1], [0], [0], [1], [0, 0, 1, 1], [], []>} : vector<8x28xf32>, vector<28x2048xf32>, vector<8x2048xf32> -> vector<8x2048xf32>
    %41 = arith.addf %36, %40 : vector<8x2048xf32>
    %c4_44 = arith.constant 4 : index
    %c0_45 = arith.constant 0 : index
    %c0_46 = arith.constant 0 : index
    %42 = vector.load %arg2[%c4_44, %c0_45, %c0_46] : memref<7x8x28xf32, #tpu.memory_space<vmem>>, vector<1x8x28xf32>
    %43 = vector.shape_cast %42 : vector<1x8x28xf32> to vector<8x28xf32>
    %c0_47 = arith.constant 0 : index
    %c512 = arith.constant 512 : index
    %44 = vector.load %arg5[%c0_47, %c512] : memref<28x2816xf32, #tpu.memory_space<vmem>>, vector<28x2048xf32>
    %cst_48 = arith.constant dense<0.000000e+00> : vector<8x2048xf32>
    %45 = tpu.matmul %43, %44, %cst_48 {dimension_numbers = #tpu.dot_dimension_numbers<[1], [0], [0], [1], [0, 0, 1, 1], [], []>} : vector<8x28xf32>, vector<28x2048xf32>, vector<8x2048xf32> -> vector<8x2048xf32>
    %46 = arith.addf %41, %45 : vector<8x2048xf32>
    %c5_49 = arith.constant 5 : index
    %c0_50 = arith.constant 0 : index
    %c0_51 = arith.constant 0 : index
    %47 = vector.load %arg2[%c5_49, %c0_50, %c0_51] : memref<7x8x28xf32, #tpu.memory_space<vmem>>, vector<1x8x28xf32>
    %48 = vector.shape_cast %47 : vector<1x8x28xf32> to vector<8x28xf32>
    %c0_52 = arith.constant 0 : index
    %c640 = arith.constant 640 : index
    %49 = vector.load %arg5[%c0_52, %c640] : memref<28x2816xf32, #tpu.memory_space<vmem>>, vector<28x2048xf32>
    %cst_53 = arith.constant dense<0.000000e+00> : vector<8x2048xf32>
    %50 = tpu.matmul %48, %49, %cst_53 {dimension_numbers = #tpu.dot_dimension_numbers<[1], [0], [0], [1], [0, 0, 1, 1], [], []>} : vector<8x28xf32>, vector<28x2048xf32>, vector<8x2048xf32> -> vector<8x2048xf32>
    %51 = arith.addf %46, %50 : vector<8x2048xf32>
    %c6_54 = arith.constant 6 : index
    %c0_55 = arith.constant 0 : index
    %c0_56 = arith.constant 0 : index
    %52 = vector.load %arg2[%c6_54, %c0_55, %c0_56] : memref<7x8x28xf32, #tpu.memory_space<vmem>>, vector<1x8x28xf32>
    %53 = vector.shape_cast %52 : vector<1x8x28xf32> to vector<8x28xf32>
    %c0_57 = arith.constant 0 : index
    %c768 = arith.constant 768 : index
    %54 = vector.load %arg5[%c0_57, %c768] : memref<28x2816xf32, #tpu.memory_space<vmem>>, vector<28x2048xf32>
    %cst_58 = arith.constant dense<0.000000e+00> : vector<8x2048xf32>
    %55 = tpu.matmul %53, %54, %cst_58 {dimension_numbers = #tpu.dot_dimension_numbers<[1], [0], [0], [1], [0, 0, 1, 1], [], []>} : vector<8x28xf32>, vector<28x2048xf32>, vector<8x2048xf32> -> vector<8x2048xf32>
    %56 = arith.addf %51, %55 : vector<8x2048xf32>
    %c0_59 = arith.constant 0 : index
    %c0_60 = arith.constant 0 : index
    %57 = vector.load %arg3[%c0_59, %c0_60] : memref<8x1xf32, #tpu.memory_space<vmem>>, vector<8x1xf32>
    %58 = vector.broadcast %57 : vector<8x1xf32> to vector<8x2048xf32>
    %59 = arith.addf %56, %58 : vector<8x2048xf32>
    %c0_61 = arith.constant 0 : index
    %c0_62 = arith.constant 0 : index
    %c0_63 = arith.constant 0 : index
    %60 = vector.load %arg4[%c0_61, %c0_62, %c0_63] : memref<1x8x2048xf32, #tpu.memory_space<vmem>>, vector<1x8x2048xf32>
    %61 = vector.shape_cast %60 : vector<1x8x2048xf32> to vector<8x2048xf32>
    %62 = vector.shape_cast %59 : vector<8x2048xf32> to vector<1x8x2048xf32>
    tpu.vector_store %arg4[%c0_61, %c0_62, %c0_63], %62 {strides = array<i32>} : memref<1x8x2048xf32, #tpu.memory_space<vmem>>, vector<1x8x2048xf32>,
    return
  }
  func.func @transform_0(%arg0: i32) -> (i32, i32, i32) {
    %c0_i32 = arith.constant 0 : i32
    %c0_i32_0 = arith.constant 0 : i32
    %c0_i32_1 = arith.constant 0 : i32
    return %arg0, %c0_i32, %c0_i32_0 : i32, i32, i32
  }
  func.func @transform_1(%arg0: i32) -> (i32, i32, i32) {
    %c0_i32 = arith.constant 0 : i32
    %c0_i32_0 = arith.constant 0 : i32
    %c0_i32_1 = arith.constant 0 : i32
    %c0_i32_2 = arith.constant 0 : i32
    return %c0_i32, %c0_i32_0, %c0_i32_1 : i32, i32, i32
  }
  func.func @transform_2(%arg0: i32) -> (i32, i32) {
    %c0_i32 = arith.constant 0 : i32
    %c0_i32_0 = arith.constant 0 : i32
    %c0_i32_1 = arith.constant 0 : i32
    return %c0_i32, %c0_i32_0 : i32, i32
  }
  func.func @transform_3(%arg0: i32) -> (i32, i32, i32) {
    %c0_i32 = arith.constant 0 : i32
    %c0_i32_0 = arith.constant 0 : i32
    %c0_i32_1 = arith.constant 0 : i32
    return %arg0, %c0_i32, %c0_i32_0 : i32, i32, i32
  }
}

</mosaic_0001>

<llo_original>
// kernel: feature_map_block.1
$region0: #{feature_map_block.1}
  #allocation0 [shape = 'u32[]', space=smem, size = 0x4, offset = 0x4, fixed_abs, tag = 'smem constant byte address 0x4 - core index']
  #allocation1 [shape = 'u32[144,128]{1,0:T(1,128)}', space=vmem, size = 0x12000, scoped, tag = 'internal scratch']
  #allocation2 [shape = 'f32[28,2816]{1,0:T(8,128)}', space=vmem, size = 0x58000, scoped, tag = 'scratch operand']
  %s0 = inlined_call_operand.vmem [shape: f32[2,4,2944], index: 0, kind: input, shape index: {}]
  %s1 = inlined_call_operand.vmem [shape: f32[7,8,28], index: 1, kind: input, shape index: {}]
  %s2 = inlined_call_operand.vmem [shape: f32[8,1], index: 2, kind: input, shape index: {}]
  %s3 = inlined_call_operand.vmem [shape: f32[2,8,2048], index: 3, kind: output, shape index: {}]
  %s4 = sld [smem:[#allocation0]]
  $region45: #{feature_map_block.1} parent=0
    _
  %s6 = ssub.s32 1, %s4
  %s7 = scalar_select 0, %s6, %s4
  loop: start=0, step=1, limit=4
  $region2: #{feature_map_block.1} parent=0 // loop_pre_header
    _
  $region3: #{feature_map_block.1} parent=0 // loop_header
    %s9 = sphi 0, %s13
    %p10 = scmp.ge.s32.totalorder %s9, 4
    %s19 = sphi 0, %s21
    %s22 = sphi 0, %s19
    %s23 = sphi 0, %s22
    %s39 = sphi 0, %s23
    %s43 = sphi 0, %s43
    %s45 = sphi 0, %s43
    %s46 = sphi 0, %s45
    %s60 = sphi 0, %s46
    %s64 = sphi 0, %s64
    %s66 = sphi 0, %s64
    %s67 = sphi 0, %s66
    %s81 = sphi 0, %s67
    %s87 = sphi 0, %s89
    %s90 = sphi 0, %s87
    %s91 = sphi 0, %s90
    %s107 = sphi 0, %s91
  $region4: #{feature_map_block.1} parent=0 // loop_header_branch
    %12 = sbr.rel (%p10) target = $region8
  $region5: #{feature_map_block.1} parent=0 // loop_body
    %s14 = ssub.s32 %s9, 1
    %s15 = ssub.s32 %s9, 2
    %s16 = sadd.s32 %s9, 1
    %s17 = ssub.s32 %s9, %s16
    %p18 = scmp.eq.s32.totalorder %s17, 0
    %s20 = sadd.s32 %s19, 1
    %s21 = scalar_select %p18, %s19, %s20
    %p24 = pneg %p18
    %p25 = scmp.eq.s32.totalorder %s9, 1
    %p26 = por %p24, %p25
    %p27 = scmp.ne.s32.totalorder %s19, %s22
    %p28 = scmp.eq.s32.totalorder %s9, 0
    %p29 = por %p27, %p28
    %p30 = scmp.ne.s32.totalorder %s19, %s22
    %p31 = scmp.eq.s32.totalorder %s14, 1
    %p32 = por %p30, %p31
    %p33 = scmp.ne.s32.totalorder %s22, %s23
    %p34 = scmp.eq.s32.totalorder %s14, 0
    %p35 = por %p33, %p34
    %p36 = scmp.ne.s32.totalorder %s22, %s23
    %p37 = scmp.eq.s32.totalorder %s15, 1
    %p38 = por %p36, %p37
    %p40 = scmp.ne.s32.totalorder %s23, %s39
    %p41 = scmp.eq.s32.totalorder %s15, 0
    %p42 = por %p40, %p41
    %s44 = sadd.s32 %s43, 1
    %p47 = scmp.eq.s32.totalorder %s9, 1
    %p48 = scmp.ne.s32.totalorder %s43, %s45
    %p49 = scmp.eq.s32.totalorder %s9, 0
    %p50 = por %p48, %p49
    %p51 = scmp.ne.s32.totalorder %s43, %s45
    %p52 = scmp.eq.s32.totalorder %s14, 1
    %p53 = por %p51, %p52
    %p54 = scmp.ne.s32.totalorder %s45, %s46
    %p55 = scmp.eq.s32.totalorder %s14, 0
    %p56 = por %p54, %p55
    %p57 = scmp.ne.s32.totalorder %s45, %s46
    %p58 = scmp.eq.s32.totalorder %s15, 1
    %p59 = por %p57, %p58
    %p61 = scmp.ne.s32.totalorder %s46, %s60
    %p62 = scmp.eq.s32.totalorder %s15, 0
    %p63 = por %p61, %p62
    %s65 = sadd.s32 %s64, 1
    %p68 = scmp.eq.s32.totalorder %s9, 1
    %p69 = scmp.ne.s32.totalorder %s64, %s66
    %p70 = scmp.eq.s32.totalorder %s9, 0
    %p71 = por %p69, %p70
    %p72 = scmp.ne.s32.totalorder %s64, %s66
    %p73 = scmp.eq.s32.totalorder %s14, 1
    %p74 = por %p72, %p73
    %p75 = scmp.ne.s32.totalorder %s66, %s67
    %p76 = scmp.eq.s32.totalorder %s14, 0
    %p77 = por %p75, %p76
    %p78 = scmp.ne.s32.totalorder %s66, %s67
    %p79 = scmp.eq.s32.totalorder %s15, 1
    %p80 = por %p78, %p79
    %p82 = scmp.ne.s32.totalorder %s67, %s81
    %p83 = scmp.eq.s32.totalorder %s15, 0
    %p84 = por %p82, %p83
    %s85 = ssub.s32 %s9, %s16
    %p86 = scmp.eq.s32.totalorder %s85, 0
    %s88 = sadd.s32 %s87, 1
    %s89 = scalar_select %p86, %s87, %s88
    %p92 = pneg %p86
    %p93 = scmp.eq.s32.totalorder %s9, 1
    %p94 = por %p92, %p93
    %p95 = scmp.ne.s32.totalorder %s87, %s90
    %p96 = scmp.eq.s32.totalorder %s9, 0
    %p97 = por %p95, %p96
    %p98 = scmp.ne.s32.totalorder %s87, %s90
    %p99 = scmp.eq.s32.totalorder %s14, 1
    %p100 = por %p98, %p99
    %p101 = scmp.ne.s32.totalorder %s90, %s91
    %p102 = scmp.eq.s32.totalorder %s14, 0
    %p103 = por %p101, %p102
    %p104 = scmp.ne.s32.totalorder %s90, %s91
    %p105 = scmp.eq.s32.totalorder %s15, 1
    %p106 = por %p104, %p105
    %p108 = scmp.ne.s32.totalorder %s91, %s107
    %p109 = scmp.eq.s32.totalorder %s15, 0
    %p110 = por %p108, %p109
    %p111 = scmp.le.s32.totalorder 1, %s9
    %p112 = scmp.lt.s32.totalorder %s9, 3
    %p113 = pnand %p111, %p112
    %p114 = pneg %p113
    // Predicated region
    $region9: #{feature_map_block.1} parent=5 // pred_check
      _
    $region10: #{feature_map_block.1} parent=5 // pred_check_branch
      %116 = sbr.rel (%p113) target = $region12
    $region11: #{feature_map_block.1} parent=5 // pred_region
      %s117 = ssub.s32 %s9, 1
      // Predicated region
      $region13: #{feature_map_block.1} parent=11 // pred_check
        %p118 = pneg %p56
      $region14: #{feature_map_block.1} parent=11 // pred_check_branch
        %120 = sbr.rel (%p118) target = $region16
      $region15: #{feature_map_block.1} parent=11 // pred_region
        _
      $region16: #{feature_map_block.1} parent=11 // pred_fallthru
        _
      // Predicated region
      $region17: #{feature_map_block.1} parent=11 // pred_check
        %p121 = pneg %p77
      $region18: #{feature_map_block.1} parent=11 // pred_check_branch
        %123 = sbr.rel (%p121) target = $region20
      $region19: #{feature_map_block.1} parent=11 // pred_region
        _
      $region20: #{feature_map_block.1} parent=11 // pred_fallthru
        _
    $region12: #{feature_map_block.1} parent=5 // pred_fallthru
      _
    %p124 = scmp.lt.s32.totalorder %s9, 2
    // Predicated region
    $region21: #{feature_map_block.1} parent=5 // pred_check
      %p125 = pneg %p124
    $region22: #{feature_map_block.1} parent=5 // pred_check_branch
      %127 = sbr.rel (%p125) target = $region24
    $region23: #{feature_map_block.1} parent=5 // pred_region
      // Predicated region
      $region25: #{feature_map_block.1} parent=23 // pred_check
        %p128 = pneg %p29
      $region26: #{feature_map_block.1} parent=23 // pred_check_branch
        %130 = sbr.rel (%p128) target = $region28
      $region27: #{feature_map_block.1} parent=23 // pred_region
        %p131 = scmp.lt.s32.totalorder %s9, 1
        %s132 = scalar_select %p131, %s9, 1
        %s133 = smul.addr %s132, 23
        %s134 = smul.addr %s133, 4
        %s135 = scalar_lea.vmem %s0, %s134
      $region28: #{feature_map_block.1} parent=23 // pred_fallthru
        _
    $region24: #{feature_map_block.1} parent=5 // pred_fallthru
      _
    %p136 = scmp.le.s32.totalorder 1, %s9
    %p137 = scmp.lt.s32.totalorder %s9, 3
    %p138 = pnand %p136, %p137
    %p139 = pneg %p138
    // Predicated region
    $region29: #{feature_map_block.1} parent=5 // pred_check
      _
    $region30: #{feature_map_block.1} parent=5 // pred_check_branch
      %141 = sbr.rel (%p138) target = $region32
    $region31: #{feature_map_block.1} parent=5 // pred_region
      %s142 = ssub.s32 %s9, 1
      %p143 = scmp.lt.s32.totalorder %s14, 1
      %s144 = scalar_select %p143, %s14, 1
      %s145 = smul.addr %s144, 23
      %s146 = smul.addr %s145, 4
      %s147 = scalar_lea.vmem %s0, %s146
      %p148 = pneg %p35
      %p149 = pneg %p32
      %p150 = pneg %p56
      %p151 = pneg %p53
      %p152 = pneg %p77
      %p153 = pneg %p74
      %p154 = pneg %p103
      %p155 = pneg %p100
      %p156 = scmp.lt.s32.totalorder %s14, 1
      %s157 = scalar_select %p156, %s14, 1
      %s158 = smul.addr %s157, 16
      %s159 = smul.addr %s158, 8
      %s160 = scalar_lea.vmem %s3, %s159
      %p161 = scmp.lt.s32.totalorder %s14, 1
      %s162 = scalar_select %p161, %s14, 1
      %s163 = smul.addr %s162, 23
      %s164 = smul.addr %s163, 4
      %s165 = scalar_lea.vmem %s0, %s164
      %p166 = scmp.lt.s32.totalorder %s14, 1
      %s167 = scalar_select %p166, %s14, 1
      %s168 = smul.addr %s167, 16
      %s169 = smul.addr %s168, 8
      %s170 = scalar_lea.vmem %s3, %s169
      %v171 = vld [vmem:[%s165] sm:$0xff]
      %v172 = vld [vmem:[%s165 + $0x8] sm:$0xff]
      %v173 = vld [vmem:[%s165 + $0x10] sm:$0xff]
      %v174 = vld [vmem:[%s165 + $0x18] sm:$0xff]
      %v175 = vld [vmem:[%s165 + $0x20] sm:$0xff]
      %v176 = vld [vmem:[%s165 + $0x28] sm:$0xff]
      %v177 = vld [vmem:[%s165 + $0x30] sm:$0xff]
      %v178 = vld [vmem:[%s165 + $0x38] sm:$0xff]
      %v179 = vld [vmem:[%s165 + $0x40] sm:$0xff]
      %v180 = vld [vmem:[%s165 + $0x48] sm:$0xff]
      %v181 = vld [vmem:[%s165 + $0x50] sm:$0xff]
      %v193 = vcombine.high %v171, %v171
      %v194 = vcombine.high %v172, %v172
      %v195 = vcombine.high %v173, %v173
      %v196 = vcombine.high %v174, %v174
      %v197 = vcombine.high %v175, %v175
      %v198 = vcombine.high %v176, %v176
      %v199 = vcombine.high %v177, %v177
      %v200 = vcombine.high %v178, %v178
      %v201 = vcombine.high %v179, %v179
      %v202 = vcombine.high %v180, %v180
      %v203 = vcombine.high %v181, %v181
      %215 = vst [vmem:[#allocation2] sm:$0xf] %v171
      %216 = vst [vmem:[#allocation2 + $0x8] sm:$0xf] %v193
      %217 = vst [vmem:[#allocation2 + $0x10] sm:$0xf] %v172
      %218 = vst [vmem:[#allocation2 + $0x18] sm:$0xf] %v194
      %219 = vst [vmem:[#allocation2 + $0x20] sm:$0xf] %v173
      %220 = vst [vmem:[#allocation2 + $0x28] sm:$0xf] %v195
      %221 = vst [vmem:[#allocation2 + $0x30] sm:$0xf] %v174
      %222 = vst [vmem:[#allocation2 + $0x38] sm:$0xf] %v196
      %223 = vst [vmem:[#allocation2 + $0x40] sm:$0xf] %v175
      %224 = vst [vmem:[#allocation2 + $0x48] sm:$0xf] %v197
      %225 = vst [vmem:[#allocation2 + $0x50] sm:$0xf] %v176
      %226 = vst [vmem:[#allocation2 + $0x58] sm:$0xf] %v198
      %227 = vst [vmem:[#allocation2 + $0x60] sm:$0xf] %v177
      %228 = vst [vmem:[#allocation2 + $0x68] sm:$0xf] %v199
      %229 = vst [vmem:[#allocation2 + $0x70] sm:$0xf] %v178
      %230 = vst [vmem:[#allocation2 + $0x78] sm:$0xf] %v200
      %231 = vst [vmem:[#allocation2 + $0x80] sm:$0xf] %v179
      %232 = vst [vmem:[#allocation2 + $0x88] sm:$0xf] %v201
      %233 = vst [vmem:[#allocation2 + $0x90] sm:$0xf] %v180
      %234 = vst [vmem:[#allocation2 + $0x98] sm:$0xf] %v202
      %235 = vst [vmem:[#allocation2 + $0xa0] sm:$0xf] %v181
      %236 = vst [vmem:[#allocation2 + $0xa8] sm:$0xf] %v203
      %v237 = vld [vmem:[%s165] sm:$0xff]
      %v238 = vld [vmem:[%s165 + $0x8] sm:$0xff]
      %v239 = vld [vmem:[%s165 + $0x10] sm:$0xff]
      %v240 = vld [vmem:[%s165 + $0x18] sm:$0xff]
      %v241 = vld [vmem:[%s165 + $0x20] sm:$0xff]
      %v242 = vld [vmem:[%s165 + $0x28] sm:$0xff]
      %v243 = vld [vmem:[%s165 + $0x30] sm:$0xff]
      %v244 = vld [vmem:[%s165 + $0x38] sm:$0xff]
      %v245 = vld [vmem:[%s165 + $0x40] sm:$0xff]
      %v246 = vld [vmem:[%s165 + $0x48] sm:$0xff]
      %v247 = vld [vmem:[%s165 + $0x50] sm:$0xff]
      %v248 = vld [vmem:[%s165 + $0x58] sm:$0xf]
      %v261 = vcombine.low %v237, %v237
      %v262 = vcombine.low %v238, %v238
      %v263 = vcombine.low %v239, %v239
      %v264 = vcombine.low %v240, %v240
      %v265 = vcombine.low %v241, %v241
      %v266 = vcombine.low %v242, %v242
      %v267 = vcombine.low %v243, %v243
      %v268 = vcombine.low %v244, %v244
      %v269 = vcombine.low %v245, %v245
      %v270 = vcombine.low %v246, %v246
      %v271 = vcombine.low %v247, %v247
      %v272 = vcombine.low %v248, %v248
      %273 = vrot.lane.b32.xlu0 %v261, 127
      %v274 = vpop.permute.xlu0 %273
      %275 = vrot.lane.b32.xlu0 %v237, 127
      %v276 = vpop.permute.xlu0 %275
      %277 = vrot.lane.b32.xlu0 %v262, 127
      %v278 = vpop.permute.xlu0 %277
      %279 = vrot.lane.b32.xlu0 %v238, 127
      %v280 = vpop.permute.xlu0 %279
      %281 = vrot.lane.b32.xlu0 %v263, 127
      %v282 = vpop.permute.xlu0 %281
      %283 = vrot.lane.b32.xlu0 %v239, 127
      %v284 = vpop.permute.xlu0 %283
      %285 = vrot.lane.b32.xlu0 %v264, 127
      %v286 = vpop.permute.xlu0 %285
      %287 = vrot.lane.b32.xlu0 %v240, 127
      %v288 = vpop.permute.xlu0 %287
      %289 = vrot.lane.b32.xlu0 %v265, 127
      %v290 = vpop.permute.xlu0 %289
      %291 = vrot.lane.b32.xlu0 %v241, 127
      %v292 = vpop.permute.xlu0 %291
      %293 = vrot.lane.b32.xlu0 %v266, 127
      %v294 = vpop.permute.xlu0 %293
      %295 = vrot.lane.b32.xlu0 %v242, 127
      %v296 = vpop.permute.xlu0 %295
      %297 = vrot.lane.b32.xlu0 %v267, 127
      %v298 = vpop.permute.xlu0 %297
      %299 = vrot.lane.b32.xlu0 %v243, 127
      %v300 = vpop.permute.xlu0 %299
      %301 = vrot.lane.b32.xlu0 %v268, 127
      %v302 = vpop.permute.xlu0 %301
      %303 = vrot.lane.b32.xlu0 %v244, 127
      %v304 = vpop.permute.xlu0 %303
      %305 = vrot.lane.b32.xlu0 %v269, 127
      %v306 = vpop.permute.xlu0 %305
      %307 = vrot.lane.b32.xlu0 %v245, 127
      %v308 = vpop.permute.xlu0 %307
      %309 = vrot.lane.b32.xlu0 %v270, 127
      %v310 = vpop.permute.xlu0 %309
      %311 = vrot.lane.b32.xlu0 %v246, 127
      %v312 = vpop.permute.xlu0 %311
      %313 = vrot.lane.b32.xlu0 %v271, 127
      %v314 = vpop.permute.xlu0 %313
      %315 = vrot.lane.b32.xlu0 %v247, 127
      %v316 = vpop.permute.xlu0 %315
      %317 = vrot.lane.b32.xlu0 %v272, 127
      %v318 = vpop.permute.xlu0 %317
      %vm319 = vcmask 1039360
      %v320 = vsel %vm319, %v274, %v276
      %v321 = vsel %vm319, %v276, %v278
      %v322 = vsel %vm319, %v278, %v280
      %v323 = vsel %vm319, %v280, %v282
      %v324 = vsel %vm319, %v282, %v284
      %v325 = vsel %vm319, %v284, %v286
      %v326 = vsel %vm319, %v286, %v288
      %v327 = vsel %vm319, %v288, %v290
      %v328 = vsel %vm319, %v290, %v292
      %v329 = vsel %vm319, %v292, %v294
      %v330 = vsel %vm319, %v294, %v296
      %v331 = vsel %vm319, %v296, %v298
      %v332 = vsel %vm319, %v298, %v300
      %v333 = vsel %vm319, %v300, %v302
      %v334 = vsel %vm319, %v302, %v304
      %v335 = vsel %vm319, %v304, %v306
      %v336 = vsel %vm319, %v306, %v308
      %v337 = vsel %vm319, %v308, %v310
      %v338 = vsel %vm319, %v310, %v312
      %v339 = vsel %vm319, %v312, %v314
      %v340 = vsel %vm319, %v314, %v316
      %v341 = vsel %vm319, %v316, %v318
      %364 = vst [vmem:[#allocation2] sm:$0xf0] %v320
      %365 = vst [vmem:[#allocation2 + $0x8] sm:$0xf0] %v321
      %366 = vst [vmem:[#allocation2 + $0x10] sm:$0xf0] %v322
      %367 = vst [vmem:[#allocation2 + $0x18] sm:$0xf0] %v323
      %368 = vst [vmem:[#allocation2 + $0x20] sm:$0xf0] %v324
      %369 = vst [vmem:[#allocation2 + $0x28] sm:$0xf0] %v325
      %370 = vst [vmem:[#allocation2 + $0x30] sm:$0xf0] %v326
      %371 = vst [vmem:[#allocation2 + $0x38] sm:$0xf0] %v327
      %372 = vst [vmem:[#allocation2 + $0x40] sm:$0xf0] %v328
      %373 = vst [vmem:[#allocation2 + $0x48] sm:$0xf0] %v329
      %374 = vst [vmem:[#allocation2 + $0x50] sm:$0xf0] %v330
      %375 = vst [vmem:[#allocation2 + $0x58] sm:$0xf0] %v331
      %376 = vst [vmem:[#allocation2 + $0x60] sm:$0xf0] %v332
      %377 = vst [vmem:[#allocation2 + $0x68] sm:$0xf0] %v333
      %378 = vst [vmem:[#allocation2 + $0x70] sm:$0xf0] %v334
      %379 = vst [vmem:[#allocation2 + $0x78] sm:$0xf0] %v335
      %380 = vst [vmem:[#allocation2 + $0x80] sm:$0xf0] %v336
      %381 = vst [vmem:[#allocation2 + $0x88] sm:$0xf0] %v337
      %382 = vst [vmem:[#allocation2 + $0x90] sm:$0xf0] %v338
      %383 = vst [vmem:[#allocation2 + $0x98] sm:$0xf0] %v339
      %384 = vst [vmem:[#allocation2 + $0xa0] sm:$0xf0] %v340
      %385 = vst [vmem:[#allocation2 + $0xa8] sm:$0xf0] %v341
      %v386 = vld [vmem:[%s165] sm:$0xff]
      %v387 = vld [vmem:[%s165 + $0x8] sm:$0xff]
      %v388 = vld [vmem:[%s165 + $0x10] sm:$0xff]
      %v389 = vld [vmem:[%s165 + $0x18] sm:$0xff]
      %v390 = vld [vmem:[%s165 + $0x20] sm:$0xff]
      %v391 = vld [vmem:[%s165 + $0x28] sm:$0xff]
      %v392 = vld [vmem:[%s165 + $0x30] sm:$0xff]
      %v393 = vld [vmem:[%s165 + $0x38] sm:$0xff]
      %v394 = vld [vmem:[%s165 + $0x40] sm:$0xff]
      %v395 = vld [vmem:[%s165 + $0x48] sm:$0xff]
      %v396 = vld [vmem:[%s165 + $0x50] sm:$0xff]
      %v397 = vld [vmem:[%s165 + $0x58] sm:$0xf]
      %v410 = vcombine.high %v386, %v386
      %v411 = vcombine.high %v387, %v387
      %v412 = vcombine.high %v388, %v388
      %v413 = vcombine.high %v389, %v389
      %v414 = vcombine.high %v390, %v390
      %v415 = vcombine.high %v391, %v391
      %v416 = vcombine.high %v392, %v392
      %v417 = vcombine.high %v393, %v393
      %v418 = vcombine.high %v394, %v394
      %v419 = vcombine.high %v395, %v395
      %v420 = vcombine.high %v396, %v396
      %421 = vrot.lane.b32.xlu0 %v386, 126
      %v422 = vpop.permute.xlu0 %421
      %423 = vrot.lane.b32.xlu0 %v410, 126
      %v424 = vpop.permute.xlu0 %423
      %425 = vrot.lane.b32.xlu0 %v387, 126
      %v426 = vpop.permute.xlu0 %425
      %427 = vrot.lane.b32.xlu0 %v411, 126
      %v428 = vpop.permute.xlu0 %427
      %429 = vrot.lane.b32.xlu0 %v388, 126
      %v430 = vpop.permute.xlu0 %429
      %431 = vrot.lane.b32.xlu0 %v412, 126
      %v432 = vpop.permute.xlu0 %431
      %433 = vrot.lane.b32.xlu0 %v389, 126
      %v434 = vpop.permute.xlu0 %433
      %435 = vrot.lane.b32.xlu0 %v413, 126
      %v436 = vpop.permute.xlu0 %435
      %437 = vrot.lane.b32.xlu0 %v390, 126
      %v438 = vpop.permute.xlu0 %437
      %439 = vrot.lane.b32.xlu0 %v414, 126
      %v440 = vpop.permute.xlu0 %439
      %441 = vrot.lane.b32.xlu0 %v391, 126
      %v442 = vpop.permute.xlu0 %441
      %443 = vrot.lane.b32.xlu0 %v415, 126
      %v444 = vpop.permute.xlu0 %443
      %445 = vrot.lane.b32.xlu0 %v392, 126
      %v446 = vpop.permute.xlu0 %445
      %447 = vrot.lane.b32.xlu0 %v416, 126
      %v448 = vpop.permute.xlu0 %447
      %449 = vrot.lane.b32.xlu0 %v393, 126
      %v450 = vpop.permute.xlu0 %449
      %451 = vrot.lane.b32.xlu0 %v417, 126
      %v452 = vpop.permute.xlu0 %451
      %453 = vrot.lane.b32.xlu0 %v394, 126
      %v454 = vpop.permute.xlu0 %453
      %455 = vrot.lane.b32.xlu0 %v418, 126
      %v456 = vpop.permute.xlu0 %455
      %457 = vrot.lane.b32.xlu0 %v395, 126
      %v458 = vpop.permute.xlu0 %457
      %459 = vrot.lane.b32.xlu0 %v419, 126
      %v460 = vpop.permute.xlu0 %459
      %461 = vrot.lane.b32.xlu0 %v396, 126
      %v462 = vpop.permute.xlu0 %461
      %463 = vrot.lane.b32.xlu0 %v420, 126
      %v464 = vpop.permute.xlu0 %463
      %465 = vrot.lane.b32.xlu0 %v397, 126
      %v466 = vpop.permute.xlu0 %465
      %vm467 = vcmask 1031168
      %v468 = vsel %vm467, %v422, %v424
      %v469 = vsel %vm467, %v424, %v426
      %v470 = vsel %vm467, %v426, %v428
      %v471 = vsel %vm467, %v428, %v430
      %v472 = vsel %vm467, %v430, %v432
      %v473 = vsel %vm467, %v432, %v434
      %v474 = vsel %vm467, %v434, %v436
      %v475 = vsel %vm467, %v436, %v438
      %v476 = vsel %vm467, %v438, %v440
      %v477 = vsel %vm467, %v440, %v442
      %v478 = vsel %vm467, %v442, %v444
      %v479 = vsel %vm467, %v444, %v446
      %v480 = vsel %vm467, %v446, %v448
      %v481 = vsel %vm467, %v448, %v450
      %v482 = vsel %vm467, %v450, %v452
      %v483 = vsel %vm467, %v452, %v454
      %v484 = vsel %vm467, %v454, %v456
      %v485 = vsel %vm467, %v456, %v458
      %v486 = vsel %vm467, %v458, %v460
      %v487 = vsel %vm467, %v460, %v462
      %v488 = vsel %vm467, %v462, %v464
      %v489 = vsel %vm467, %v464, %v466
      %512 = vst [vmem:[#allocation2 + $0xb0] sm:$0xf] %v468
      %513 = vst [vmem:[#allocation2 + $0xb8] sm:$0xf] %v469
      %514 = vst [vmem:[#allocation2 + $0xc0] sm:$0xf] %v470
      %515 = vst [vmem:[#allocation2 + $0xc8] sm:$0xf] %v471
      %516 = vst [vmem:[#allocation2 + $0xd0] sm:$0xf] %v472
      %517 = vst [vmem:[#allocation2 + $0xd8] sm:$0xf] %v473
      %518 = vst [vmem:[#allocation2 + $0xe0] sm:$0xf] %v474
      %519 = vst [vmem:[#allocation2 + $0xe8] sm:$0xf] %v475
      %520 = vst [vmem:[#allocation2 + $0xf0] sm:$0xf] %v476
      %521 = vst [vmem:[#allocation2 + $0xf8] sm:$0xf] %v477
      %522 = vst [vmem:[#allocation2 + $0x100] sm:$0xf] %v478
      %523 = vst [vmem:[#allocation2 + $0x108] sm:$0xf] %v479
      %524 = vst [vmem:[#allocation2 + $0x110] sm:$0xf] %v480
      %525 = vst [vmem:[#allocation2 + $0x118] sm:$0xf] %v481
      %526 = vst [vmem:[#allocation2 + $0x120] sm:$0xf] %v482
      %527 = vst [vmem:[#allocation2 + $0x128] sm:$0xf] %v483
      %528 = vst [vmem:[#allocation2 + $0x130] sm:$0xf] %v484
      %529 = vst [vmem:[#allocation2 + $0x138] sm:$0xf] %v485
      %530 = vst [vmem:[#allocation2 + $0x140] sm:$0xf] %v486
      %531 = vst [vmem:[#allocation2 + $0x148] sm:$0xf] %v487
      %532 = vst [vmem:[#allocation2 + $0x150] sm:$0xf] %v488
      %533 = vst [vmem:[#allocation2 + $0x158] sm:$0xf] %v489
      %v534 = vld [vmem:[%s165] sm:$0xff]
      %v535 = vld [vmem:[%s165 + $0x8] sm:$0xff]
      %v536 = vld [vmem:[%s165 + $0x10] sm:$0xff]
      %v537 = vld [vmem:[%s165 + $0x18] sm:$0xff]
      %v538 = vld [vmem:[%s165 + $0x20] sm:$0xff]
      %v539 = vld [vmem:[%s165 + $0x28] sm:$0xff]
      %v540 = vld [vmem:[%s165 + $0x30] sm:$0xff]
      %v541 = vld [vmem:[%s165 + $0x38] sm:$0xff]
      %v542 = vld [vmem:[%s165 + $0x40] sm:$0xff]
      %v543 = vld [vmem:[%s165 + $0x48] sm:$0xff]
      %v544 = vld [vmem:[%s165 + $0x50] sm:$0xff]
      %v545 = vld [vmem:[%s165 + $0x58] sm:$0xf]
      %v558 = vcombine.low %v534, %v534
      %v559 = vcombine.low %v535, %v535
      %v560 = vcombine.low %v536, %v536
      %v561 = vcombine.low %v537, %v537
      %v562 = vcombine.low %v538, %v538
      %v563 = vcombine.low %v539, %v539
      %v564 = vcombine.low %v540, %v540
      %v565 = vcombine.low %v541, %v541
      %v566 = vcombine.low %v542, %v542
      %v567 = vcombine.low %v543, %v543
      %v568 = vcombine.low %v544, %v544
      %v569 = vcombine.low %v545, %v545
      %570 = vrot.lane.b32.xlu0 %v558, 125
      %v571 = vpop.permute.xlu0 %570
      %572 = vrot.lane.b32.xlu0 %v534, 125
      %v573 = vpop.permute.xlu0 %572
      %574 = vrot.lane.b32.xlu0 %v559, 125
      %v575 = vpop.permute.xlu0 %574
      %576 = vrot.lane.b32.xlu0 %v535, 125
      %v577 = vpop.permute.xlu0 %576
      %578 = vrot.lane.b32.xlu0 %v560, 125
      %v579 = vpop.permute.xlu0 %578
      %580 = vrot.lane.b32.xlu0 %v536, 125
      %v581 = vpop.permute.xlu0 %580
      %582 = vrot.lane.b32.xlu0 %v561, 125
      %v583 = vpop.permute.xlu0 %582
      %584 = vrot.lane.b32.xlu0 %v537, 125
      %v585 = vpop.permute.xlu0 %584
      %586 = vrot.lane.b32.xlu0 %v562, 125
      %v587 = vpop.permute.xlu0 %586
      %588 = vrot.lane.b32.xlu0 %v538, 125
      %v589 = vpop.permute.xlu0 %588
      %590 = vrot.lane.b32.xlu0 %v563, 125
      %v591 = vpop.permute.xlu0 %590
      %592 = vrot.lane.b32.xlu0 %v539, 125
      %v593 = vpop.permute.xlu0 %592
      %594 = vrot.lane.b32.xlu0 %v564, 125
      %v595 = vpop.permute.xlu0 %594
      %596 = vrot.lane.b32.xlu0 %v540, 125
      %v597 = vpop.permute.xlu0 %596
      %598 = vrot.lane.b32.xlu0 %v565, 125
      %v599 = vpop.permute.xlu0 %598
      %600 = vrot.lane.b32.xlu0 %v541, 125
      %v601 = vpop.permute.xlu0 %600
      %602 = vrot.lane.b32.xlu0 %v566, 125
      %v603 = vpop.permute.xlu0 %602
      %604 = vrot.lane.b32.xlu0 %v542, 125
      %v605 = vpop.permute.xlu0 %604
      %606 = vrot.lane.b32.xlu0 %v567, 125
      %v607 = vpop.permute.xlu0 %606
      %608 = vrot.lane.b32.xlu0 %v543, 125
      %v609 = vpop.permute.xlu0 %608
      %610 = vrot.lane.b32.xlu0 %v568, 125
      %v611 = vpop.permute.xlu0 %610
      %612 = vrot.lane.b32.xlu0 %v544, 125
      %v613 = vpop.permute.xlu0 %612
      %614 = vrot.lane.b32.xlu0 %v569, 125
      %v615 = vpop.permute.xlu0 %614
      %vm616 = vcmask 1022976
      %v617 = vsel %vm616, %v571, %v573
      %v618 = vsel %vm616, %v573, %v575
      %v619 = vsel %vm616, %v575, %v577
      %v620 = vsel %vm616, %v577, %v579
      %v621 = vsel %vm616, %v579, %v581
      %v622 = vsel %vm616, %v581, %v583
      %v623 = vsel %vm616, %v583, %v585
      %v624 = vsel %vm616, %v585, %v587
      %v625 = vsel %vm616, %v587, %v589
      %v626 = vsel %vm616, %v589, %v591
      %v627 = vsel %vm616, %v591, %v593
      %v628 = vsel %vm616, %v593, %v595
      %v629 = vsel %vm616, %v595, %v597
      %v630 = vsel %vm616, %v597, %v599
      %v631 = vsel %vm616, %v599, %v601
      %v632 = vsel %vm616, %v601, %v603
      %v633 = vsel %vm616, %v603, %v605
      %v634 = vsel %vm616, %v605, %v607
      %v635 = vsel %vm616, %v607, %v609
      %v636 = vsel %vm616, %v609, %v611
      %v637 = vsel %vm616, %v611, %v613
      %v638 = vsel %vm616, %v613, %v615
      %661 = vst [vmem:[#allocation2 + $0xb0] sm:$0xf0] %v617
      %662 = vst [vmem:[#allocation2 + $0xb8] sm:$0xf0] %v618
      %663 = vst [vmem:[#allocation2 + $0xc0] sm:$0xf0] %v619
      %664 = vst [vmem:[#allocation2 + $0xc8] sm:$0xf0] %v620
      %665 = vst [vmem:[#allocation2 + $0xd0] sm:$0xf0] %v621
      %666 = vst [vmem:[#allocation2 + $0xd8] sm:$0xf0] %v622
      %667 = vst [vmem:[#allocation2 + $0xe0] sm:$0xf0] %v623
      %668 = vst [vmem:[#allocation2 + $0xe8] sm:$0xf0] %v624
      %669 = vst [vmem:[#allocation2 + $0xf0] sm:$0xf0] %v625
      %670 = vst [vmem:[#allocation2 + $0xf8] sm:$0xf0] %v626
      %671 = vst [vmem:[#allocation2 + $0x100] sm:$0xf0] %v627
      %672 = vst [vmem:[#allocation2 + $0x108] sm:$0xf0] %v628
      %673 = vst [vmem:[#allocation2 + $0x110] sm:$0xf0] %v629
      %674 = vst [vmem:[#allocation2 + $0x118] sm:$0xf0] %v630
      %675 = vst [vmem:[#allocation2 + $0x120] sm:$0xf0] %v631
      %676 = vst [vmem:[#allocation2 + $0x128] sm:$0xf0] %v632
      %677 = vst [vmem:[#allocation2 + $0x130] sm:$0xf0] %v633
      %678 = vst [vmem:[#allocation2 + $0x138] sm:$0xf0] %v634
      %679 = vst [vmem:[#allocation2 + $0x140] sm:$0xf0] %v635
      %680 = vst [vmem:[#allocation2 + $0x148] sm:$0xf0] %v636
      %681 = vst [vmem:[#allocation2 + $0x150] sm:$0xf0] %v637
      %682 = vst [vmem:[#allocation2 + $0x158] sm:$0xf0] %v638
      %v683 = vld [vmem:[%s165] sm:$0xff]
      %v684 = vld [vmem:[%s165 + $0x8] sm:$0xff]
      %v685 = vld [vmem:[%s165 + $0x10] sm:$0xff]
      %v686 = vld [vmem:[%s165 + $0x18] sm:$0xff]
      %v687 = vld [vmem:[%s165 + $0x20] sm:$0xff]
      %v688 = vld [vmem:[%s165 + $0x28] sm:$0xff]
      %v689 = vld [vmem:[%s165 + $0x30] sm:$0xff]
      %v690 = vld [vmem:[%s165 + $0x38] sm:$0xff]
      %v691 = vld [vmem:[%s165 + $0x40] sm:$0xff]
      %v692 = vld [vmem:[%s165 + $0x48] sm:$0xff]
      %v693 = vld [vmem:[%s165 + $0x50] sm:$0xff]
      %v694 = vld [vmem:[%s165 + $0x58] sm:$0xf]
      %v707 = vcombine.high %v683, %v683
      %v708 = vcombine.high %v684, %v684
      %v709 = vcombine.high %v685, %v685
      %v710 = vcombine.high %v686, %v686
      %v711 = vcombine.high %v687, %v687
      %v712 = vcombine.high %v688, %v688
      %v713 = vcombine.high %v689, %v689
      %v714 = vcombine.high %v690, %v690
      %v715 = vcombine.high %v691, %v691
      %v716 = vcombine.high %v692, %v692
      %v717 = vcombine.high %v693, %v693
      %718 = vrot.lane.b32.xlu0 %v683, 124
      %v719 = vpop.permute.xlu0 %718
      %720 = vrot.lane.b32.xlu0 %v707, 124
      %v721 = vpop.permute.xlu0 %720
      %722 = vrot.lane.b32.xlu0 %v684, 124
      %v723 = vpop.permute.xlu0 %722
      %724 = vrot.lane.b32.xlu0 %v708, 124
      %v725 = vpop.permute.xlu0 %724
      %726 = vrot.lane.b32.xlu0 %v685, 124
      %v727 = vpop.permute.xlu0 %726
      %728 = vrot.lane.b32.xlu0 %v709, 124
      %v729 = vpop.permute.xlu0 %728
      %730 = vrot.lane.b32.xlu0 %v686, 124
      %v731 = vpop.permute.xlu0 %730
      %732 = vrot.lane.b32.xlu0 %v710, 124
      %v733 = vpop.permute.xlu0 %732
      %734 = vrot.lane.b32.xlu0 %v687, 124
      %v735 = vpop.permute.xlu0 %734
      %736 = vrot.lane.b32.xlu0 %v711, 124
      %v737 = vpop.permute.xlu0 %736
      %738 = vrot.lane.b32.xlu0 %v688, 124
      %v739 = vpop.permute.xlu0 %738
      %740 = vrot.lane.b32.xlu0 %v712, 124
      %v741 = vpop.permute.xlu0 %740
      %742 = vrot.lane.b32.xlu0 %v689, 124
      %v743 = vpop.permute.xlu0 %742
      %744 = vrot.lane.b32.xlu0 %v713, 124
      %v745 = vpop.permute.xlu0 %744
      %746 = vrot.lane.b32.xlu0 %v690, 124
      %v747 = vpop.permute.xlu0 %746
      %748 = vrot.lane.b32.xlu0 %v714, 124
      %v749 = vpop.permute.xlu0 %748
      %750 = vrot.lane.b32.xlu0 %v691, 124
      %v751 = vpop.permute.xlu0 %750
      %752 = vrot.lane.b32.xlu0 %v715, 124
      %v753 = vpop.permute.xlu0 %752
      %754 = vrot.lane.b32.xlu0 %v692, 124
      %v755 = vpop.permute.xlu0 %754
      %756 = vrot.lane.b32.xlu0 %v716, 124
      %v757 = vpop.permute.xlu0 %756
      %758 = vrot.lane.b32.xlu0 %v693, 124
      %v759 = vpop.permute.xlu0 %758
      %760 = vrot.lane.b32.xlu0 %v717, 124
      %v761 = vpop.permute.xlu0 %760
      %762 = vrot.lane.b32.xlu0 %v694, 124
      %v763 = vpop.permute.xlu0 %762
      %vm764 = vcmask 1014784
      %v765 = vsel %vm764, %v719, %v721
      %v766 = vsel %vm764, %v721, %v723
      %v767 = vsel %vm764, %v723, %v725
      %v768 = vsel %vm764, %v725, %v727
      %v769 = vsel %vm764, %v727, %v729
      %v770 = vsel %vm764, %v729, %v731
      %v771 = vsel %vm764, %v731, %v733
      %v772 = vsel %vm764, %v733, %v735
      %v773 = vsel %vm764, %v735, %v737
      %v774 = vsel %vm764, %v737, %v739
      %v775 = vsel %vm764, %v739, %v741
      %v776 = vsel %vm764, %v741, %v743
      %v777 = vsel %vm764, %v743, %v745
      %v778 = vsel %vm764, %v745, %v747
      %v779 = vsel %vm764, %v747, %v749
      %v780 = vsel %vm764, %v749, %v751
      %v781 = vsel %vm764, %v751, %v753
      %v782 = vsel %vm764, %v753, %v755
      %v783 = vsel %vm764, %v755, %v757
      %v784 = vsel %vm764, %v757, %v759
      %v785 = vsel %vm764, %v759, %v761
      %v786 = vsel %vm764, %v761, %v763
      %809 = vst [vmem:[#allocation2 + $0x160] sm:$0xf] %v765
      %810 = vst [vmem:[#allocation2 + $0x168] sm:$0xf] %v766
      %811 = vst [vmem:[#allocation2 + $0x170] sm:$0xf] %v767
      %812 = vst [vmem:[#allocation2 + $0x178] sm:$0xf] %v768
      %813 = vst [vmem:[#allocation2 + $0x180] sm:$0xf] %v769
      %814 = vst [vmem:[#allocation2 + $0x188] sm:$0xf] %v770
      %815 = vst [vmem:[#allocation2 + $0x190] sm:$0xf] %v771
      %816 = vst [vmem:[#allocation2 + $0x198] sm:$0xf] %v772
      %817 = vst [vmem:[#allocation2 + $0x1a0] sm:$0xf] %v773
      %818 = vst [vmem:[#allocation2 + $0x1a8] sm:$0xf] %v774
      %819 = vst [vmem:[#allocation2 + $0x1b0] sm:$0xf] %v775
      %820 = vst [vmem:[#allocation2 + $0x1b8] sm:$0xf] %v776
      %821 = vst [vmem:[#allocation2 + $0x1c0] sm:$0xf] %v777
      %822 = vst [vmem:[#allocation2 + $0x1c8] sm:$0xf] %v778
      %823 = vst [vmem:[#allocation2 + $0x1d0] sm:$0xf] %v779
      %824 = vst [vmem:[#allocation2 + $0x1d8] sm:$0xf] %v780
      %825 = vst [vmem:[#allocation2 + $0x1e0] sm:$0xf] %v781
      %826 = vst [vmem:[#allocation2 + $0x1e8] sm:$0xf] %v782
      %827 = vst [vmem:[#allocation2 + $0x1f0] sm:$0xf] %v783
      %828 = vst [vmem:[#allocation2 + $0x1f8] sm:$0xf] %v784
      %829 = vst [vmem:[#allocation2 + $0x200] sm:$0xf] %v785
      %830 = vst [vmem:[#allocation2 + $0x208] sm:$0xf] %v786
      %v831 = vld [vmem:[%s165] sm:$0xff]
      %v832 = vld [vmem:[%s165 + $0x8] sm:$0xff]
      %v833 = vld [vmem:[%s165 + $0x10] sm:$0xff]
      %v834 = vld [vmem:[%s165 + $0x18] sm:$0xff]
      %v835 = vld [vmem:[%s165 + $0x20] sm:$0xff]
      %v836 = vld [vmem:[%s165 + $0x28] sm:$0xff]
      %v837 = vld [vmem:[%s165 + $0x30] sm:$0xff]
      %v838 = vld [vmem:[%s165 + $0x38] sm:$0xff]
      %v839 = vld [vmem:[%s165 + $0x40] sm:$0xff]
      %v840 = vld [vmem:[%s165 + $0x48] sm:$0xff]
      %v841 = vld [vmem:[%s165 + $0x50] sm:$0xff]
      %v842 = vld [vmem:[%s165 + $0x58] sm:$0xf]
      %v855 = vcombine.low %v831, %v831
      %v856 = vcombine.low %v832, %v832
      %v857 = vcombine.low %v833, %v833
      %v858 = vcombine.low %v834, %v834
      %v859 = vcombine.low %v835, %v835
      %v860 = vcombine.low %v836, %v836
      %v861 = vcombine.low %v837, %v837
      %v862 = vcombine.low %v838, %v838
      %v863 = vcombine.low %v839, %v839
      %v864 = vcombine.low %v840, %v840
      %v865 = vcombine.low %v841, %v841
      %v866 = vcombine.low %v842, %v842
      %867 = vrot.lane.b32.xlu0 %v855, 123
      %v868 = vpop.permute.xlu0 %867
      %869 = vrot.lane.b32.xlu0 %v831, 123
      %v870 = vpop.permute.xlu0 %869
      %871 = vrot.lane.b32.xlu0 %v856, 123
      %v872 = vpop.permute.xlu0 %871
      %873 = vrot.lane.b32.xlu0 %v832, 123
      %v874 = vpop.permute.xlu0 %873
      %875 = vrot.lane.b32.xlu0 %v857, 123
      %v876 = vpop.permute.xlu0 %875
      %877 = vrot.lane.b32.xlu0 %v833, 123
      %v878 = vpop.permute.xlu0 %877
      %879 = vrot.lane.b32.xlu0 %v858, 123
      %v880 = vpop.permute.xlu0 %879
      %881 = vrot.lane.b32.xlu0 %v834, 123
      %v882 = vpop.permute.xlu0 %881
      %883 = vrot.lane.b32.xlu0 %v859, 123
      %v884 = vpop.permute.xlu0 %883
      %885 = vrot.lane.b32.xlu0 %v835, 123
      %v886 = vpop.permute.xlu0 %885
      %887 = vrot.lane.b32.xlu0 %v860, 123
      %v888 = vpop.permute.xlu0 %887
      %889 = vrot.lane.b32.xlu0 %v836, 123
      %v890 = vpop.permute.xlu0 %889
      %891 = vrot.lane.b32.xlu0 %v861, 123
      %v892 = vpop.permute.xlu0 %891
      %893 = vrot.lane.b32.xlu0 %v837, 123
      %v894 = vpop.permute.xlu0 %893
      %895 = vrot.lane.b32.xlu0 %v862, 123
      %v896 = vpop.permute.xlu0 %895
      %897 = vrot.lane.b32.xlu0 %v838, 123
      %v898 = vpop.permute.xlu0 %897
      %899 = vrot.lane.b32.xlu0 %v863, 123
      %v900 = vpop.permute.xlu0 %899
      %901 = vrot.lane.b32.xlu0 %v839, 123
      %v902 = vpop.permute.xlu0 %901
      %903 = vrot.lane.b32.xlu0 %v864, 123
      %v904 = vpop.permute.xlu0 %903
      %905 = vrot.lane.b32.xlu0 %v840, 123
      %v906 = vpop.permute.xlu0 %905
      %907 = vrot.lane.b32.xlu0 %v865, 123
      %v908 = vpop.permute.xlu0 %907
      %909 = vrot.lane.b32.xlu0 %v841, 123
      %v910 = vpop.permute.xlu0 %909
      %911 = vrot.lane.b32.xlu0 %v866, 123
      %v912 = vpop.permute.xlu0 %911
      %vm913 = vcmask 1006592
      %v914 = vsel %vm913, %v868, %v870
      %v915 = vsel %vm913, %v870, %v872
      %v916 = vsel %vm913, %v872, %v874
      %v917 = vsel %vm913, %v874, %v876
      %v918 = vsel %vm913, %v876, %v878
      %v919 = vsel %vm913, %v878, %v880
      %v920 = vsel %vm913, %v880, %v882
      %v921 = vsel %vm913, %v882, %v884
      %v922 = vsel %vm913, %v884, %v886
      %v923 = vsel %vm913, %v886, %v888
      %v924 = vsel %vm913, %v888, %v890
      %v925 = vsel %vm913, %v890, %v892
      %v926 = vsel %vm913, %v892, %v894
      %v927 = vsel %vm913, %v894, %v896
      %v928 = vsel %vm913, %v896, %v898
      %v929 = vsel %vm913, %v898, %v900
      %v930 = vsel %vm913, %v900, %v902
      %v931 = vsel %vm913, %v902, %v904
      %v932 = vsel %vm913, %v904, %v906
      %v933 = vsel %vm913, %v906, %v908
      %v934 = vsel %vm913, %v908, %v910
      %v935 = vsel %vm913, %v910, %v912
      %958 = vst [vmem:[#allocation2 + $0x160] sm:$0xf0] %v914
      %959 = vst [vmem:[#allocation2 + $0x168] sm:$0xf0] %v915
      %960 = vst [vmem:[#allocation2 + $0x170] sm:$0xf0] %v916
      %961 = vst [vmem:[#allocation2 + $0x178] sm:$0xf0] %v917
      %962 = vst [vmem:[#allocation2 + $0x180] sm:$0xf0] %v918
      %963 = vst [vmem:[#allocation2 + $0x188] sm:$0xf0] %v919
      %964 = vst [vmem:[#allocation2 + $0x190] sm:$0xf0] %v920
      %965 = vst [vmem:[#allocation2 + $0x198] sm:$0xf0] %v921
      %966 = vst [vmem:[#allocation2 + $0x1a0] sm:$0xf0] %v922
      %967 = vst [vmem:[#allocation2 + $0x1a8] sm:$0xf0] %v923
      %968 = vst [vmem:[#allocation2 + $0x1b0] sm:$0xf0] %v924
      %969 = vst [vmem:[#allocation2 + $0x1b8] sm:$0xf0] %v925
      %970 = vst [vmem:[#allocation2 + $0x1c0] sm:$0xf0] %v926
      %971 = vst [vmem:[#allocation2 + $0x1c8] sm:$0xf0] %v927
      %972 = vst [vmem:[#allocation2 + $0x1d0] sm:$0xf0] %v928
      %973 = vst [vmem:[#allocation2 + $0x1d8] sm:$0xf0] %v929
      %974 = vst [vmem:[#allocation2 + $0x1e0] sm:$0xf0] %v930
      %975 = vst [vmem:[#allocation2 + $0x1e8] sm:$0xf0] %v931
      %976 = vst [vmem:[#allocation2 + $0x1f0] sm:$0xf0] %v932
      %977 = vst [vmem:[#allocation2 + $0x1f8] sm:$0xf0] %v933
      %978 = vst [vmem:[#allocation2 + $0x200] sm:$0xf0] %v934
      %979 = vst [vmem:[#allocation2 + $0x208] sm:$0xf0] %v935
      %v980 = vld [vmem:[%s165] sm:$0xff]
      %v981 = vld [vmem:[%s165 + $0x8] sm:$0xff]
      %v982 = vld [vmem:[%s165 + $0x10] sm:$0xff]
      %v983 = vld [vmem:[%s165 + $0x18] sm:$0xff]
      %v984 = vld [vmem:[%s165 + $0x20] sm:$0xff]
      %v985 = vld [vmem:[%s165 + $0x28] sm:$0xff]
      %v986 = vld [vmem:[%s165 + $0x30] sm:$0xff]
      %v987 = vld [vmem:[%s165 + $0x38] sm:$0xff]
      %v988 = vld [vmem:[%s165 + $0x40] sm:$0xff]
      %v989 = vld [vmem:[%s165 + $0x48] sm:$0xff]
      %v990 = vld [vmem:[%s165 + $0x50] sm:$0xff]
      %v991 = vld [vmem:[%s165 + $0x58] sm:$0xf]
      %v1004 = vcombine.high %v980, %v980
      %v1005 = vcombine.high %v981, %v981
      %v1006 = vcombine.high %v982, %v982
      %v1007 = vcombine.high %v983, %v983
      %v1008 = vcombine.high %v984, %v984
      %v1009 = vcombine.high %v985, %v985
      %v1010 = vcombine.high %v986, %v986
      %v1011 = vcombine.high %v987, %v987
      %v1012 = vcombine.high %v988, %v988
      %v1013 = vcombine.high %v989, %v989
      %v1014 = vcombine.high %v990, %v990
      %1015 = vrot.lane.b32.xlu0 %v980, 122
      %v1016 = vpop.permute.xlu0 %1015
      %1017 = vrot.lane.b32.xlu0 %v1004, 122
      %v1018 = vpop.permute.xlu0 %1017
      %1019 = vrot.lane.b32.xlu0 %v981, 122
      %v1020 = vpop.permute.xlu0 %1019
      %1021 = vrot.lane.b32.xlu0 %v1005, 122
      %v1022 = vpop.permute.xlu0 %1021
      %1023 = vrot.lane.b32.xlu0 %v982, 122
      %v1024 = vpop.permute.xlu0 %1023
      %1025 = vrot.lane.b32.xlu0 %v1006, 122
      %v1026 = vpop.permute.xlu0 %1025
      %1027 = vrot.lane.b32.xlu0 %v983, 122
      %v1028 = vpop.permute.xlu0 %1027
      %1029 = vrot.lane.b32.xlu0 %v1007, 122
      %v1030 = vpop.permute.xlu0 %1029
      %1031 = vrot.lane.b32.xlu0 %v984, 122
      %v1032 = vpop.permute.xlu0 %1031
      %1033 = vrot.lane.b32.xlu0 %v1008, 122
      %v1034 = vpop.permute.xlu0 %1033
      %1035 = vrot.lane.b32.xlu0 %v985, 122
      %v1036 = vpop.permute.xlu0 %1035
      %1037 = vrot.lane.b32.xlu0 %v1009, 122
      %v1038 = vpop.permute.xlu0 %1037
      %1039 = vrot.lane.b32.xlu0 %v986, 122
      %v1040 = vpop.permute.xlu0 %1039
      %1041 = vrot.lane.b32.xlu0 %v1010, 122
      %v1042 = vpop.permute.xlu0 %1041
      %1043 = vrot.lane.b32.xlu0 %v987, 122
      %v1044 = vpop.permute.xlu0 %1043
      %1045 = vrot.lane.b32.xlu0 %v1011, 122
      %v1046 = vpop.permute.xlu0 %1045
      %1047 = vrot.lane.b32.xlu0 %v988, 122
      %v1048 = vpop.permute.xlu0 %1047
      %1049 = vrot.lane.b32.xlu0 %v1012, 122
      %v1050 = vpop.permute.xlu0 %1049
      %1051 = vrot.lane.b32.xlu0 %v989, 122
      %v1052 = vpop.permute.xlu0 %1051
      %1053 = vrot.lane.b32.xlu0 %v1013, 122
      %v1054 = vpop.permute.xlu0 %1053
      %1055 = vrot.lane.b32.xlu0 %v990, 122
      %v1056 = vpop.permute.xlu0 %1055
      %1057 = vrot.lane.b32.xlu0 %v1014, 122
      %v1058 = vpop.permute.xlu0 %1057
      %1059 = vrot.lane.b32.xlu0 %v991, 122
      %v1060 = vpop.permute.xlu0 %1059
      %vm1061 = vcmask 998400
      %v1062 = vsel %vm1061, %v1016, %v1018
      %v1063 = vsel %vm1061, %v1018, %v1020
      %v1064 = vsel %vm1061, %v1020, %v1022
      %v1065 = vsel %vm1061, %v1022, %v1024
      %v1066 = vsel %vm1061, %v1024, %v1026
      %v1067 = vsel %vm1061, %v1026, %v1028
      %v1068 = vsel %vm1061, %v1028, %v1030
      %v1069 = vsel %vm1061, %v1030, %v1032
      %v1070 = vsel %vm1061, %v1032, %v1034
      %v1071 = vsel %vm1061, %v1034, %v1036
      %v1072 = vsel %vm1061, %v1036, %v1038
      %v1073 = vsel %vm1061, %v1038, %v1040
      %v1074 = vsel %vm1061, %v1040, %v1042
      %v1075 = vsel %vm1061, %v1042, %v1044
      %v1076 = vsel %vm1061, %v1044, %v1046
      %v1077 = vsel %vm1061, %v1046, %v1048
      %v1078 = vsel %vm1061, %v1048, %v1050
      %v1079 = vsel %vm1061, %v1050, %v1052
      %v1080 = vsel %vm1061, %v1052, %v1054
      %v1081 = vsel %vm1061, %v1054, %v1056
      %v1082 = vsel %vm1061, %v1056, %v1058
      %v1083 = vsel %vm1061, %v1058, %v1060
      %1106 = vst [vmem:[#allocation2 + $0x210] sm:$0xf] %v1062
      %1107 = vst [vmem:[#allocation2 + $0x218] sm:$0xf] %v1063
      %1108 = vst [vmem:[#allocation2 + $0x220] sm:$0xf] %v1064
      %1109 = vst [vmem:[#allocation2 + $0x228] sm:$0xf] %v1065
      %1110 = vst [vmem:[#allocation2 + $0x230] sm:$0xf] %v1066
      %1111 = vst [vmem:[#allocation2 + $0x238] sm:$0xf] %v1067
      %1112 = vst [vmem:[#allocation2 + $0x240] sm:$0xf] %v1068
      %1113 = vst [vmem:[#allocation2 + $0x248] sm:$0xf] %v1069
      %1114 = vst [vmem:[#allocation2 + $0x250] sm:$0xf] %v1070
      %1115 = vst [vmem:[#allocation2 + $0x258] sm:$0xf] %v1071
      %1116 = vst [vmem:[#allocation2 + $0x260] sm:$0xf] %v1072
      %1117 = vst [vmem:[#allocation2 + $0x268] sm:$0xf] %v1073
      %1118 = vst [vmem:[#allocation2 + $0x270] sm:$0xf] %v1074
      %1119 = vst [vmem:[#allocation2 + $0x278] sm:$0xf] %v1075
      %1120 = vst [vmem:[#allocation2 + $0x280] sm:$0xf] %v1076
      %1121 = vst [vmem:[#allocation2 + $0x288] sm:$0xf] %v1077
      %1122 = vst [vmem:[#allocation2 + $0x290] sm:$0xf] %v1078
      %1123 = vst [vmem:[#allocation2 + $0x298] sm:$0xf] %v1079
      %1124 = vst [vmem:[#allocation2 + $0x2a0] sm:$0xf] %v1080
      %1125 = vst [vmem:[#allocation2 + $0x2a8] sm:$0xf] %v1081
      %1126 = vst [vmem:[#allocation2 + $0x2b0] sm:$0xf] %v1082
      %1127 = vst [vmem:[#allocation2 + $0x2b8] sm:$0xf] %v1083
      %v1128 = vld [vmem:[%s1] sm:$0xff]
      %v1129 = vld [vmem:[#allocation2] sm:$0xff]
      %v1130 = vld [vmem:[#allocation2 + $0x8] sm:$0xff]
      %v1131 = vld [vmem:[#allocation2 + $0x10] sm:$0xff]
      %v1132 = vld [vmem:[#allocation2 + $0x18] sm:$0xff]
      %v1133 = vld [vmem:[#allocation2 + $0x20] sm:$0xff]
      %v1134 = vld [vmem:[#allocation2 + $0x28] sm:$0xff]
      %v1135 = vld [vmem:[#allocation2 + $0x30] sm:$0xff]
      %v1136 = vld [vmem:[#allocation2 + $0x38] sm:$0xff]
      %v1137 = vld [vmem:[#allocation2 + $0x40] sm:$0xff]
      %v1138 = vld [vmem:[#allocation2 + $0x48] sm:$0xff]
      %v1139 = vld [vmem:[#allocation2 + $0x50] sm:$0xff]
      %v1140 = vld [vmem:[#allocation2 + $0x58] sm:$0xff]
      %v1141 = vld [vmem:[#allocation2 + $0x60] sm:$0xff]
      %v1142 = vld [vmem:[#allocation2 + $0x68] sm:$0xff]
      %v1143 = vld [vmem:[#allocation2 + $0x70] sm:$0xff]
      %v1144 = vld [vmem:[#allocation2 + $0x78] sm:$0xff]
      %v1145 = vld [vmem:[#allocation2 + $0xb0] sm:$0xff]
      %v1146 = vld [vmem:[#allocation2 + $0xb8] sm:$0xff]
      %v1147 = vld [vmem:[#allocation2 + $0xc0] sm:$0xff]
      %v1148 = vld [vmem:[#allocation2 + $0xc8] sm:$0xff]
      %v1149 = vld [vmem:[#allocation2 + $0xd0] sm:$0xff]
      %v1150 = vld [vmem:[#allocation2 + $0xd8] sm:$0xff]
      %v1151 = vld [vmem:[#allocation2 + $0xe0] sm:$0xff]
      %v1152 = vld [vmem:[#allocation2 + $0xe8] sm:$0xff]
      %v1153 = vld [vmem:[#allocation2 + $0xf0] sm:$0xff]
      %v1154 = vld [vmem:[#allocation2 + $0xf8] sm:$0xff]
      %v1155 = vld [vmem:[#allocation2 + $0x100] sm:$0xff]
      %v1156 = vld [vmem:[#allocation2 + $0x108] sm:$0xff]
      %v1157 = vld [vmem:[#allocation2 + $0x110] sm:$0xff]
      %v1158 = vld [vmem:[#allocation2 + $0x118] sm:$0xff]
      %v1159 = vld [vmem:[#allocation2 + $0x120] sm:$0xff]
      %v1160 = vld [vmem:[#allocation2 + $0x128] sm:$0xff]
      %v1161 = vld [vmem:[#allocation2 + $0x160] sm:$0xff]
      %v1162 = vld [vmem:[#allocation2 + $0x168] sm:$0xff]
      %v1163 = vld [vmem:[#allocation2 + $0x170] sm:$0xff]
      %v1164 = vld [vmem:[#allocation2 + $0x178] sm:$0xff]
      %v1165 = vld [vmem:[#allocation2 + $0x180] sm:$0xff]
      %v1166 = vld [vmem:[#allocation2 + $0x188] sm:$0xff]
      %v1167 = vld [vmem:[#allocation2 + $0x190] sm:$0xff]
      %v1168 = vld [vmem:[#allocation2 + $0x198] sm:$0xff]
      %v1169 = vld [vmem:[#allocation2 + $0x1a0] sm:$0xff]
      %v1170 = vld [vmem:[#allocation2 + $0x1a8] sm:$0xff]
      %v1171 = vld [vmem:[#allocation2 + $0x1b0] sm:$0xff]
      %v1172 = vld [vmem:[#allocation2 + $0x1b8] sm:$0xff]
      %v1173 = vld [vmem:[#allocation2 + $0x1c0] sm:$0xff]
      %v1174 = vld [vmem:[#allocation2 + $0x1c8] sm:$0xff]
      %v1175 = vld [vmem:[#allocation2 + $0x1d0] sm:$0xff]
      %v1176 = vld [vmem:[#allocation2 + $0x1d8] sm:$0xff]
      %v1177 = vld [vmem:[#allocation2 + $0x210] sm:$0xf]
      %v1178 = vld [vmem:[#allocation2 + $0x218] sm:$0xf]
      %v1179 = vld [vmem:[#allocation2 + $0x220] sm:$0xf]
      %v1180 = vld [vmem:[#allocation2 + $0x228] sm:$0xf]
      %v1181 = vld [vmem:[#allocation2 + $0x230] sm:$0xf]
      %v1182 = vld [vmem:[#allocation2 + $0x238] sm:$0xf]
      %v1183 = vld [vmem:[#allocation2 + $0x240] sm:$0xf]
      %v1184 = vld [vmem:[#allocation2 + $0x248] sm:$0xf]
      %v1185 = vld [vmem:[#allocation2 + $0x250] sm:$0xf]
      %v1186 = vld [vmem:[#allocation2 + $0x258] sm:$0xf]
      %v1187 = vld [vmem:[#allocation2 + $0x260] sm:$0xf]
      %v1188 = vld [vmem:[#allocation2 + $0x268] sm:$0xf]
      %v1189 = vld [vmem:[#allocation2 + $0x270] sm:$0xf]
      %v1190 = vld [vmem:[#allocation2 + $0x278] sm:$0xf]
      %v1191 = vld [vmem:[#allocation2 + $0x280] sm:$0xf]
      %v1192 = vld [vmem:[#allocation2 + $0x288] sm:$0xf]
      %s1193 = scalar_lea.vmem %s1, 8
      %v1194 = vld [vmem:[%s1193] sm:$0xff]
      %v1195 = vld [vmem:[#allocation2 + $0x80] sm:$0xff]
      %v1196 = vld [vmem:[#allocation2 + $0x130] sm:$0xff]
      %v1197 = vld [vmem:[#allocation2 + $0x1e0] sm:$0xff]
      %v1198 = vld [vmem:[#allocation2 + $0x290] sm:$0xf]
      %vm1199 = vcmask 228352
      %v1201 = vsel %vm1199, %v1194, 0
      %vm1203 = vcmask 1043456
      %v1205 = vsel %vm1203, %v1178, 0
      %v1208 = vsel %vm1203, %v1179, 0
      %v1211 = vsel %vm1203, %v1180, 0
      %v1214 = vsel %vm1203, %v1181, 0
      %v1217 = vsel %vm1203, %v1182, 0
      %v1220 = vsel %vm1203, %v1183, 0
      %v1223 = vsel %vm1203, %v1184, 0
      %v1226 = vsel %vm1203, %v1185, 0
      %v1229 = vsel %vm1203, %v1186, 0
      %v1232 = vsel %vm1203, %v1187, 0
      %v1235 = vsel %vm1203, %v1188, 0
      %v1238 = vsel %vm1203, %v1189, 0
      %v1241 = vsel %vm1203, %v1190, 0
      %v1244 = vsel %vm1203, %v1191, 0
      %v1247 = vsel %vm1203, %v1192, 0
      %v1250 = vsel %vm1203, %v1198, 0
      %1252 = vmatprep.subr.mxu0 %v1131
      %1253 = vmatpush1.msra.mxu0 %v1130
      %1254 = vmatprep.subr.mxu0 %v1147
      %1255 = vmatpush1.msra.mxu0 %v1146
      %1256 = vmatprep.subr.mxu0 %v1163
      %1257 = vmatpush1.msra.mxu0 %v1162
      %1258 = vmatprep.subr.mxu0 %v1208
      %1259 = vmatpush1.msra.mxu0 %v1205
      %1260 = vmatprep.subr.mxu0 0.0
      %1261 = vmatpush1.msra.mxu0 0.0
      %1262 = vmatprep.subr.mxu0 0.0
      %1263 = vmatpush1.msra.mxu0 0.0
      %1264 = vmatprep.subr.mxu0 0.0
      %1265 = vmatpush1.msra.mxu0 0.0
      %1266 = vmatprep.subr.mxu0 0.0
      %1267 = vmatpush1.msra.mxu0 0.0
      %1268 = vmatprep.subr.mxu0 0.0
      %1269 = vmatpush1.msra.mxu0 0.0
      %1270 = vmatprep.subr.mxu0 0.0
      %1271 = vmatpush1.msra.mxu0 0.0
      %1272 = vmatprep.subr.mxu0 0.0
      %1273 = vmatpush1.msra.mxu0 0.0
      %1274 = vmatprep.subr.mxu0 0.0
      %1275 = vmatpush1.msra.mxu0 0.0
      %1276 = vmatprep.subr.mxu0 0.0
      %1277 = vmatpush1.msra.mxu0 0.0
      %1278 = vmatprep.subr.mxu0 0.0
      %1279 = vmatpush1.msra.mxu0 0.0
      %1280 = vmatprep.subr.mxu0 0.0
      %1281 = vmatpush1.msra.mxu0 0.0
      %1282 = vmatprep.subr.mxu0 0.0
      %1283 = vmatpush1.msra.mxu0 0.0
      %1284 = vmatprep.subr.mxu0 0.0
      %1285 = vmatpush1.msra.mxu0 0.0
      %1286 = vmatprep.subr.mxu0 0.0
      %1287 = vmatpush1.msra.mxu0 0.0
      %1288 = vmatprep.subr.mxu0 0.0
      %1289 = vmatpush1.msra.mxu0 0.0
      %1290 = vmatprep.subr.mxu0 0.0
      %1291 = vmatpush1.msra.mxu0 0.0
      %1292 = vmatprep.subr.mxu0 0.0
      %1293 = vmatpush1.msra.mxu0 0.0
      %1294 = vmatprep.subr.mxu0 0.0
      %1295 = vmatpush1.msra.mxu0 0.0
      %1296 = vmatprep.subr.mxu0 0.0
      %1297 = vmatpush1.msra.mxu0 0.0
      %1298 = vmatprep.subr.mxu0 0.0
      %1299 = vmatpush1.msra.mxu0 0.0
      %1300 = vmatprep.subr.mxu0 0.0
      %1301 = vmatpush1.msra.mxu0 0.0
      %1302 = vmatprep.subr.mxu0 0.0
      %1303 = vmatpush1.msra.mxu0 0.0
      %1304 = vmatprep.subr.mxu0 0.0
      %1305 = vmatpush1.msra.mxu0 0.0
      %1306 = vmatprep.subr.mxu0 0.0
      %1307 = vmatpush1.msra.mxu0 0.0
      %1308 = vmatprep.subr.mxu0 0.0
      %1309 = vmatpush1.msra.mxu0 0.0
      %1310 = vmatprep.subr.mxu0 0.0
      %1311 = vmatpush1.msra.mxu0 0.0
      %1312 = vmatprep.subr.mxu0 0.0
      %1313 = vmatpush1.msra.mxu0 0.0
      %1314 = vmatprep.subr.mxu0 0.0
      %1315 = vmatpush1.msra.mxu0 0.0
      %1316 = vmatprep.mubr.f32.mxu0 0.0
      %1317 = vmatmul.mubr.f32.gmra.mrb[0].mxu0 %v1201
      %v1318 = vpop.f32.mrb[0].mxu0
      %v1319 = vadd.f32 0.0, %v1318
      %v1320 = vpop.f32.mrb[0].mxu0
      %v1321 = vadd.f32 0.0, %v1320
      %1322 = vdwg.mxu0
      %1323 = vmatprep.subr.mxu0 %v1133
      %1324 = vmatpush1.msra.mxu0 %v1132
      %1325 = vmatprep.subr.mxu0 %v1149
      %1326 = vmatpush1.msra.mxu0 %v1148
      %1327 = vmatprep.subr.mxu0 %v1165
      %1328 = vmatpush1.msra.mxu0 %v1164
      %1329 = vmatprep.subr.mxu0 %v1214
      %1330 = vmatpush1.msra.mxu0 %v1211
      %1331 = vmatprep.subr.mxu0 0.0
      %1332 = vmatpush1.msra.mxu0 0.0
      %1333 = vmatprep.subr.mxu0 0.0
      %1334 = vmatpush1.msra.mxu0 0.0
      %1335 = vmatprep.subr.mxu0 0.0
      %1336 = vmatpush1.msra.mxu0 0.0
      %1337 = vmatprep.subr.mxu0 0.0
      %1338 = vmatpush1.msra.mxu0 0.0
      %1339 = vmatprep.subr.mxu0 0.0
      %1340 = vmatpush1.msra.mxu0 0.0
      %1341 = vmatprep.subr.mxu0 0.0
      %1342 = vmatpush1.msra.mxu0 0.0
      %1343 = vmatprep.subr.mxu0 0.0
      %1344 = vmatpush1.msra.mxu0 0.0
      %1345 = vmatprep.subr.mxu0 0.0
      %1346 = vmatpush1.msra.mxu0 0.0
      %1347 = vmatprep.subr.mxu0 0.0
      %1348 = vmatpush1.msra.mxu0 0.0
      %1349 = vmatprep.subr.mxu0 0.0
      %1350 = vmatpush1.msra.mxu0 0.0
      %1351 = vmatprep.subr.mxu0 0.0
      %1352 = vmatpush1.msra.mxu0 0.0
      %1353 = vmatprep.subr.mxu0 0.0
      %1354 = vmatpush1.msra.mxu0 0.0
      %1355 = vmatprep.subr.mxu0 0.0
      %1356 = vmatpush1.msra.mxu0 0.0
      %1357 = vmatprep.subr.mxu0 0.0
      %1358 = vmatpush1.msra.mxu0 0.0
      %1359 = vmatprep.subr.mxu0 0.0
      %1360 = vmatpush1.msra.mxu0 0.0
      %1361 = vmatprep.subr.mxu0 0.0
      %1362 = vmatpush1.msra.mxu0 0.0
      %1363 = vmatprep.subr.mxu0 0.0
      %1364 = vmatpush1.msra.mxu0 0.0
      %1365 = vmatprep.subr.mxu0 0.0
      %1366 = vmatpush1.msra.mxu0 0.0
      %1367 = vmatprep.subr.mxu0 0.0
      %1368 = vmatpush1.msra.mxu0 0.0
      %1369 = vmatprep.subr.mxu0 0.0
      %1370 = vmatpush1.msra.mxu0 0.0
      %1371 = vmatprep.subr.mxu0 0.0
      %1372 = vmatpush1.msra.mxu0 0.0
      %1373 = vmatprep.subr.mxu0 0.0
      %1374 = vmatpush1.msra.mxu0 0.0
      %1375 = vmatprep.subr.mxu0 0.0
      %1376 = vmatpush1.msra.mxu0 0.0
      %1377 = vmatprep.subr.mxu0 0.0
      %1378 = vmatpush1.msra.mxu0 0.0
      %1379 = vmatprep.subr.mxu0 0.0
      %1380 = vmatpush1.msra.mxu0 0.0
      %1381 = vmatprep.subr.mxu0 0.0
      %1382 = vmatpush1.msra.mxu0 0.0
      %1383 = vmatprep.subr.mxu0 0.0
      %1384 = vmatpush1.msra.mxu0 0.0
      %1385 = vmatprep.subr.mxu0 0.0
      %1386 = vmatpush1.msra.mxu0 0.0
      %1387 = vmatprep.mubr.f32.mxu0 0.0
      %1388 = vmatmul.mubr.f32.gmra.mrb[0].mxu0 %v1201
      %v1389 = vpop.f32.mrb[0].mxu0
      %v1390 = vadd.f32 0.0, %v1389
      %v1391 = vpop.f32.mrb[0].mxu0
      %v1392 = vadd.f32 0.0, %v1391
      %1393 = vdwg.mxu0
      %1394 = vmatprep.subr.mxu0 %v1135
      %1395 = vmatpush1.msra.mxu0 %v1134
      %1396 = vmatprep.subr.mxu0 %v1151
      %1397 = vmatpush1.msra.mxu0 %v1150
      %1398 = vmatprep.subr.mxu0 %v1167
      %1399 = vmatpush1.msra.mxu0 %v1166
      %1400 = vmatprep.subr.mxu0 %v1220
      %1401 = vmatpush1.msra.mxu0 %v1217
      %1402 = vmatprep.subr.mxu0 0.0
      %1403 = vmatpush1.msra.mxu0 0.0
      %1404 = vmatprep.subr.mxu0 0.0
      %1405 = vmatpush1.msra.mxu0 0.0
      %1406 = vmatprep.subr.mxu0 0.0
      %1407 = vmatpush1.msra.mxu0 0.0
      %1408 = vmatprep.subr.mxu0 0.0
      %1409 = vmatpush1.msra.mxu0 0.0
      %1410 = vmatprep.subr.mxu0 0.0
      %1411 = vmatpush1.msra.mxu0 0.0
      %1412 = vmatprep.subr.mxu0 0.0
      %1413 = vmatpush1.msra.mxu0 0.0
      %1414 = vmatprep.subr.mxu0 0.0
      %1415 = vmatpush1.msra.mxu0 0.0
      %1416 = vmatprep.subr.mxu0 0.0
      %1417 = vmatpush1.msra.mxu0 0.0
      %1418 = vmatprep.subr.mxu0 0.0
      %1419 = vmatpush1.msra.mxu0 0.0
      %1420 = vmatprep.subr.mxu0 0.0
      %1421 = vmatpush1.msra.mxu0 0.0
      %1422 = vmatprep.subr.mxu0 0.0
      %1423 = vmatpush1.msra.mxu0 0.0
      %1424 = vmatprep.subr.mxu0 0.0
      %1425 = vmatpush1.msra.mxu0 0.0
      %1426 = vmatprep.subr.mxu0 0.0
      %1427 = vmatpush1.msra.mxu0 0.0
      %1428 = vmatprep.subr.mxu0 0.0
      %1429 = vmatpush1.msra.mxu0 0.0
      %1430 = vmatprep.subr.mxu0 0.0
      %1431 = vmatpush1.msra.mxu0 0.0
      %1432 = vmatprep.subr.mxu0 0.0
      %1433 = vmatpush1.msra.mxu0 0.0
      %1434 = vmatprep.subr.mxu0 0.0
      %1435 = vmatpush1.msra.mxu0 0.0
      %1436 = vmatprep.subr.mxu0 0.0
      %1437 = vmatpush1.msra.mxu0 0.0
      %1438 = vmatprep.subr.mxu0 0.0
      %1439 = vmatpush1.msra.mxu0 0.0
      %1440 = vmatprep.subr.mxu0 0.0
      %1441 = vmatpush1.msra.mxu0 0.0
      %1442 = vmatprep.subr.mxu0 0.0
      %1443 = vmatpush1.msra.mxu0 0.0
      %1444 = vmatprep.subr.mxu0 0.0
      %1445 = vmatpush1.msra.mxu0 0.0
      %1446 = vmatprep.subr.mxu0 0.0
      %1447 = vmatpush1.msra.mxu0 0.0
      %1448 = vmatprep.subr.mxu0 0.0
      %1449 = vmatpush1.msra.mxu0 0.0
      %1450 = vmatprep.subr.mxu0 0.0
      %1451 = vmatpush1.msra.mxu0 0.0
      %1452 = vmatprep.subr.mxu0 0.0
      %1453 = vmatpush1.msra.mxu0 0.0
      %1454 = vmatprep.subr.mxu0 0.0
      %1455 = vmatpush1.msra.mxu0 0.0
      %1456 = vmatprep.subr.mxu0 0.0
      %1457 = vmatpush1.msra.mxu0 0.0
      %1458 = vmatprep.mubr.f32.mxu0 0.0
      %1459 = vmatmul.mubr.f32.gmra.mrb[0].mxu0 %v1201
      %v1460 = vpop.f32.mrb[0].mxu0
      %v1461 = vadd.f32 0.0, %v1460
      %v1462 = vpop.f32.mrb[0].mxu0
      %v1463 = vadd.f32 0.0, %v1462
      %1464 = vdwg.mxu0
      %1465 = vmatprep.subr.mxu0 %v1137
      %1466 = vmatpush1.msra.mxu0 %v1136
      %1467 = vmatprep.subr.mxu0 %v1153
      %1468 = vmatpush1.msra.mxu0 %v1152
      %1469 = vmatprep.subr.mxu0 %v1169
      %1470 = vmatpush1.msra.mxu0 %v1168
      %1471 = vmatprep.subr.mxu0 %v1226
      %1472 = vmatpush1.msra.mxu0 %v1223
      %1473 = vmatprep.subr.mxu0 0.0
      %1474 = vmatpush1.msra.mxu0 0.0
      %1475 = vmatprep.subr.mxu0 0.0
      %1476 = vmatpush1.msra.mxu0 0.0
      %1477 = vmatprep.subr.mxu0 0.0
      %1478 = vmatpush1.msra.mxu0 0.0
      %1479 = vmatprep.subr.mxu0 0.0
      %1480 = vmatpush1.msra.mxu0 0.0
      %1481 = vmatprep.subr.mxu0 0.0
      %1482 = vmatpush1.msra.mxu0 0.0
      %1483 = vmatprep.subr.mxu0 0.0
      %1484 = vmatpush1.msra.mxu0 0.0
      %1485 = vmatprep.subr.mxu0 0.0
      %1486 = vmatpush1.msra.mxu0 0.0
      %1487 = vmatprep.subr.mxu0 0.0
      %1488 = vmatpush1.msra.mxu0 0.0
      %1489 = vmatprep.subr.mxu0 0.0
      %1490 = vmatpush1.msra.mxu0 0.0
      %1491 = vmatprep.subr.mxu0 0.0
      %1492 = vmatpush1.msra.mxu0 0.0
      %1493 = vmatprep.subr.mxu0 0.0
      %1494 = vmatpush1.msra.mxu0 0.0
      %1495 = vmatprep.subr.mxu0 0.0
      %1496 = vmatpush1.msra.mxu0 0.0
      %1497 = vmatprep.subr.mxu0 0.0
      %1498 = vmatpush1.msra.mxu0 0.0
      %1499 = vmatprep.subr.mxu0 0.0
      %1500 = vmatpush1.msra.mxu0 0.0
      %1501 = vmatprep.subr.mxu0 0.0
      %1502 = vmatpush1.msra.mxu0 0.0
      %1503 = vmatprep.subr.mxu0 0.0
      %1504 = vmatpush1.msra.mxu0 0.0
      %1505 = vmatprep.subr.mxu0 0.0
      %1506 = vmatpush1.msra.mxu0 0.0
      %1507 = vmatprep.subr.mxu0 0.0
      %1508 = vmatpush1.msra.mxu0 0.0
      %1509 = vmatprep.subr.mxu0 0.0
      %1510 = vmatpush1.msra.mxu0 0.0
      %1511 = vmatprep.subr.mxu0 0.0
      %1512 = vmatpush1.msra.mxu0 0.0
      %1513 = vmatprep.subr.mxu0 0.0
      %1514 = vmatpush1.msra.mxu0 0.0
      %1515 = vmatprep.subr.mxu0 0.0
      %1516 = vmatpush1.msra.mxu0 0.0
      %1517 = vmatprep.subr.mxu0 0.0
      %1518 = vmatpush1.msra.mxu0 0.0
      %1519 = vmatprep.subr.mxu0 0.0
      %1520 = vmatpush1.msra.mxu0 0.0
      %1521 = vmatprep.subr.mxu0 0.0
      %1522 = vmatpush1.msra.mxu0 0.0
      %1523 = vmatprep.subr.mxu0 0.0
      %1524 = vmatpush1.msra.mxu0 0.0
      %1525 = vmatprep.subr.mxu0 0.0
      %1526 = vmatpush1.msra.mxu0 0.0
      %1527 = vmatprep.subr.mxu0 0.0
      %1528 = vmatpush1.msra.mxu0 0.0
      %1529 = vmatprep.mubr.f32.mxu0 0.0
      %1530 = vmatmul.mubr.f32.gmra.mrb[0].mxu0 %v1201
      %v1531 = vpop.f32.mrb[0].mxu0
      %v1532 = vadd.f32 0.0, %v1531
      %v1533 = vpop.f32.mrb[0].mxu0
      %v1534 = vadd.f32 0.0, %v1533
      %1535 = vdwg.mxu0
      %1536 = vmatprep.subr.mxu0 %v1139
      %1537 = vmatpush1.msra.mxu0 %v1138
      %1538 = vmatprep.subr.mxu0 %v1155
      %1539 = vmatpush1.msra.mxu0 %v1154
      %1540 = vmatprep.subr.mxu0 %v1171
      %1541 = vmatpush1.msra.mxu0 %v1170
      %1542 = vmatprep.subr.mxu0 %v1232
      %1543 = vmatpush1.msra.mxu0 %v1229
      %1544 = vmatprep.subr.mxu0 0.0
      %1545 = vmatpush1.msra.mxu0 0.0
      %1546 = vmatprep.subr.mxu0 0.0
      %1547 = vmatpush1.msra.mxu0 0.0
      %1548 = vmatprep.subr.mxu0 0.0
      %1549 = vmatpush1.msra.mxu0 0.0
      %1550 = vmatprep.subr.mxu0 0.0
      %1551 = vmatpush1.msra.mxu0 0.0
      %1552 = vmatprep.subr.mxu0 0.0
      %1553 = vmatpush1.msra.mxu0 0.0
      %1554 = vmatprep.subr.mxu0 0.0
      %1555 = vmatpush1.msra.mxu0 0.0
      %1556 = vmatprep.subr.mxu0 0.0
      %1557 = vmatpush1.msra.mxu0 0.0
      %1558 = vmatprep.subr.mxu0 0.0
      %1559 = vmatpush1.msra.mxu0 0.0
      %1560 = vmatprep.subr.mxu0 0.0
      %1561 = vmatpush1.msra.mxu0 0.0
      %1562 = vmatprep.subr.mxu0 0.0
      %1563 = vmatpush1.msra.mxu0 0.0
      %1564 = vmatprep.subr.mxu0 0.0
      %1565 = vmatpush1.msra.mxu0 0.0
      %1566 = vmatprep.subr.mxu0 0.0
      %1567 = vmatpush1.msra.mxu0 0.0
      %1568 = vmatprep.subr.mxu0 0.0
      %1569 = vmatpush1.msra.mxu0 0.0
      %1570 = vmatprep.subr.mxu0 0.0
      %1571 = vmatpush1.msra.mxu0 0.0
      %1572 = vmatprep.subr.mxu0 0.0
      %1573 = vmatpush1.msra.mxu0 0.0
      %1574 = vmatprep.subr.mxu0 0.0
      %1575 = vmatpush1.msra.mxu0 0.0
      %1576 = vmatprep.subr.mxu0 0.0
      %1577 = vmatpush1.msra.mxu0 0.0
      %1578 = vmatprep.subr.mxu0 0.0
      %1579 = vmatpush1.msra.mxu0 0.0
      %1580 = vmatprep.subr.mxu0 0.0
      %1581 = vmatpush1.msra.mxu0 0.0
      %1582 = vmatprep.subr.mxu0 0.0
      %1583 = vmatpush1.msra.mxu0 0.0
      %1584 = vmatprep.subr.mxu0 0.0
      %1585 = vmatpush1.msra.mxu0 0.0
      %1586 = vmatprep.subr.mxu0 0.0
      %1587 = vmatpush1.msra.mxu0 0.0
      %1588 = vmatprep.subr.mxu0 0.0
      %1589 = vmatpush1.msra.mxu0 0.0
      %1590 = vmatprep.subr.mxu0 0.0
      %1591 = vmatpush1.msra.mxu0 0.0
      %1592 = vmatprep.subr.mxu0 0.0
      %1593 = vmatpush1.msra.mxu0 0.0
      %1594 = vmatprep.subr.mxu0 0.0
      %1595 = vmatpush1.msra.mxu0 0.0
      %1596 = vmatprep.subr.mxu0 0.0
      %1597 = vmatpush1.msra.mxu0 0.0
      %1598 = vmatprep.subr.mxu0 0.0
      %1599 = vmatpush1.msra.mxu0 0.0
      %1600 = vmatprep.mubr.f32.mxu0 0.0
      %1601 = vmatmul.mubr.f32.gmra.mrb[0].mxu0 %v1201
      %v1602 = vpop.f32.mrb[0].mxu0
      %v1603 = vadd.f32 0.0, %v1602
      %v1604 = vpop.f32.mrb[0].mxu0
      %v1605 = vadd.f32 0.0, %v1604
      %1606 = vdwg.mxu0
      %1607 = vmatprep.subr.mxu0 %v1141
      %1608 = vmatpush1.msra.mxu0 %v1140
      %1609 = vmatprep.subr.mxu0 %v1157
      %1610 = vmatpush1.msra.mxu0 %v1156
      %1611 = vmatprep.subr.mxu0 %v1173
      %1612 = vmatpush1.msra.mxu0 %v1172
      %1613 = vmatprep.subr.mxu0 %v1238
      %1614 = vmatpush1.msra.mxu0 %v1235
      %1615 = vmatprep.subr.mxu0 0.0
      %1616 = vmatpush1.msra.mxu0 0.0
      %1617 = vmatprep.subr.mxu0 0.0
      %1618 = vmatpush1.msra.mxu0 0.0
      %1619 = vmatprep.subr.mxu0 0.0
      %1620 = vmatpush1.msra.mxu0 0.0
      %1621 = vmatprep.subr.mxu0 0.0
      %1622 = vmatpush1.msra.mxu0 0.0
      %1623 = vmatprep.subr.mxu0 0.0
      %1624 = vmatpush1.msra.mxu0 0.0
      %1625 = vmatprep.subr.mxu0 0.0
      %1626 = vmatpush1.msra.mxu0 0.0
      %1627 = vmatprep.subr.mxu0 0.0
      %1628 = vmatpush1.msra.mxu0 0.0
      %1629 = vmatprep.subr.mxu0 0.0
      %1630 = vmatpush1.msra.mxu0 0.0
      %1631 = vmatprep.subr.mxu0 0.0
      %1632 = vmatpush1.msra.mxu0 0.0
      %1633 = vmatprep.subr.mxu0 0.0
      %1634 = vmatpush1.msra.mxu0 0.0
      %1635 = vmatprep.subr.mxu0 0.0
      %1636 = vmatpush1.msra.mxu0 0.0
      %1637 = vmatprep.subr.mxu0 0.0
      %1638 = vmatpush1.msra.mxu0 0.0
      %1639 = vmatprep.subr.mxu0 0.0
      %1640 = vmatpush1.msra.mxu0 0.0
      %1641 = vmatprep.subr.mxu0 0.0
      %1642 = vmatpush1.msra.mxu0 0.0
      %1643 = vmatprep.subr.mxu0 0.0
      %1644 = vmatpush1.msra.mxu0 0.0
      %1645 = vmatprep.subr.mxu0 0.0
      %1646 = vmatpush1.msra.mxu0 0.0
      %1647 = vmatprep.subr.mxu0 0.0
      %1648 = vmatpush1.msra.mxu0 0.0
      %1649 = vmatprep.subr.mxu0 0.0
      %1650 = vmatpush1.msra.mxu0 0.0
      %1651 = vmatprep.subr.mxu0 0.0
      %1652 = vmatpush1.msra.mxu0 0.0
      %1653 = vmatprep.subr.mxu0 0.0
      %1654 = vmatpush1.msra.mxu0 0.0
      %1655 = vmatprep.subr.mxu0 0.0
      %1656 = vmatpush1.msra.mxu0 0.0
      %1657 = vmatprep.subr.mxu0 0.0
      %1658 = vmatpush1.msra.mxu0 0.0
      %1659 = vmatprep.subr.mxu0 0.0
      %1660 = vmatpush1.msra.mxu0 0.0
      %1661 = vmatprep.subr.mxu0 0.0
      %1662 = vmatpush1.msra.mxu0 0.0
      %1663 = vmatprep.subr.mxu0 0.0
      %1664 = vmatpush1.msra.mxu0 0.0
      %1665 = vmatprep.subr.mxu0 0.0
      %1666 = vmatpush1.msra.mxu0 0.0
      %1667 = vmatprep.subr.mxu0 0.0
      %1668 = vmatpush1.msra.mxu0 0.0
      %1669 = vmatprep.subr.mxu0 0.0
      %1670 = vmatpush1.msra.mxu0 0.0
      %1671 = vmatprep.mubr.f32.mxu0 0.0
      %1672 = vmatmul.mubr.f32.gmra.mrb[0].mxu0 %v1201
      %v1673 = vpop.f32.mrb[0].mxu0
      %v1674 = vadd.f32 0.0, %v1673
      %v1675 = vpop.f32.mrb[0].mxu0
      %v1676 = vadd.f32 0.0, %v1675
      %1677 = vdwg.mxu0
      %1678 = vmatprep.subr.mxu0 %v1143
      %1679 = vmatpush1.msra.mxu0 %v1142
      %1680 = vmatprep.subr.mxu0 %v1159
      %1681 = vmatpush1.msra.mxu0 %v1158
      %1682 = vmatprep.subr.mxu0 %v1175
      %1683 = vmatpush1.msra.mxu0 %v1174
      %1684 = vmatprep.subr.mxu0 %v1244
      %1685 = vmatpush1.msra.mxu0 %v1241
      %1686 = vmatprep.subr.mxu0 0.0
      %1687 = vmatpush1.msra.mxu0 0.0
      %1688 = vmatprep.subr.mxu0 0.0
      %1689 = vmatpush1.msra.mxu0 0.0
      %1690 = vmatprep.subr.mxu0 0.0
      %1691 = vmatpush1.msra.mxu0 0.0
      %1692 = vmatprep.subr.mxu0 0.0
      %1693 = vmatpush1.msra.mxu0 0.0
      %1694 = vmatprep.subr.mxu0 0.0
      %1695 = vmatpush1.msra.mxu0 0.0
      %1696 = vmatprep.subr.mxu0 0.0
      %1697 = vmatpush1.msra.mxu0 0.0
      %1698 = vmatprep.subr.mxu0 0.0
      %1699 = vmatpush1.msra.mxu0 0.0
      %1700 = vmatprep.subr.mxu0 0.0
      %1701 = vmatpush1.msra.mxu0 0.0
      %1702 = vmatprep.subr.mxu0 0.0
      %1703 = vmatpush1.msra.mxu0 0.0
      %1704 = vmatprep.subr.mxu0 0.0
      %1705 = vmatpush1.msra.mxu0 0.0
      %1706 = vmatprep.subr.mxu0 0.0
      %1707 = vmatpush1.msra.mxu0 0.0
      %1708 = vmatprep.subr.mxu0 0.0
      %1709 = vmatpush1.msra.mxu0 0.0
      %1710 = vmatprep.subr.mxu0 0.0
      %1711 = vmatpush1.msra.mxu0 0.0
      %1712 = vmatprep.subr.mxu0 0.0
      %1713 = vmatpush1.msra.mxu0 0.0
      %1714 = vmatprep.subr.mxu0 0.0
      %1715 = vmatpush1.msra.mxu0 0.0
      %1716 = vmatprep.subr.mxu0 0.0
      %1717 = vmatpush1.msra.mxu0 0.0
      %1718 = vmatprep.subr.mxu0 0.0
      %1719 = vmatpush1.msra.mxu0 0.0
      %1720 = vmatprep.subr.mxu0 0.0
      %1721 = vmatpush1.msra.mxu0 0.0
      %1722 = vmatprep.subr.mxu0 0.0
      %1723 = vmatpush1.msra.mxu0 0.0
      %1724 = vmatprep.subr.mxu0 0.0
      %1725 = vmatpush1.msra.mxu0 0.0
      %1726 = vmatprep.subr.mxu0 0.0
      %1727 = vmatpush1.msra.mxu0 0.0
      %1728 = vmatprep.subr.mxu0 0.0
      %1729 = vmatpush1.msra.mxu0 0.0
      %1730 = vmatprep.subr.mxu0 0.0
      %1731 = vmatpush1.msra.mxu0 0.0
      %1732 = vmatprep.subr.mxu0 0.0
      %1733 = vmatpush1.msra.mxu0 0.0
      %1734 = vmatprep.subr.mxu0 0.0
      %1735 = vmatpush1.msra.mxu0 0.0
      %1736 = vmatprep.subr.mxu0 0.0
      %1737 = vmatpush1.msra.mxu0 0.0
      %1738 = vmatprep.subr.mxu0 0.0
      %1739 = vmatpush1.msra.mxu0 0.0
      %1740 = vmatprep.subr.mxu0 0.0
      %1741 = vmatpush1.msra.mxu0 0.0
      %1742 = vmatprep.mubr.f32.mxu0 0.0
      %1743 = vmatmul.mubr.f32.gmra.mrb[0].mxu0 %v1201
      %v1744 = vpop.f32.mrb[0].mxu0
      %v1745 = vadd.f32 0.0, %v1744
      %v1746 = vpop.f32.mrb[0].mxu0
      %v1747 = vadd.f32 0.0, %v1746
      %1748 = vdwg.mxu0
      %1749 = vmatprep.subr.mxu0 %v1195
      %1750 = vmatpush1.msra.mxu0 %v1144
      %1751 = vmatprep.subr.mxu0 %v1196
      %1752 = vmatpush1.msra.mxu0 %v1160
      %1753 = vmatprep.subr.mxu0 %v1197
      %1754 = vmatpush1.msra.mxu0 %v1176
      %1755 = vmatprep.subr.mxu0 %v1250
      %1756 = vmatpush1.msra.mxu0 %v1247
      %1757 = vmatprep.subr.mxu0 0.0
      %1758 = vmatpush1.msra.mxu0 0.0
      %1759 = vmatprep.subr.mxu0 0.0
      %1760 = vmatpush1.msra.mxu0 0.0
      %1761 = vmatprep.subr.mxu0 0.0
      %1762 = vmatpush1.msra.mxu0 0.0
      %1763 = vmatprep.subr.mxu0 0.0
      %1764 = vmatpush1.msra.mxu0 0.0
      %1765 = vmatprep.subr.mxu0 0.0
      %1766 = vmatpush1.msra.mxu0 0.0
      %1767 = vmatprep.subr.mxu0 0.0
      %1768 = vmatpush1.msra.mxu0 0.0
      %1769 = vmatprep.subr.mxu0 0.0
      %1770 = vmatpush1.msra.mxu0 0.0
      %1771 = vmatprep.subr.mxu0 0.0
      %1772 = vmatpush1.msra.mxu0 0.0
      %1773 = vmatprep.subr.mxu0 0.0
      %1774 = vmatpush1.msra.mxu0 0.0
      %1775 = vmatprep.subr.mxu0 0.0
      %1776 = vmatpush1.msra.mxu0 0.0
      %1777 = vmatprep.subr.mxu0 0.0
      %1778 = vmatpush1.msra.mxu0 0.0
      %1779 = vmatprep.subr.mxu0 0.0
      %1780 = vmatpush1.msra.mxu0 0.0
      %1781 = vmatprep.subr.mxu0 0.0
      %1782 = vmatpush1.msra.mxu0 0.0
      %1783 = vmatprep.subr.mxu0 0.0
      %1784 = vmatpush1.msra.mxu0 0.0
      %1785 = vmatprep.subr.mxu0 0.0
      %1786 = vmatpush1.msra.mxu0 0.0
      %1787 = vmatprep.subr.mxu0 0.0
      %1788 = vmatpush1.msra.mxu0 0.0
      %1789 = vmatprep.subr.mxu0 0.0
      %1790 = vmatpush1.msra.mxu0 0.0
      %1791 = vmatprep.subr.mxu0 0.0
      %1792 = vmatpush1.msra.mxu0 0.0
      %1793 = vmatprep.subr.mxu0 0.0
      %1794 = vmatpush1.msra.mxu0 0.0
      %1795 = vmatprep.subr.mxu0 0.0
      %1796 = vmatpush1.msra.mxu0 0.0
      %1797 = vmatprep.subr.mxu0 0.0
      %1798 = vmatpush1.msra.mxu0 0.0
      %1799 = vmatprep.subr.mxu0 0.0
      %1800 = vmatpush1.msra.mxu0 0.0
      %1801 = vmatprep.subr.mxu0 0.0
      %1802 = vmatpush1.msra.mxu0 0.0
      %1803 = vmatprep.subr.mxu0 0.0
      %1804 = vmatpush1.msra.mxu0 0.0
      %1805 = vmatprep.subr.mxu0 0.0
      %1806 = vmatpush1.msra.mxu0 0.0
      %1807 = vmatprep.subr.mxu0 0.0
      %1808 = vmatpush1.msra.mxu0 0.0
      %1809 = vmatprep.subr.mxu0 0.0
      %1810 = vmatpush1.msra.mxu0 0.0
      %1811 = vmatprep.subr.mxu0 0.0
      %1812 = vmatpush1.msra.mxu0 0.0
      %1813 = vmatprep.mubr.f32.mxu0 0.0
      %1814 = vmatmul.mubr.f32.gmra.mrb[0].mxu0 %v1201
      %v1815 = vpop.f32.mrb[0].mxu0
      %v1816 = vadd.f32 0.0, %v1815
      %v1817 = vpop.f32.mrb[0].mxu0
      %v1818 = vadd.f32 0.0, %v1817
      %1819 = vdwg.mxu0
      %v1821 = vsel %vm1199, %v1128, 0
      %v1824 = vsel %vm1203, %v1177, 0
      %1826 = vmatprep.subr.mxu0 %v1130
      %1827 = vmatpush1.msra.mxu0 %v1129
      %1828 = vmatprep.subr.mxu0 %v1146
      %1829 = vmatpush1.msra.mxu0 %v1145
      %1830 = vmatprep.subr.mxu0 %v1162
      %1831 = vmatpush1.msra.mxu0 %v1161
      %1832 = vmatprep.subr.mxu0 %v1205
      %1833 = vmatpush1.msra.mxu0 %v1824
      %1834 = vmatprep.subr.mxu0 0.0
      %1835 = vmatpush1.msra.mxu0 0.0
      %1836 = vmatprep.subr.mxu0 0.0
      %1837 = vmatpush1.msra.mxu0 0.0
      %1838 = vmatprep.subr.mxu0 0.0
      %1839 = vmatpush1.msra.mxu0 0.0
      %1840 = vmatprep.subr.mxu0 0.0
      %1841 = vmatpush1.msra.mxu0 0.0
      %1842 = vmatprep.subr.mxu0 0.0
      %1843 = vmatpush1.msra.mxu0 0.0
      %1844 = vmatprep.subr.mxu0 0.0
      %1845 = vmatpush1.msra.mxu0 0.0
      %1846 = vmatprep.subr.mxu0 0.0
      %1847 = vmatpush1.msra.mxu0 0.0
      %1848 = vmatprep.subr.mxu0 0.0
      %1849 = vmatpush1.msra.mxu0 0.0
      %1850 = vmatprep.subr.mxu0 0.0
      %1851 = vmatpush1.msra.mxu0 0.0
      %1852 = vmatprep.subr.mxu0 0.0
      %1853 = vmatpush1.msra.mxu0 0.0
      %1854 = vmatprep.subr.mxu0 0.0
      %1855 = vmatpush1.msra.mxu0 0.0
      %1856 = vmatprep.subr.mxu0 0.0
      %1857 = vmatpush1.msra.mxu0 0.0
      %1858 = vmatprep.subr.mxu0 0.0
      %1859 = vmatpush1.msra.mxu0 0.0
      %1860 = vmatprep.subr.mxu0 0.0
      %1861 = vmatpush1.msra.mxu0 0.0
      %1862 = vmatprep.subr.mxu0 0.0
      %1863 = vmatpush1.msra.mxu0 0.0
      %1864 = vmatprep.subr.mxu0 0.0
      %1865 = vmatpush1.msra.mxu0 0.0
      %1866 = vmatprep.subr.mxu0 0.0
      %1867 = vmatpush1.msra.mxu0 0.0
      %1868 = vmatprep.subr.mxu0 0.0
      %1869 = vmatpush1.msra.mxu0 0.0
      %1870 = vmatprep.subr.mxu0 0.0
      %1871 = vmatpush1.msra.mxu0 0.0
      %1872 = vmatprep.subr.mxu0 0.0
      %1873 = vmatpush1.msra.mxu0 0.0
      %1874 = vmatprep.subr.mxu0 0.0
      %1875 = vmatpush1.msra.mxu0 0.0
      %1876 = vmatprep.subr.mxu0 0.0
      %1877 = vmatpush1.msra.mxu0 0.0
      %1878 = vmatprep.subr.mxu0 0.0
      %1879 = vmatpush1.msra.mxu0 0.0
      %1880 = vmatprep.subr.mxu0 0.0
      %1881 = vmatpush1.msra.mxu0 0.0
      %1882 = vmatprep.subr.mxu0 0.0
      %1883 = vmatpush1.msra.mxu0 0.0
      %1884 = vmatprep.subr.mxu0 0.0
      %1885 = vmatpush1.msra.mxu0 0.0
      %1886 = vmatprep.subr.mxu0 0.0
      %1887 = vmatpush1.msra.mxu0 0.0
      %1888 = vmatprep.subr.mxu0 0.0
      %1889 = vmatpush1.msra.mxu0 0.0
      %1890 = vmatprep.mubr.f32.mxu0 0.0
      %1891 = vmatmul.mubr.f32.gmra.mrb[0].mxu0 %v1821
      %v1892 = vpop.f32.mrb[0].mxu0
      %v1893 = vadd.f32 %v1319, %v1892
      %v1894 = vpop.f32.mrb[0].mxu0
      %v1895 = vadd.f32 %v1321, %v1894
      %1896 = vdwg.mxu0
      %1897 = vmatprep.subr.mxu0 %v1132
      %1898 = vmatpush1.msra.mxu0 %v1131
      %1899 = vmatprep.subr.mxu0 %v1148
      %1900 = vmatpush1.msra.mxu0 %v1147
      %1901 = vmatprep.subr.mxu0 %v1164
      %1902 = vmatpush1.msra.mxu0 %v1163
      %1903 = vmatprep.subr.mxu0 %v1211
      %1904 = vmatpush1.msra.mxu0 %v1208
      %1905 = vmatprep.subr.mxu0 0.0
      %1906 = vmatpush1.msra.mxu0 0.0
      %1907 = vmatprep.subr.mxu0 0.0
      %1908 = vmatpush1.msra.mxu0 0.0
      %1909 = vmatprep.subr.mxu0 0.0
      %1910 = vmatpush1.msra.mxu0 0.0
      %1911 = vmatprep.subr.mxu0 0.0
      %1912 = vmatpush1.msra.mxu0 0.0
      %1913 = vmatprep.subr.mxu0 0.0
      %1914 = vmatpush1.msra.mxu0 0.0
      %1915 = vmatprep.subr.mxu0 0.0
      %1916 = vmatpush1.msra.mxu0 0.0
      %1917 = vmatprep.subr.mxu0 0.0
      %1918 = vmatpush1.msra.mxu0 0.0
      %1919 = vmatprep.subr.mxu0 0.0
      %1920 = vmatpush1.msra.mxu0 0.0
      %1921 = vmatprep.subr.mxu0 0.0
      %1922 = vmatpush1.msra.mxu0 0.0
      %1923 = vmatprep.subr.mxu0 0.0
      %1924 = vmatpush1.msra.mxu0 0.0
      %1925 = vmatprep.subr.mxu0 0.0
      %1926 = vmatpush1.msra.mxu0 0.0
      %1927 = vmatprep.subr.mxu0 0.0
      %1928 = vmatpush1.msra.mxu0 0.0
      %1929 = vmatprep.subr.mxu0 0.0
      %1930 = vmatpush1.msra.mxu0 0.0
      %1931 = vmatprep.subr.mxu0 0.0
      %1932 = vmatpush1.msra.mxu0 0.0
      %1933 = vmatprep.subr.mxu0 0.0
      %1934 = vmatpush1.msra.mxu0 0.0
      %1935 = vmatprep.subr.mxu0 0.0
      %1936 = vmatpush1.msra.mxu0 0.0
      %1937 = vmatprep.subr.mxu0 0.0
      %1938 = vmatpush1.msra.mxu0 0.0
      %1939 = vmatprep.subr.mxu0 0.0
      %1940 = vmatpush1.msra.mxu0 0.0
      %1941 = vmatprep.subr.mxu0 0.0
      %1942 = vmatpush1.msra.mxu0 0.0
      %1943 = vmatprep.subr.mxu0 0.0
      %1944 = vmatpush1.msra.mxu0 0.0
      %1945 = vmatprep.subr.mxu0 0.0
      %1946 = vmatpush1.msra.mxu0 0.0
      %1947 = vmatprep.subr.mxu0 0.0
      %1948 = vmatpush1.msra.mxu0 0.0
      %1949 = vmatprep.subr.mxu0 0.0
      %1950 = vmatpush1.msra.mxu0 0.0
      %1951 = vmatprep.subr.mxu0 0.0
      %1952 = vmatpush1.msra.mxu0 0.0
      %1953 = vmatprep.subr.mxu0 0.0
      %1954 = vmatpush1.msra.mxu0 0.0
      %1955 = vmatprep.subr.mxu0 0.0
      %1956 = vmatpush1.msra.mxu0 0.0
      %1957 = vmatprep.subr.mxu0 0.0
      %1958 = vmatpush1.msra.mxu0 0.0
      %1959 = vmatprep.subr.mxu0 0.0
      %1960 = vmatpush1.msra.mxu0 0.0
      %1961 = vmatprep.mubr.f32.mxu0 0.0
      %1962 = vmatmul.mubr.f32.gmra.mrb[0].mxu0 %v1821
      %v1963 = vpop.f32.mrb[0].mxu0
      %v1964 = vadd.f32 %v1390, %v1963
      %v1965 = vpop.f32.mrb[0].mxu0
      %v1966 = vadd.f32 %v1392, %v1965
      %1967 = vdwg.mxu0
      %1968 = vmatprep.subr.mxu0 %v1134
      %1969 = vmatpush1.msra.mxu0 %v1133
      %1970 = vmatprep.subr.mxu0 %v1150
      %1971 = vmatpush1.msra.mxu0 %v1149
      %1972 = vmatprep.subr.mxu0 %v1166
      %1973 = vmatpush1.msra.mxu0 %v1165
      %1974 = vmatprep.subr.mxu0 %v1217
      %1975 = vmatpush1.msra.mxu0 %v1214
      %1976 = vmatprep.subr.mxu0 0.0
      %1977 = vmatpush1.msra.mxu0 0.0
      %1978 = vmatprep.subr.mxu0 0.0
      %1979 = vmatpush1.msra.mxu0 0.0
      %1980 = vmatprep.subr.mxu0 0.0
      %1981 = vmatpush1.msra.mxu0 0.0
      %1982 = vmatprep.subr.mxu0 0.0
      %1983 = vmatpush1.msra.mxu0 0.0
      %1984 = vmatprep.subr.mxu0 0.0
      %1985 = vmatpush1.msra.mxu0 0.0
      %1986 = vmatprep.subr.mxu0 0.0
      %1987 = vmatpush1.msra.mxu0 0.0
      %1988 = vmatprep.subr.mxu0 0.0
      %1989 = vmatpush1.msra.mxu0 0.0
      %1990 = vmatprep.subr.mxu0 0.0
      %1991 = vmatpush1.msra.mxu0 0.0
      %1992 = vmatprep.subr.mxu0 0.0
      %1993 = vmatpush1.msra.mxu0 0.0
      %1994 = vmatprep.subr.mxu0 0.0
      %1995 = vmatpush1.msra.mxu0 0.0
      %1996 = vmatprep.subr.mxu0 0.0
      %1997 = vmatpush1.msra.mxu0 0.0
      %1998 = vmatprep.subr.mxu0 0.0
      %1999 = vmatpush1.msra.mxu0 0.0
      %2000 = vmatprep.subr.mxu0 0.0
      %2001 = vmatpush1.msra.mxu0 0.0
      %2002 = vmatprep.subr.mxu0 0.0
      %2003 = vmatpush1.msra.mxu0 0.0
      %2004 = vmatprep.subr.mxu0 0.0
      %2005 = vmatpush1.msra.mxu0 0.0
      %2006 = vmatprep.subr.mxu0 0.0
      %2007 = vmatpush1.msra.mxu0 0.0
      %2008 = vmatprep.subr.mxu0 0.0
      %2009 = vmatpush1.msra.mxu0 0.0
      %2010 = vmatprep.subr.mxu0 0.0
      %2011 = vmatpush1.msra.mxu0 0.0
      %2012 = vmatprep.subr.mxu0 0.0
      %2013 = vmatpush1.msra.mxu0 0.0
      %2014 = vmatprep.subr.mxu0 0.0
      %2015 = vmatpush1.msra.mxu0 0.0
      %2016 = vmatprep.subr.mxu0 0.0
      %2017 = vmatpush1.msra.mxu0 0.0
      %2018 = vmatprep.subr.mxu0 0.0
      %2019 = vmatpush1.msra.mxu0 0.0
      %2020 = vmatprep.subr.mxu0 0.0
      %2021 = vmatpush1.msra.mxu0 0.0
      %2022 = vmatprep.subr.mxu0 0.0
      %2023 = vmatpush1.msra.mxu0 0.0
      %2024 = vmatprep.subr.mxu0 0.0
      %2025 = vmatpush1.msra.mxu0 0.0
      %2026 = vmatprep.subr.mxu0 0.0
      %2027 = vmatpush1.msra.mxu0 0.0
      %2028 = vmatprep.subr.mxu0 0.0
      %2029 = vmatpush1.msra.mxu0 0.0
      %2030 = vmatprep.subr.mxu0 0.0
      %2031 = vmatpush1.msra.mxu0 0.0
      %2032 = vmatprep.mubr.f32.mxu0 0.0
      %2033 = vmatmul.mubr.f32.gmra.mrb[0].mxu0 %v1821
      %v2034 = vpop.f32.mrb[0].mxu0
      %v2035 = vadd.f32 %v1461, %v2034
      %v2036 = vpop.f32.mrb[0].mxu0
      %v2037 = vadd.f32 %v1463, %v2036
      %2038 = vdwg.mxu0
      %2039 = vmatprep.subr.mxu0 %v1136
      %2040 = vmatpush1.msra.mxu0 %v1135
      %2041 = vmatprep.subr.mxu0 %v1152
      %2042 = vmatpush1.msra.mxu0 %v1151
      %2043 = vmatprep.subr.mxu0 %v1168
      %2044 = vmatpush1.msra.mxu0 %v1167
      %2045 = vmatprep.subr.mxu0 %v1223
      %2046 = vmatpush1.msra.mxu0 %v1220
      %2047 = vmatprep.subr.mxu0 0.0
      %2048 = vmatpush1.msra.mxu0 0.0
      %2049 = vmatprep.subr.mxu0 0.0
      %2050 = vmatpush1.msra.mxu0 0.0
      %2051 = vmatprep.subr.mxu0 0.0
      %2052 = vmatpush1.msra.mxu0 0.0
      %2053 = vmatprep.subr.mxu0 0.0
      %2054 = vmatpush1.msra.mxu0 0.0
      %2055 = vmatprep.subr.mxu0 0.0
      %2056 = vmatpush1.msra.mxu0 0.0
      %2057 = vmatprep.subr.mxu0 0.0
      %2058 = vmatpush1.msra.mxu0 0.0
      %2059 = vmatprep.subr.mxu0 0.0
      %2060 = vmatpush1.msra.mxu0 0.0
      %2061 = vmatprep.subr.mxu0 0.0
      %2062 = vmatpush1.msra.mxu0 0.0
      %2063 = vmatprep.subr.mxu0 0.0
      %2064 = vmatpush1.msra.mxu0 0.0
      %2065 = vmatprep.subr.mxu0 0.0
      %2066 = vmatpush1.msra.mxu0 0.0
      %2067 = vmatprep.subr.mxu0 0.0
      %2068 = vmatpush1.msra.mxu0 0.0
      %2069 = vmatprep.subr.mxu0 0.0
      %2070 = vmatpush1.msra.mxu0 0.0
      %2071 = vmatprep.subr.mxu0 0.0
      %2072 = vmatpush1.msra.mxu0 0.0
      %2073 = vmatprep.subr.mxu0 0.0
      %2074 = vmatpush1.msra.mxu0 0.0
      %2075 = vmatprep.subr.mxu0 0.0
      %2076 = vmatpush1.msra.mxu0 0.0
      %2077 = vmatprep.subr.mxu0 0.0
      %2078 = vmatpush1.msra.mxu0 0.0
      %2079 = vmatprep.subr.mxu0 0.0
      %2080 = vmatpush1.msra.mxu0 0.0
      %2081 = vmatprep.subr.mxu0 0.0
      %2082 = vmatpush1.msra.mxu0 0.0
      %2083 = vmatprep.subr.mxu0 0.0
      %2084 = vmatpush1.msra.mxu0 0.0
      %2085 = vmatprep.subr.mxu0 0.0
      %2086 = vmatpush1.msra.mxu0 0.0
      %2087 = vmatprep.subr.mxu0 0.0
      %2088 = vmatpush1.msra.mxu0 0.0
      %2089 = vmatprep.subr.mxu0 0.0
      %2090 = vmatpush1.msra.mxu0 0.0
      %2091 = vmatprep.subr.mxu0 0.0
      %2092 = vmatpush1.msra.mxu0 0.0
      %2093 = vmatprep.subr.mxu0 0.0
      %2094 = vmatpush1.msra.mxu0 0.0
      %2095 = vmatprep.subr.mxu0 0.0
      %2096 = vmatpush1.msra.mxu0 0.0
      %2097 = vmatprep.subr.mxu0 0.0
      %2098 = vmatpush1.msra.mxu0 0.0
      %2099 = vmatprep.subr.mxu0 0.0
      %2100 = vmatpush1.msra.mxu0 0.0
      %2101 = vmatprep.subr.mxu0 0.0
      %2102 = vmatpush1.msra.mxu0 0.0
      %2103 = vmatprep.mubr.f32.mxu0 0.0
      %2104 = vmatmul.mubr.f32.gmra.mrb[0].mxu0 %v1821
      %v2105 = vpop.f32.mrb[0].mxu0
      %v2106 = vadd.f32 %v1532, %v2105
      %v2107 = vpop.f32.mrb[0].mxu0
      %v2108 = vadd.f32 %v1534, %v2107
      %2109 = vdwg.mxu0
      %2110 = vmatprep.subr.mxu0 %v1138
      %2111 = vmatpush1.msra.mxu0 %v1137
      %2112 = vmatprep.subr.mxu0 %v1154
      %2113 = vmatpush1.msra.mxu0 %v1153
      %2114 = vmatprep.subr.mxu0 %v1170
      %2115 = vmatpush1.msra.mxu0 %v1169
      %2116 = vmatprep.subr.mxu0 %v1229
      %2117 = vmatpush1.msra.mxu0 %v1226
      %2118 = vmatprep.subr.mxu0 0.0
      %2119 = vmatpush1.msra.mxu0 0.0
      %2120 = vmatprep.subr.mxu0 0.0
      %2121 = vmatpush1.msra.mxu0 0.0
      %2122 = vmatprep.subr.mxu0 0.0
      %2123 = vmatpush1.msra.mxu0 0.0
      %2124 = vmatprep.subr.mxu0 0.0
      %2125 = vmatpush1.msra.mxu0 0.0
      %2126 = vmatprep.subr.mxu0 0.0
      %2127 = vmatpush1.msra.mxu0 0.0
      %2128 = vmatprep.subr.mxu0 0.0
      %2129 = vmatpush1.msra.mxu0 0.0
      %2130 = vmatprep.subr.mxu0 0.0
      %2131 = vmatpush1.msra.mxu0 0.0
      %2132 = vmatprep.subr.mxu0 0.0
      %2133 = vmatpush1.msra.mxu0 0.0
      %2134 = vmatprep.subr.mxu0 0.0
      %2135 = vmatpush1.msra.mxu0 0.0
      %2136 = vmatprep.subr.mxu0 0.0
      %2137 = vmatpush1.msra.mxu0 0.0
      %2138 = vmatprep.subr.mxu0 0.0
      %2139 = vmatpush1.msra.mxu0 0.0
      %2140 = vmatprep.subr.mxu0 0.0
      %2141 = vmatpush1.msra.mxu0 0.0
      %2142 = vmatprep.subr.mxu0 0.0
      %2143 = vmatpush1.msra.mxu0 0.0
      %2144 = vmatprep.subr.mxu0 0.0
      %2145 = vmatpush1.msra.mxu0 0.0
      %2146 = vmatprep.subr.mxu0 0.0
      %2147 = vmatpush1.msra.mxu0 0.0
      %2148 = vmatprep.subr.mxu0 0.0
      %2149 = vmatpush1.msra.mxu0 0.0
      %2150 = vmatprep.subr.mxu0 0.0
      %2151 = vmatpush1.msra.mxu0 0.0
      %2152 = vmatprep.subr.mxu0 0.0
      %2153 = vmatpush1.msra.mxu0 0.0
      %2154 = vmatprep.subr.mxu0 0.0
      %2155 = vmatpush1.msra.mxu0 0.0
      %2156 = vmatprep.subr.mxu0 0.0
      %2157 = vmatpush1.msra.mxu0 0.0
      %2158 = vmatprep.subr.mxu0 0.0
      %2159 = vmatpush1.msra.mxu0 0.0
      %2160 = vmatprep.subr.mxu0 0.0
      %2161 = vmatpush1.msra.mxu0 0.0
      %2162 = vmatprep.subr.mxu0 0.0
      %2163 = vmatpush1.msra.mxu0 0.0
      %2164 = vmatprep.subr.mxu0 0.0
      %2165 = vmatpush1.msra.mxu0 0.0
      %2166 = vmatprep.subr.mxu0 0.0
      %2167 = vmatpush1.msra.mxu0 0.0
      %2168 = vmatprep.subr.mxu0 0.0
      %2169 = vmatpush1.msra.mxu0 0.0
      %2170 = vmatprep.subr.mxu0 0.0
      %2171 = vmatpush1.msra.mxu0 0.0
      %2172 = vmatprep.subr.mxu0 0.0
      %2173 = vmatpush1.msra.mxu0 0.0
      %2174 = vmatprep.mubr.f32.mxu0 0.0
      %2175 = vmatmul.mubr.f32.gmra.mrb[0].mxu0 %v1821
      %v2176 = vpop.f32.mrb[0].mxu0
      %v2177 = vadd.f32 %v1603, %v2176
      %v2178 = vpop.f32.mrb[0].mxu0
      %v2179 = vadd.f32 %v1605, %v2178
      %2180 = vdwg.mxu0
      %2181 = vmatprep.subr.mxu0 %v1140
      %2182 = vmatpush1.msra.mxu0 %v1139
      %2183 = vmatprep.subr.mxu0 %v1156
      %2184 = vmatpush1.msra.mxu0 %v1155
      %2185 = vmatprep.subr.mxu0 %v1172
      %2186 = vmatpush1.msra.mxu0 %v1171
      %2187 = vmatprep.subr.mxu0 %v1235
      %2188 = vmatpush1.msra.mxu0 %v1232
      %2189 = vmatprep.subr.mxu0 0.0
      %2190 = vmatpush1.msra.mxu0 0.0
      %2191 = vmatprep.subr.mxu0 0.0
      %2192 = vmatpush1.msra.mxu0 0.0
      %2193 = vmatprep.subr.mxu0 0.0
      %2194 = vmatpush1.msra.mxu0 0.0
      %2195 = vmatprep.subr.mxu0 0.0
      %2196 = vmatpush1.msra.mxu0 0.0
      %2197 = vmatprep.subr.mxu0 0.0
      %2198 = vmatpush1.msra.mxu0 0.0
      %2199 = vmatprep.subr.mxu0 0.0
      %2200 = vmatpush1.msra.mxu0 0.0
      %2201 = vmatprep.subr.mxu0 0.0
      %2202 = vmatpush1.msra.mxu0 0.0
      %2203 = vmatprep.subr.mxu0 0.0
      %2204 = vmatpush1.msra.mxu0 0.0
      %2205 = vmatprep.subr.mxu0 0.0
      %2206 = vmatpush1.msra.mxu0 0.0
      %2207 = vmatprep.subr.mxu0 0.0
      %2208 = vmatpush1.msra.mxu0 0.0
      %2209 = vmatprep.subr.mxu0 0.0
      %2210 = vmatpush1.msra.mxu0 0.0
      %2211 = vmatprep.subr.mxu0 0.0
      %2212 = vmatpush1.msra.mxu0 0.0
      %2213 = vmatprep.subr.mxu0 0.0
      %2214 = vmatpush1.msra.mxu0 0.0
      %2215 = vmatprep.subr.mxu0 0.0
      %2216 = vmatpush1.msra.mxu0 0.0
      %2217 = vmatprep.subr.mxu0 0.0
      %2218 = vmatpush1.msra.mxu0 0.0
      %2219 = vmatprep.subr.mxu0 0.0
      %2220 = vmatpush1.msra.mxu0 0.0
      %2221 = vmatprep.subr.mxu0 0.0
      %2222 = vmatpush1.msra.mxu0 0.0
      %2223 = vmatprep.subr.mxu0 0.0
      %2224 = vmatpush1.msra.mxu0 0.0
      %2225 = vmatprep.subr.mxu0 0.0
      %2226 = vmatpush1.msra.mxu0 0.0
      %2227 = vmatprep.subr.mxu0 0.0
      %2228 = vmatpush1.msra.mxu0 0.0
      %2229 = vmatprep.subr.mxu0 0.0
      %2230 = vmatpush1.msra.mxu0 0.0
      %2231 = vmatprep.subr.mxu0 0.0
      %2232 = vmatpush1.msra.mxu0 0.0
      %2233 = vmatprep.subr.mxu0 0.0
      %2234 = vmatpush1.msra.mxu0 0.0
      %2235 = vmatprep.subr.mxu0 0.0
      %2236 = vmatpush1.msra.mxu0 0.0
      %2237 = vmatprep.subr.mxu0 0.0
      %2238 = vmatpush1.msra.mxu0 0.0
      %2239 = vmatprep.subr.mxu0 0.0
      %2240 = vmatpush1.msra.mxu0 0.0
      %2241 = vmatprep.subr.mxu0 0.0
      %2242 = vmatpush1.msra.mxu0 0.0
      %2243 = vmatprep.subr.mxu0 0.0
      %2244 = vmatpush1.msra.mxu0 0.0
      %2245 = vmatprep.mubr.f32.mxu0 0.0
      %2246 = vmatmul.mubr.f32.gmra.mrb[0].mxu0 %v1821
      %v2247 = vpop.f32.mrb[0].mxu0
      %v2248 = vadd.f32 %v1674, %v2247
      %v2249 = vpop.f32.mrb[0].mxu0
      %v2250 = vadd.f32 %v1676, %v2249
      %2251 = vdwg.mxu0
      %2252 = vmatprep.subr.mxu0 %v1142
      %2253 = vmatpush1.msra.mxu0 %v1141
      %2254 = vmatprep.subr.mxu0 %v1158
      %2255 = vmatpush1.msra.mxu0 %v1157
      %2256 = vmatprep.subr.mxu0 %v1174
      %2257 = vmatpush1.msra.mxu0 %v1173
      %2258 = vmatprep.subr.mxu0 %v1241
      %2259 = vmatpush1.msra.mxu0 %v1238
      %2260 = vmatprep.subr.mxu0 0.0
      %2261 = vmatpush1.msra.mxu0 0.0
      %2262 = vmatprep.subr.mxu0 0.0
      %2263 = vmatpush1.msra.mxu0 0.0
      %2264 = vmatprep.subr.mxu0 0.0
      %2265 = vmatpush1.msra.mxu0 0.0
      %2266 = vmatprep.subr.mxu0 0.0
      %2267 = vmatpush1.msra.mxu0 0.0
      %2268 = vmatprep.subr.mxu0 0.0
      %2269 = vmatpush1.msra.mxu0 0.0
      %2270 = vmatprep.subr.mxu0 0.0
      %2271 = vmatpush1.msra.mxu0 0.0
      %2272 = vmatprep.subr.mxu0 0.0
      %2273 = vmatpush1.msra.mxu0 0.0
      %2274 = vmatprep.subr.mxu0 0.0
      %2275 = vmatpush1.msra.mxu0 0.0
      %2276 = vmatprep.subr.mxu0 0.0
      %2277 = vmatpush1.msra.mxu0 0.0
      %2278 = vmatprep.subr.mxu0 0.0
      %2279 = vmatpush1.msra.mxu0 0.0
      %2280 = vmatprep.subr.mxu0 0.0
      %2281 = vmatpush1.msra.mxu0 0.0
      %2282 = vmatprep.subr.mxu0 0.0
      %2283 = vmatpush1.msra.mxu0 0.0
      %2284 = vmatprep.subr.mxu0 0.0
      %2285 = vmatpush1.msra.mxu0 0.0
      %2286 = vmatprep.subr.mxu0 0.0
      %2287 = vmatpush1.msra.mxu0 0.0
      %2288 = vmatprep.subr.mxu0 0.0
      %2289 = vmatpush1.msra.mxu0 0.0
      %2290 = vmatprep.subr.mxu0 0.0
      %2291 = vmatpush1.msra.mxu0 0.0
      %2292 = vmatprep.subr.mxu0 0.0
      %2293 = vmatpush1.msra.mxu0 0.0
      %2294 = vmatprep.subr.mxu0 0.0
      %2295 = vmatpush1.msra.mxu0 0.0
      %2296 = vmatprep.subr.mxu0 0.0
      %2297 = vmatpush1.msra.mxu0 0.0
      %2298 = vmatprep.subr.mxu0 0.0
      %2299 = vmatpush1.msra.mxu0 0.0
      %2300 = vmatprep.subr.mxu0 0.0
      %2301 = vmatpush1.msra.mxu0 0.0
      %2302 = vmatprep.subr.mxu0 0.0
      %2303 = vmatpush1.msra.mxu0 0.0
      %2304 = vmatprep.subr.mxu0 0.0
      %2305 = vmatpush1.msra.mxu0 0.0
      %2306 = vmatprep.subr.mxu0 0.0
      %2307 = vmatpush1.msra.mxu0 0.0
      %2308 = vmatprep.subr.mxu0 0.0
      %2309 = vmatpush1.msra.mxu0 0.0
      %2310 = vmatprep.subr.mxu0 0.0
      %2311 = vmatpush1.msra.mxu0 0.0
      %2312 = vmatprep.subr.mxu0 0.0
      %2313 = vmatpush1.msra.mxu0 0.0
      %2314 = vmatprep.subr.mxu0 0.0
      %2315 = vmatpush1.msra.mxu0 0.0
      %2316 = vmatprep.mubr.f32.mxu0 0.0
      %2317 = vmatmul.mubr.f32.gmra.mrb[0].mxu0 %v1821
      %v2318 = vpop.f32.mrb[0].mxu0
      %v2319 = vadd.f32 %v1745, %v2318
      %v2320 = vpop.f32.mrb[0].mxu0
      %v2321 = vadd.f32 %v1747, %v2320
      %2322 = vdwg.mxu0
      %2323 = vmatprep.subr.mxu0 %v1144
      %2324 = vmatpush1.msra.mxu0 %v1143
      %2325 = vmatprep.subr.mxu0 %v1160
      %2326 = vmatpush1.msra.mxu0 %v1159
      %2327 = vmatprep.subr.mxu0 %v1176
      %2328 = vmatpush1.msra.mxu0 %v1175
      %2329 = vmatprep.subr.mxu0 %v1247
      %2330 = vmatpush1.msra.mxu0 %v1244
      %2331 = vmatprep.subr.mxu0 0.0
      %2332 = vmatpush1.msra.mxu0 0.0
      %2333 = vmatprep.subr.mxu0 0.0
      %2334 = vmatpush1.msra.mxu0 0.0
      %2335 = vmatprep.subr.mxu0 0.0
      %2336 = vmatpush1.msra.mxu0 0.0
      %2337 = vmatprep.subr.mxu0 0.0
      %2338 = vmatpush1.msra.mxu0 0.0
      %2339 = vmatprep.subr.mxu0 0.0
      %2340 = vmatpush1.msra.mxu0 0.0
      %2341 = vmatprep.subr.mxu0 0.0
      %2342 = vmatpush1.msra.mxu0 0.0
      %2343 = vmatprep.subr.mxu0 0.0
      %2344 = vmatpush1.msra.mxu0 0.0
      %2345 = vmatprep.subr.mxu0 0.0
      %2346 = vmatpush1.msra.mxu0 0.0
      %2347 = vmatprep.subr.mxu0 0.0
      %2348 = vmatpush1.msra.mxu0 0.0
      %2349 = vmatprep.subr.mxu0 0.0
      %2350 = vmatpush1.msra.mxu0 0.0
      %2351 = vmatprep.subr.mxu0 0.0
      %2352 = vmatpush1.msra.mxu0 0.0
      %2353 = vmatprep.subr.mxu0 0.0
      %2354 = vmatpush1.msra.mxu0 0.0
      %2355 = vmatprep.subr.mxu0 0.0
      %2356 = vmatpush1.msra.mxu0 0.0
      %2357 = vmatprep.subr.mxu0 0.0
      %2358 = vmatpush1.msra.mxu0 0.0
      %2359 = vmatprep.subr.mxu0 0.0
      %2360 = vmatpush1.msra.mxu0 0.0
      %2361 = vmatprep.subr.mxu0 0.0
      %2362 = vmatpush1.msra.mxu0 0.0
      %2363 = vmatprep.subr.mxu0 0.0
      %2364 = vmatpush1.msra.mxu0 0.0
      %2365 = vmatprep.subr.mxu0 0.0
      %2366 = vmatpush1.msra.mxu0 0.0
      %2367 = vmatprep.subr.mxu0 0.0
      %2368 = vmatpush1.msra.mxu0 0.0
      %2369 = vmatprep.subr.mxu0 0.0
      %2370 = vmatpush1.msra.mxu0 0.0
      %2371 = vmatprep.subr.mxu0 0.0
      %2372 = vmatpush1.msra.mxu0 0.0
      %2373 = vmatprep.subr.mxu0 0.0
      %2374 = vmatpush1.msra.mxu0 0.0
      %2375 = vmatprep.subr.mxu0 0.0
      %2376 = vmatpush1.msra.mxu0 0.0
      %2377 = vmatprep.subr.mxu0 0.0
      %2378 = vmatpush1.msra.mxu0 0.0
      %2379 = vmatprep.subr.mxu0 0.0
      %2380 = vmatpush1.msra.mxu0 0.0
      %2381 = vmatprep.subr.mxu0 0.0
      %2382 = vmatpush1.msra.mxu0 0.0
      %2383 = vmatprep.subr.mxu0 0.0
      %2384 = vmatpush1.msra.mxu0 0.0
      %2385 = vmatprep.subr.mxu0 0.0
      %2386 = vmatpush1.msra.mxu0 0.0
      %2387 = vmatprep.mubr.f32.mxu0 0.0
      %2388 = vmatmul.mubr.f32.gmra.mrb[0].mxu0 %v1821
      %v2389 = vpop.f32.mrb[0].mxu0
      %v2390 = vadd.f32 %v1816, %v2389
      %v2391 = vpop.f32.mrb[0].mxu0
      %v2392 = vadd.f32 %v1818, %v2391
      %2393 = vdwg.mxu0
      %s2394 = scalar_lea.vmem %s1, 16
      %v2395 = vld [vmem:[%s2394] sm:$0xff]
      %v2396 = vld [vmem:[#allocation2 + $0x10] sm:$0xff]
      %v2397 = vld [vmem:[#allocation2 + $0x18] sm:$0xff]
      %v2398 = vld [vmem:[#allocation2 + $0x20] sm:$0xff]
      %v2399 = vld [vmem:[#allocation2 + $0x28] sm:$0xff]
      %v2400 = vld [vmem:[#allocation2 + $0x30] sm:$0xff]
      %v2401 = vld [vmem:[#allocation2 + $0x38] sm:$0xff]
      %v2402 = vld [vmem:[#allocation2 + $0x40] sm:$0xff]
      %v2403 = vld [vmem:[#allocation2 + $0x48] sm:$0xff]
      %v2404 = vld [vmem:[#allocation2 + $0x50] sm:$0xff]
      %v2405 = vld [vmem:[#allocation2 + $0x58] sm:$0xff]
      %v2406 = vld [vmem:[#allocation2 + $0x60] sm:$0xff]
      %v2407 = vld [vmem:[#allocation2 + $0x68] sm:$0xff]
      %v2408 = vld [vmem:[#allocation2 + $0x70] sm:$0xff]
      %v2409 = vld [vmem:[#allocation2 + $0x78] sm:$0xff]
      %v2410 = vld [vmem:[#allocation2 + $0x80] sm:$0xff]
      %v2411 = vld [vmem:[#allocation2 + $0x88] sm:$0xff]
      %v2412 = vld [vmem:[#allocation2 + $0xc0] sm:$0xff]
      %v2413 = vld [vmem:[#allocation2 + $0xc8] sm:$0xff]
      %v2414 = vld [vmem:[#allocation2 + $0xd0] sm:$0xff]
      %v2415 = vld [vmem:[#allocation2 + $0xd8] sm:$0xff]
      %v2416 = vld [vmem:[#allocation2 + $0xe0] sm:$0xff]
      %v2417 = vld [vmem:[#allocation2 + $0xe8] sm:$0xff]
      %v2418 = vld [vmem:[#allocation2 + $0xf0] sm:$0xff]
      %v2419 = vld [vmem:[#allocation2 + $0xf8] sm:$0xff]
      %v2420 = vld [vmem:[#allocation2 + $0x100] sm:$0xff]
      %v2421 = vld [vmem:[#allocation2 + $0x108] sm:$0xff]
      %v2422 = vld [vmem:[#allocation2 + $0x110] sm:$0xff]
      %v2423 = vld [vmem:[#allocation2 + $0x118] sm:$0xff]
      %v2424 = vld [vmem:[#allocation2 + $0x120] sm:$0xff]
      %v2425 = vld [vmem:[#allocation2 + $0x128] sm:$0xff]
      %v2426 = vld [vmem:[#allocation2 + $0x130] sm:$0xff]
      %v2427 = vld [vmem:[#allocation2 + $0x138] sm:$0xff]
      %v2428 = vld [vmem:[#allocation2 + $0x170] sm:$0xff]
      %v2429 = vld [vmem:[#allocation2 + $0x178] sm:$0xff]
      %v2430 = vld [vmem:[#allocation2 + $0x180] sm:$0xff]
      %v2431 = vld [vmem:[#allocation2 + $0x188] sm:$0xff]
      %v2432 = vld [vmem:[#allocation2 + $0x190] sm:$0xff]
      %v2433 = vld [vmem:[#allocation2 + $0x198] sm:$0xff]
      %v2434 = vld [vmem:[#allocation2 + $0x1a0] sm:$0xff]
      %v2435 = vld [vmem:[#allocation2 + $0x1a8] sm:$0xff]
      %v2436 = vld [vmem:[#allocation2 + $0x1b0] sm:$0xff]
      %v2437 = vld [vmem:[#allocation2 + $0x1b8] sm:$0xff]
      %v2438 = vld [vmem:[#allocation2 + $0x1c0] sm:$0xff]
      %v2439 = vld [vmem:[#allocation2 + $0x1c8] sm:$0xff]
      %v2440 = vld [vmem:[#allocation2 + $0x1d0] sm:$0xff]
      %v2441 = vld [vmem:[#allocation2 + $0x1d8] sm:$0xff]
      %v2442 = vld [vmem:[#allocation2 + $0x1e0] sm:$0xff]
      %v2443 = vld [vmem:[#allocation2 + $0x1e8] sm:$0xff]
      %v2444 = vld [vmem:[#allocation2 + $0x220] sm:$0xf]
      %v2445 = vld [vmem:[#allocation2 + $0x228] sm:$0xf]
      %v2446 = vld [vmem:[#allocation2 + $0x230] sm:$0xf]
      %v2447 = vld [vmem:[#allocation2 + $0x238] sm:$0xf]
      %v2448 = vld [vmem:[#allocation2 + $0x240] sm:$0xf]
      %v2449 = vld [vmem:[#allocation2 + $0x248] sm:$0xf]
      %v2450 = vld [vmem:[#allocation2 + $0x250] sm:$0xf]
      %v2451 = vld [vmem:[#allocation2 + $0x258] sm:$0xf]
      %v2452 = vld [vmem:[#allocation2 + $0x260] sm:$0xf]
      %v2453 = vld [vmem:[#allocation2 + $0x268] sm:$0xf]
      %v2454 = vld [vmem:[#allocation2 + $0x270] sm:$0xf]
      %v2455 = vld [vmem:[#allocation2 + $0x278] sm:$0xf]
      %v2456 = vld [vmem:[#allocation2 + $0x280] sm:$0xf]
      %v2457 = vld [vmem:[#allocation2 + $0x288] sm:$0xf]
      %v2458 = vld [vmem:[#allocation2 + $0x290] sm:$0xf]
      %v2459 = vld [vmem:[#allocation2 + $0x298] sm:$0xf]
      %v2461 = vsel %vm1199, %v2395, 0
      %v2464 = vsel %vm1203, %v2444, 0
      %v2467 = vsel %vm1203, %v2445, 0
      %v2470 = vsel %vm1203, %v2446, 0
      %v2473 = vsel %vm1203, %v2447, 0
      %v2476 = vsel %vm1203, %v2448, 0
      %v2479 = vsel %vm1203, %v2449, 0
      %v2482 = vsel %vm1203, %v2450, 0
      %v2485 = vsel %vm1203, %v2451, 0
      %v2488 = vsel %vm1203, %v2452, 0
      %v2491 = vsel %vm1203, %v2453, 0
      %v2494 = vsel %vm1203, %v2454, 0
      %v2497 = vsel %vm1203, %v2455, 0
      %v2500 = vsel %vm1203, %v2456, 0
      %v2503 = vsel %vm1203, %v2457, 0
      %v2506 = vsel %vm1203, %v2458, 0
      %v2509 = vsel %vm1203, %v2459, 0
      %2511 = vmatprep.subr.mxu0 %v2397
      %2512 = vmatpush1.msra.mxu0 %v2396
      %2513 = vmatprep.subr.mxu0 %v2413
      %2514 = vmatpush1.msra.mxu0 %v2412
      %2515 = vmatprep.subr.mxu0 %v2429
      %2516 = vmatpush1.msra.mxu0 %v2428
      %2517 = vmatprep.subr.mxu0 %v2467
      %2518 = vmatpush1.msra.mxu0 %v2464
      %2519 = vmatprep.subr.mxu0 0.0
      %2520 = vmatpush1.msra.mxu0 0.0
      %2521 = vmatprep.subr.mxu0 0.0
      %2522 = vmatpush1.msra.mxu0 0.0
      %2523 = vmatprep.subr.mxu0 0.0
      %2524 = vmatpush1.msra.mxu0 0.0
      %2525 = vmatprep.subr.mxu0 0.0
      %2526 = vmatpush1.msra.mxu0 0.0
      %2527 = vmatprep.subr.mxu0 0.0
      %2528 = vmatpush1.msra.mxu0 0.0
      %2529 = vmatprep.subr.mxu0 0.0
      %2530 = vmatpush1.msra.mxu0 0.0
      %2531 = vmatprep.subr.mxu0 0.0
      %2532 = vmatpush1.msra.mxu0 0.0
      %2533 = vmatprep.subr.mxu0 0.0
      %2534 = vmatpush1.msra.mxu0 0.0
      %2535 = vmatprep.subr.mxu0 0.0
      %2536 = vmatpush1.msra.mxu0 0.0
      %2537 = vmatprep.subr.mxu0 0.0
      %2538 = vmatpush1.msra.mxu0 0.0
      %2539 = vmatprep.subr.mxu0 0.0
      %2540 = vmatpush1.msra.mxu0 0.0
      %2541 = vmatprep.subr.mxu0 0.0
      %2542 = vmatpush1.msra.mxu0 0.0
      %2543 = vmatprep.subr.mxu0 0.0
      %2544 = vmatpush1.msra.mxu0 0.0
      %2545 = vmatprep.subr.mxu0 0.0
      %2546 = vmatpush1.msra.mxu0 0.0
      %2547 = vmatprep.subr.mxu0 0.0
      %2548 = vmatpush1.msra.mxu0 0.0
      %2549 = vmatprep.subr.mxu0 0.0
      %2550 = vmatpush1.msra.mxu0 0.0
      %2551 = vmatprep.subr.mxu0 0.0
      %2552 = vmatpush1.msra.mxu0 0.0
      %2553 = vmatprep.subr.mxu0 0.0
      %2554 = vmatpush1.msra.mxu0 0.0
      %2555 = vmatprep.subr.mxu0 0.0
      %2556 = vmatpush1.msra.mxu0 0.0
      %2557 = vmatprep.subr.mxu0 0.0
      %2558 = vmatpush1.msra.mxu0 0.0
      %2559 = vmatprep.subr.mxu0 0.0
      %2560 = vmatpush1.msra.mxu0 0.0
      %2561 = vmatprep.subr.mxu0 0.0
      %2562 = vmatpush1.msra.mxu0 0.0
      %2563 = vmatprep.subr.mxu0 0.0
      %2564 = vmatpush1.msra.mxu0 0.0
      %2565 = vmatprep.subr.mxu0 0.0
      %2566 = vmatpush1.msra.mxu0 0.0
      %2567 = vmatprep.subr.mxu0 0.0
      %2568 = vmatpush1.msra.mxu0 0.0
      %2569 = vmatprep.subr.mxu0 0.0
      %2570 = vmatpush1.msra.mxu0 0.0
      %2571 = vmatprep.subr.mxu0 0.0
      %2572 = vmatpush1.msra.mxu0 0.0
      %2573 = vmatprep.subr.mxu0 0.0
      %2574 = vmatpush1.msra.mxu0 0.0
      %2575 = vmatprep.mubr.f32.mxu0 0.0
      %2576 = vmatmul.mubr.f32.gmra.mrb[0].mxu0 %v2461
      %v2577 = vpop.f32.mrb[0].mxu0
      %v2578 = vadd.f32 0.0, %v2577
      %v2579 = vpop.f32.mrb[0].mxu0
      %v2580 = vadd.f32 0.0, %v2579
      %2581 = vdwg.mxu0
      %2582 = vmatprep.subr.mxu0 %v2399
      %2583 = vmatpush1.msra.mxu0 %v2398
      %2584 = vmatprep.subr.mxu0 %v2415
      %2585 = vmatpush1.msra.mxu0 %v2414
      %2586 = vmatprep.subr.mxu0 %v2431
      %2587 = vmatpush1.msra.mxu0 %v2430
      %2588 = vmatprep.subr.mxu0 %v2473
      %2589 = vmatpush1.msra.mxu0 %v2470
      %2590 = vmatprep.subr.mxu0 0.0
      %2591 = vmatpush1.msra.mxu0 0.0
      %2592 = vmatprep.subr.mxu0 0.0
      %2593 = vmatpush1.msra.mxu0 0.0
      %2594 = vmatprep.subr.mxu0 0.0
      %2595 = vmatpush1.msra.mxu0 0.0
      %2596 = vmatprep.subr.mxu0 0.0
      %2597 = vmatpush1.msra.mxu0 0.0
      %2598 = vmatprep.subr.mxu0 0.0
      %2599 = vmatpush1.msra.mxu0 0.0
      %2600 = vmatprep.subr.mxu0 0.0
      %2601 = vmatpush1.msra.mxu0 0.0
      %2602 = vmatprep.subr.mxu0 0.0
      %2603 = vmatpush1.msra.mxu0 0.0
      %2604 = vmatprep.subr.mxu0 0.0
      %2605 = vmatpush1.msra.mxu0 0.0
      %2606 = vmatprep.subr.mxu0 0.0
      %2607 = vmatpush1.msra.mxu0 0.0
      %2608 = vmatprep.subr.mxu0 0.0
      %2609 = vmatpush1.msra.mxu0 0.0
      %2610 = vmatprep.subr.mxu0 0.0
      %2611 = vmatpush1.msra.mxu0 0.0
      %2612 = vmatprep.subr.mxu0 0.0
      %2613 = vmatpush1.msra.mxu0 0.0
      %2614 = vmatprep.subr.mxu0 0.0
      %2615 = vmatpush1.msra.mxu0 0.0
      %2616 = vmatprep.subr.mxu0 0.0
      %2617 = vmatpush1.msra.mxu0 0.0
      %2618 = vmatprep.subr.mxu0 0.0
      %2619 = vmatpush1.msra.mxu0 0.0
      %2620 = vmatprep.subr.mxu0 0.0
      %2621 = vmatpush1.msra.mxu0 0.0
      %2622 = vmatprep.subr.mxu0 0.0
      %2623 = vmatpush1.msra.mxu0 0.0
      %2624 = vmatprep.subr.mxu0 0.0
      %2625 = vmatpush1.msra.mxu0 0.0
      %2626 = vmatprep.subr.mxu0 0.0
      %2627 = vmatpush1.msra.mxu0 0.0
      %2628 = vmatprep.subr.mxu0 0.0
      %2629 = vmatpush1.msra.mxu0 0.0
      %2630 = vmatprep.subr.mxu0 0.0
      %2631 = vmatpush1.msra.mxu0 0.0
      %2632 = vmatprep.subr.mxu0 0.0
      %2633 = vmatpush1.msra.mxu0 0.0
      %2634 = vmatprep.subr.mxu0 0.0
      %2635 = vmatpush1.msra.mxu0 0.0
      %2636 = vmatprep.subr.mxu0 0.0
      %2637 = vmatpush1.msra.mxu0 0.0
      %2638 = vmatprep.subr.mxu0 0.0
      %2639 = vmatpush1.msra.mxu0 0.0
      %2640 = vmatprep.subr.mxu0 0.0
      %2641 = vmatpush1.msra.mxu0 0.0
      %2642 = vmatprep.subr.mxu0 0.0
      %2643 = vmatpush1.msra.mxu0 0.0
      %2644 = vmatprep.subr.mxu0 0.0
      %2645 = vmatpush1.msra.mxu0 0.0
      %2646 = vmatprep.mubr.f32.mxu0 0.0
      %2647 = vmatmul.mubr.f32.gmra.mrb[0].mxu0 %v2461
      %v2648 = vpop.f32.mrb[0].mxu0
      %v2649 = vadd.f32 0.0, %v2648
      %v2650 = vpop.f32.mrb[0].mxu0
      %v2651 = vadd.f32 0.0, %v2650
      %2652 = vdwg.mxu0
      %2653 = vmatprep.subr.mxu0 %v2401
      %2654 = vmatpush1.msra.mxu0 %v2400
      %2655 = vmatprep.subr.mxu0 %v2417
      %2656 = vmatpush1.msra.mxu0 %v2416
      %2657 = vmatprep.subr.mxu0 %v2433
      %2658 = vmatpush1.msra.mxu0 %v2432
      %2659 = vmatprep.subr.mxu0 %v2479
      %2660 = vmatpush1.msra.mxu0 %v2476
      %2661 = vmatprep.subr.mxu0 0.0
      %2662 = vmatpush1.msra.mxu0 0.0
      %2663 = vmatprep.subr.mxu0 0.0
      %2664 = vmatpush1.msra.mxu0 0.0
      %2665 = vmatprep.subr.mxu0 0.0
      %2666 = vmatpush1.msra.mxu0 0.0
      %2667 = vmatprep.subr.mxu0 0.0
      %2668 = vmatpush1.msra.mxu0 0.0
      %2669 = vmatprep.subr.mxu0 0.0
      %2670 = vmatpush1.msra.mxu0 0.0
      %2671 = vmatprep.subr.mxu0 0.0
      %2672 = vmatpush1.msra.mxu0 0.0
      %2673 = vmatprep.subr.mxu0 0.0
      %2674 = vmatpush1.msra.mxu0 0.0
      %2675 = vmatprep.subr.mxu0 0.0
      %2676 = vmatpush1.msra.mxu0 0.0
      %2677 = vmatprep.subr.mxu0 0.0
      %2678 = vmatpush1.msra.mxu0 0.0
      %2679 = vmatprep.subr.mxu0 0.0
      %2680 = vmatpush1.msra.mxu0 0.0
      %2681 = vmatprep.subr.mxu0 0.0
      %2682 = vmatpush1.msra.mxu0 0.0
      %2683 = vmatprep.subr.mxu0 0.0
      %2684 = vmatpush1.msra.mxu0 0.0
      %2685 = vmatprep.subr.mxu0 0.0
      %2686 = vmatpush1.msra.mxu0 0.0
      %2687 = vmatprep.subr.mxu0 0.0
      %2688 = vmatpush1.msra.mxu0 0.0
      %2689 = vmatprep.subr.mxu0 0.0
      %2690 = vmatpush1.msra.mxu0 0.0
      %2691 = vmatprep.subr.mxu0 0.0
      %2692 = vmatpush1.msra.mxu0 0.0
      %2693 = vmatprep.subr.mxu0 0.0
      %2694 = vmatpush1.msra.mxu0 0.0
      %2695 = vmatprep.subr.mxu0 0.0
      %2696 = vmatpush1.msra.mxu0 0.0
      %2697 = vmatprep.subr.mxu0 0.0
      %2698 = vmatpush1.msra.mxu0 0.0
      %2699 = vmatprep.subr.mxu0 0.0
      %2700 = vmatpush1.msra.mxu0 0.0
      %2701 = vmatprep.subr.mxu0 0.0
      %2702 = vmatpush1.msra.mxu0 0.0
      %2703 = vmatprep.subr.mxu0 0.0
      %2704 = vmatpush1.msra.mxu0 0.0
      %2705 = vmatprep.subr.mxu0 0.0
      %2706 = vmatpush1.msra.mxu0 0.0
      %2707 = vmatprep.subr.mxu0 0.0
      %2708 = vmatpush1.msra.mxu0 0.0
      %2709 = vmatprep.subr.mxu0 0.0
      %2710 = vmatpush1.msra.mxu0 0.0
      %2711 = vmatprep.subr.mxu0 0.0
      %2712 = vmatpush1.msra.mxu0 0.0
      %2713 = vmatprep.subr.mxu0 0.0
      %2714 = vmatpush1.msra.mxu0 0.0
      %2715 = vmatprep.subr.mxu0 0.0
      %2716 = vmatpush1.msra.mxu0 0.0
      %2717 = vmatprep.mubr.f32.mxu0 0.0
      %2718 = vmatmul.mubr.f32.gmra.mrb[0].mxu0 %v2461
      %v2719 = vpop.f32.mrb[0].mxu0
      %v2720 = vadd.f32 0.0, %v2719
      %v2721 = vpop.f32.mrb[0].mxu0
      %v2722 = vadd.f32 0.0, %v2721
      %2723 = vdwg.mxu0
      %2724 = vmatprep.subr.mxu0 %v2403
      %2725 = vmatpush1.msra.mxu0 %v2402
      %2726 = vmatprep.subr.mxu0 %v2419
      %2727 = vmatpush1.msra.mxu0 %v2418
      %2728 = vmatprep.subr.mxu0 %v2435
      %2729 = vmatpush1.msra.mxu0 %v2434
      %2730 = vmatprep.subr.mxu0 %v2485
      %2731 = vmatpush1.msra.mxu0 %v2482
      %2732 = vmatprep.subr.mxu0 0.0
      %2733 = vmatpush1.msra.mxu0 0.0
      %2734 = vmatprep.subr.mxu0 0.0
      %2735 = vmatpush1.msra.mxu0 0.0
      %2736 = vmatprep.subr.mxu0 0.0
      %2737 = vmatpush1.msra.mxu0 0.0
      %2738 = vmatprep.subr.mxu0 0.0
      %2739 = vmatpush1.msra.mxu0 0.0
      %2740 = vmatprep.subr.mxu0 0.0
      %2741 = vmatpush1.msra.mxu0 0.0
      %2742 = vmatprep.subr.mxu0 0.0
      %2743 = vmatpush1.msra.mxu0 0.0
      %2744 = vmatprep.subr.mxu0 0.0
      %2745 = vmatpush1.msra.mxu0 0.0
      %2746 = vmatprep.subr.mxu0 0.0
      %2747 = vmatpush1.msra.mxu0 0.0
      %2748 = vmatprep.subr.mxu0 0.0
      %2749 = vmatpush1.msra.mxu0 0.0
      %2750 = vmatprep.subr.mxu0 0.0
      %2751 = vmatpush1.msra.mxu0 0.0
      %2752 = vmatprep.subr.mxu0 0.0
      %2753 = vmatpush1.msra.mxu0 0.0
      %2754 = vmatprep.subr.mxu0 0.0
      %2755 = vmatpush1.msra.mxu0 0.0
      %2756 = vmatprep.subr.mxu0 0.0
      %2757 = vmatpush1.msra.mxu0 0.0
      %2758 = vmatprep.subr.mxu0 0.0
      %2759 = vmatpush1.msra.mxu0 0.0
      %2760 = vmatprep.subr.mxu0 0.0
      %2761 = vmatpush1.msra.mxu0 0.0
      %2762 = vmatprep.subr.mxu0 0.0
      %2763 = vmatpush1.msra.mxu0 0.0
      %2764 = vmatprep.subr.mxu0 0.0
      %2765 = vmatpush1.msra.mxu0 0.0
      %2766 = vmatprep.subr.mxu0 0.0
      %2767 = vmatpush1.msra.mxu0 0.0
      %2768 = vmatprep.subr.mxu0 0.0
      %2769 = vmatpush1.msra.mxu0 0.0
      %2770 = vmatprep.subr.mxu0 0.0
      %2771 = vmatpush1.msra.mxu0 0.0
      %2772 = vmatprep.subr.mxu0 0.0
      %2773 = vmatpush1.msra.mxu0 0.0
      %2774 = vmatprep.subr.mxu0 0.0
      %2775 = vmatpush1.msra.mxu0 0.0
      %2776 = vmatprep.subr.mxu0 0.0
      %2777 = vmatpush1.msra.mxu0 0.0
      %2778 = vmatprep.subr.mxu0 0.0
      %2779 = vmatpush1.msra.mxu0 0.0
      %2780 = vmatprep.subr.mxu0 0.0
      %2781 = vmatpush1.msra.mxu0 0.0
      %2782 = vmatprep.subr.mxu0 0.0
      %2783 = vmatpush1.msra.mxu0 0.0
      %2784 = vmatprep.subr.mxu0 0.0
      %2785 = vmatpush1.msra.mxu0 0.0
      %2786 = vmatprep.subr.mxu0 0.0
      %2787 = vmatpush1.msra.mxu0 0.0
      %2788 = vmatprep.mubr.f32.mxu0 0.0
      %2789 = vmatmul.mubr.f32.gmra.mrb[0].mxu0 %v2461
      %v2790 = vpop.f32.mrb[0].mxu0
      %v2791 = vadd.f32 0.0, %v2790
      %v2792 = vpop.f32.mrb[0].mxu0
      %v2793 = vadd.f32 0.0, %v2792
      %2794 = vdwg.mxu0
      %2795 = vmatprep.subr.mxu0 %v2405
      %2796 = vmatpush1.msra.mxu0 %v2404
      %2797 = vmatprep.subr.mxu0 %v2421
      %2798 = vmatpush1.msra.mxu0 %v2420
      %2799 = vmatprep.subr.mxu0 %v2437
      %2800 = vmatpush1.msra.mxu0 %v2436
      %2801 = vmatprep.subr.mxu0 %v2491
      %2802 = vmatpush1.msra.mxu0 %v2488
      %2803 = vmatprep.subr.mxu0 0.0
      %2804 = vmatpush1.msra.mxu0 0.0
      %2805 = vmatprep.subr.mxu0 0.0
      %2806 = vmatpush1.msra.mxu0 0.0
      %2807 = vmatprep.subr.mxu0 0.0
      %2808 = vmatpush1.msra.mxu0 0.0
      %2809 = vmatprep.subr.mxu0 0.0
      %2810 = vmatpush1.msra.mxu0 0.0
      %2811 = vmatprep.subr.mxu0 0.0
      %2812 = vmatpush1.msra.mxu0 0.0
      %2813 = vmatprep.subr.mxu0 0.0
      %2814 = vmatpush1.msra.mxu0 0.0
      %2815 = vmatprep.subr.mxu0 0.0
      %2816 = vmatpush1.msra.mxu0 0.0
      %2817 = vmatprep.subr.mxu0 0.0
      %2818 = vmatpush1.msra.mxu0 0.0
      %2819 = vmatprep.subr.mxu0 0.0
      %2820 = vmatpush1.msra.mxu0 0.0
      %2821 = vmatprep.subr.mxu0 0.0
      %2822 = vmatpush1.msra.mxu0 0.0
      %2823 = vmatprep.subr.mxu0 0.0
      %2824 = vmatpush1.msra.mxu0 0.0
      %2825 = vmatprep.subr.mxu0 0.0
      %2826 = vmatpush1.msra.mxu0 0.0
      %2827 = vmatprep.subr.mxu0 0.0
      %2828 = vmatpush1.msra.mxu0 0.0
      %2829 = vmatprep.subr.mxu0 0.0
      %2830 = vmatpush1.msra.mxu0 0.0
      %2831 = vmatprep.subr.mxu0 0.0
      %2832 = vmatpush1.msra.mxu0 0.0
      %2833 = vmatprep.subr.mxu0 0.0
      %2834 = vmatpush1.msra.mxu0 0.0
      %2835 = vmatprep.subr.mxu0 0.0
      %2836 = vmatpush1.msra.mxu0 0.0
      %2837 = vmatprep.subr.mxu0 0.0
      %2838 = vmatpush1.msra.mxu0 0.0
      %2839 = vmatprep.subr.mxu0 0.0
      %2840 = vmatpush1.msra.mxu0 0.0
      %2841 = vmatprep.subr.mxu0 0.0
      %2842 = vmatpush1.msra.mxu0 0.0
      %2843 = vmatprep.subr.mxu0 0.0
      %2844 = vmatpush1.msra.mxu0 0.0
      %2845 = vmatprep.subr.mxu0 0.0
      %2846 = vmatpush1.msra.mxu0 0.0
      %2847 = vmatprep.subr.mxu0 0.0
      %2848 = vmatpush1.msra.mxu0 0.0
      %2849 = vmatprep.subr.mxu0 0.0
      %2850 = vmatpush1.msra.mxu0 0.0
      %2851 = vmatprep.subr.mxu0 0.0
      %2852 = vmatpush1.msra.mxu0 0.0
      %2853 = vmatprep.subr.mxu0 0.0
      %2854 = vmatpush1.msra.mxu0 0.0
      %2855 = vmatprep.subr.mxu0 0.0
      %2856 = vmatpush1.msra.mxu0 0.0
      %2857 = vmatprep.subr.mxu0 0.0
      %2858 = vmatpush1.msra.mxu0 0.0
      %2859 = vmatprep.mubr.f32.mxu0 0.0
      %2860 = vmatmul.mubr.f32.gmra.mrb[0].mxu0 %v2461
      %v2861 = vpop.f32.mrb[0].mxu0
      %v2862 = vadd.f32 0.0, %v2861
      %v2863 = vpop.f32.mrb[0].mxu0
      %v2864 = vadd.f32 0.0, %v2863
      %2865 = vdwg.mxu0
      %2866 = vmatprep.subr.mxu0 %v2407
      %2867 = vmatpush1.msra.mxu0 %v2406
      %2868 = vmatprep.subr.mxu0 %v2423
      %2869 = vmatpush1.msra.mxu0 %v2422
      %2870 = vmatprep.subr.mxu0 %v2439
      %2871 = vmatpush1.msra.mxu0 %v2438
      %2872 = vmatprep.subr.mxu0 %v2497
      %2873 = vmatpush1.msra.mxu0 %v2494
      %2874 = vmatprep.subr.mxu0 0.0
      %2875 = vmatpush1.msra.mxu0 0.0
      %2876 = vmatprep.subr.mxu0 0.0
      %2877 = vmatpush1.msra.mxu0 0.0
      %2878 = vmatprep.subr.mxu0 0.0
      %2879 = vmatpush1.msra.mxu0 0.0
      %2880 = vmatprep.subr.mxu0 0.0
      %2881 = vmatpush1.msra.mxu0 0.0
      %2882 = vmatprep.subr.mxu0 0.0
      %2883 = vmatpush1.msra.mxu0 0.0
      %2884 = vmatprep.subr.mxu0 0.0
      %2885 = vmatpush1.msra.mxu0 0.0
      %2886 = vmatprep.subr.mxu0 0.0
      %2887 = vmatpush1.msra.mxu0 0.0
      %2888 = vmatprep.subr.mxu0 0.0
      %2889 = vmatpush1.msra.mxu0 0.0
      %2890 = vmatprep.subr.mxu0 0.0
      %2891 = vmatpush1.msra.mxu0 0.0
      %2892 = vmatprep.subr.mxu0 0.0
      %2893 = vmatpush1.msra.mxu0 0.0
      %2894 = vmatprep.subr.mxu0 0.0
      %2895 = vmatpush1.msra.mxu0 0.0
      %2896 = vmatprep.subr.mxu0 0.0
      %2897 = vmatpush1.msra.mxu0 0.0
      %2898 = vmatprep.subr.mxu0 0.0
      %2899 = vmatpush1.msra.mxu0 0.0
      %2900 = vmatprep.subr.mxu0 0.0
      %2901 = vmatpush1.msra.mxu0 0.0
      %2902 = vmatprep.subr.mxu0 0.0
      %2903 = vmatpush1.msra.mxu0 0.0
      %2904 = vmatprep.subr.mxu0 0.0
      %2905 = vmatpush1.msra.mxu0 0.0
      %2906 = vmatprep.subr.mxu0 0.0
      %2907 = vmatpush1.msra.mxu0 0.0
      %2908 = vmatprep.subr.mxu0 0.0
      %2909 = vmatpush1.msra.mxu0 0.0
      %2910 = vmatprep.subr.mxu0 0.0
      %2911 = vmatpush1.msra.mxu0 0.0
      %2912 = vmatprep.subr.mxu0 0.0
      %2913 = vmatpush1.msra.mxu0 0.0
      %2914 = vmatprep.subr.mxu0 0.0
      %2915 = vmatpush1.msra.mxu0 0.0
      %2916 = vmatprep.subr.mxu0 0.0
      %2917 = vmatpush1.msra.mxu0 0.0
      %2918 = vmatprep.subr.mxu0 0.0
      %2919 = vmatpush1.msra.mxu0 0.0
      %2920 = vmatprep.subr.mxu0 0.0
      %2921 = vmatpush1.msra.mxu0 0.0
      %2922 = vmatprep.subr.mxu0 0.0
      %2923 = vmatpush1.msra.mxu0 0.0
      %2924 = vmatprep.subr.mxu0 0.0
      %2925 = vmatpush1.msra.mxu0 0.0
      %2926 = vmatprep.subr.mxu0 0.0
      %2927 = vmatpush1.msra.mxu0 0.0
      %2928 = vmatprep.subr.mxu0 0.0
      %2929 = vmatpush1.msra.mxu0 0.0
      %2930 = vmatprep.mubr.f32.mxu0 0.0
      %2931 = vmatmul.mubr.f32.gmra.mrb[0].mxu0 %v2461
      %v2932 = vpop.f32.mrb[0].mxu0
      %v2933 = vadd.f32 0.0, %v2932
      %v2934 = vpop.f32.mrb[0].mxu0
      %v2935 = vadd.f32 0.0, %v2934
      %2936 = vdwg.mxu0
      %2937 = vmatprep.subr.mxu0 %v2409
      %2938 = vmatpush1.msra.mxu0 %v2408
      %2939 = vmatprep.subr.mxu0 %v2425
      %2940 = vmatpush1.msra.mxu0 %v2424
      %2941 = vmatprep.subr.mxu0 %v2441
      %2942 = vmatpush1.msra.mxu0 %v2440
      %2943 = vmatprep.subr.mxu0 %v2503
      %2944 = vmatpush1.msra.mxu0 %v2500
      %2945 = vmatprep.subr.mxu0 0.0
      %2946 = vmatpush1.msra.mxu0 0.0
      %2947 = vmatprep.subr.mxu0 0.0
      %2948 = vmatpush1.msra.mxu0 0.0
      %2949 = vmatprep.subr.mxu0 0.0
      %2950 = vmatpush1.msra.mxu0 0.0
      %2951 = vmatprep.subr.mxu0 0.0
      %2952 = vmatpush1.msra.mxu0 0.0
      %2953 = vmatprep.subr.mxu0 0.0
      %2954 = vmatpush1.msra.mxu0 0.0
      %2955 = vmatprep.subr.mxu0 0.0
      %2956 = vmatpush1.msra.mxu0 0.0
      %2957 = vmatprep.subr.mxu0 0.0
      %2958 = vmatpush1.msra.mxu0 0.0
      %2959 = vmatprep.subr.mxu0 0.0
      %2960 = vmatpush1.msra.mxu0 0.0
      %2961 = vmatprep.subr.mxu0 0.0
      %2962 = vmatpush1.msra.mxu0 0.0
      %2963 = vmatprep.subr.mxu0 0.0
      %2964 = vmatpush1.msra.mxu0 0.0
      %2965 = vmatprep.subr.mxu0 0.0
      %2966 = vmatpush1.msra.mxu0 0.0
      %2967 = vmatprep.subr.mxu0 0.0
      %2968 = vmatpush1.msra.mxu0 0.0
      %2969 = vmatprep.subr.mxu0 0.0
      %2970 = vmatpush1.msra.mxu0 0.0
      %2971 = vmatprep.subr.mxu0 0.0
      %2972 = vmatpush1.msra.mxu0 0.0
      %2973 = vmatprep.subr.mxu0 0.0
      %2974 = vmatpush1.msra.mxu0 0.0
      %2975 = vmatprep.subr.mxu0 0.0
      %2976 = vmatpush1.msra.mxu0 0.0
      %2977 = vmatprep.subr.mxu0 0.0
      %2978 = vmatpush1.msra.mxu0 0.0
      %2979 = vmatprep.subr.mxu0 0.0
      %2980 = vmatpush1.msra.mxu0 0.0
      %2981 = vmatprep.subr.mxu0 0.0
      %2982 = vmatpush1.msra.mxu0 0.0
      %2983 = vmatprep.subr.mxu0 0.0
      %2984 = vmatpush1.msra.mxu0 0.0
      %2985 = vmatprep.subr.mxu0 0.0
      %2986 = vmatpush1.msra.mxu0 0.0
      %2987 = vmatprep.subr.mxu0 0.0
      %2988 = vmatpush1.msra.mxu0 0.0
      %2989 = vmatprep.subr.mxu0 0.0
      %2990 = vmatpush1.msra.mxu0 0.0
      %2991 = vmatprep.subr.mxu0 0.0
      %2992 = vmatpush1.msra.mxu0 0.0
      %2993 = vmatprep.subr.mxu0 0.0
      %2994 = vmatpush1.msra.mxu0 0.0
      %2995 = vmatprep.subr.mxu0 0.0
      %2996 = vmatpush1.msra.mxu0 0.0
      %2997 = vmatprep.subr.mxu0 0.0
      %2998 = vmatpush1.msra.mxu0 0.0
      %2999 = vmatprep.subr.mxu0 0.0
      %3000 = vmatpush1.msra.mxu0 0.0
      %3001 = vmatprep.mubr.f32.mxu0 0.0
      %3002 = vmatmul.mubr.f32.gmra.mrb[0].mxu0 %v2461
      %v3003 = vpop.f32.mrb[0].mxu0
      %v3004 = vadd.f32 0.0, %v3003
      %v3005 = vpop.f32.mrb[0].mxu0
      %v3006 = vadd.f32 0.0, %v3005
      %3007 = vdwg.mxu0
      %3008 = vmatprep.subr.mxu0 %v2411
      %3009 = vmatpush1.msra.mxu0 %v2410
      %3010 = vmatprep.subr.mxu0 %v2427
      %3011 = vmatpush1.msra.mxu0 %v2426
      %3012 = vmatprep.subr.mxu0 %v2443
      %3013 = vmatpush1.msra.mxu0 %v2442
      %3014 = vmatprep.subr.mxu0 %v2509
      %3015 = vmatpush1.msra.mxu0 %v2506
      %3016 = vmatprep.subr.mxu0 0.0
      %3017 = vmatpush1.msra.mxu0 0.0
      %3018 = vmatprep.subr.mxu0 0.0
      %3019 = vmatpush1.msra.mxu0 0.0
      %3020 = vmatprep.subr.mxu0 0.0
      %3021 = vmatpush1.msra.mxu0 0.0
      %3022 = vmatprep.subr.mxu0 0.0
      %3023 = vmatpush1.msra.mxu0 0.0
      %3024 = vmatprep.subr.mxu0 0.0
      %3025 = vmatpush1.msra.mxu0 0.0
      %3026 = vmatprep.subr.mxu0 0.0
      %3027 = vmatpush1.msra.mxu0 0.0
      %3028 = vmatprep.subr.mxu0 0.0
      %3029 = vmatpush1.msra.mxu0 0.0
      %3030 = vmatprep.subr.mxu0 0.0
      %3031 = vmatpush1.msra.mxu0 0.0
      %3032 = vmatprep.subr.mxu0 0.0
      %3033 = vmatpush1.msra.mxu0 0.0
      %3034 = vmatprep.subr.mxu0 0.0
      %3035 = vmatpush1.msra.mxu0 0.0
      %3036 = vmatprep.subr.mxu0 0.0
      %3037 = vmatpush1.msra.mxu0 0.0
      %3038 = vmatprep.subr.mxu0 0.0
      %3039 = vmatpush1.msra.mxu0 0.0
      %3040 = vmatprep.subr.mxu0 0.0
      %3041 = vmatpush1.msra.mxu0 0.0
      %3042 = vmatprep.subr.mxu0 0.0
      %3043 = vmatpush1.msra.mxu0 0.0
      %3044 = vmatprep.subr.mxu0 0.0
      %3045 = vmatpush1.msra.mxu0 0.0
      %3046 = vmatprep.subr.mxu0 0.0
      %3047 = vmatpush1.msra.mxu0 0.0
      %3048 = vmatprep.subr.mxu0 0.0
      %3049 = vmatpush1.msra.mxu0 0.0
      %3050 = vmatprep.subr.mxu0 0.0
      %3051 = vmatpush1.msra.mxu0 0.0
      %3052 = vmatprep.subr.mxu0 0.0
      %3053 = vmatpush1.msra.mxu0 0.0
      %3054 = vmatprep.subr.mxu0 0.0
      %3055 = vmatpush1.msra.mxu0 0.0
      %3056 = vmatprep.subr.mxu0 0.0
      %3057 = vmatpush1.msra.mxu0 0.0
      %3058 = vmatprep.subr.mxu0 0.0
      %3059 = vmatpush1.msra.mxu0 0.0
      %3060 = vmatprep.subr.mxu0 0.0
      %3061 = vmatpush1.msra.mxu0 0.0
      %3062 = vmatprep.subr.mxu0 0.0
      %3063 = vmatpush1.msra.mxu0 0.0
      %3064 = vmatprep.subr.mxu0 0.0
      %3065 = vmatpush1.msra.mxu0 0.0
      %3066 = vmatprep.subr.mxu0 0.0
      %3067 = vmatpush1.msra.mxu0 0.0
      %3068 = vmatprep.subr.mxu0 0.0
      %3069 = vmatpush1.msra.mxu0 0.0
      %3070 = vmatprep.subr.mxu0 0.0
      %3071 = vmatpush1.msra.mxu0 0.0
      %3072 = vmatprep.mubr.f32.mxu0 0.0
      %3073 = vmatmul.mubr.f32.gmra.mrb[0].mxu0 %v2461
      %v3074 = vpop.f32.mrb[0].mxu0
      %v3075 = vadd.f32 0.0, %v3074
      %v3076 = vpop.f32.mrb[0].mxu0
      %v3077 = vadd.f32 0.0, %v3076
      %3078 = vdwg.mxu0
      %v3079 = vadd.f32 %v1893, %v2578
      %v3080 = vadd.f32 %v1895, %v2580
      %v3081 = vadd.f32 %v1964, %v2649
      %v3082 = vadd.f32 %v1966, %v2651
      %v3083 = vadd.f32 %v2035, %v2720
      %v3084 = vadd.f32 %v2037, %v2722
      %v3085 = vadd.f32 %v2106, %v2791
      %v3086 = vadd.f32 %v2108, %v2793
      %v3087 = vadd.f32 %v2177, %v2862
      %v3088 = vadd.f32 %v2179, %v2864
      %v3089 = vadd.f32 %v2248, %v2933
      %v3090 = vadd.f32 %v2250, %v2935
      %v3091 = vadd.f32 %v2319, %v3004
      %v3092 = vadd.f32 %v2321, %v3006
      %v3093 = vadd.f32 %v2390, %v3075
      %v3094 = vadd.f32 %v2392, %v3077
      %s3095 = scalar_lea.vmem %s1, 24
      %v3096 = vld [vmem:[%s3095] sm:$0xff]
      %v3097 = vld [vmem:[#allocation2 + $0x18] sm:$0xff]
      %v3098 = vld [vmem:[#allocation2 + $0x20] sm:$0xff]
      %v3099 = vld [vmem:[#allocation2 + $0x28] sm:$0xff]
      %v3100 = vld [vmem:[#allocation2 + $0x30] sm:$0xff]
      %v3101 = vld [vmem:[#allocation2 + $0x38] sm:$0xff]
      %v3102 = vld [vmem:[#allocation2 + $0x40] sm:$0xff]
      %v3103 = vld [vmem:[#allocation2 + $0x48] sm:$0xff]
      %v3104 = vld [vmem:[#allocation2 + $0x50] sm:$0xff]
      %v3105 = vld [vmem:[#allocation2 + $0x58] sm:$0xff]
      %v3106 = vld [vmem:[#allocation2 + $0x60] sm:$0xff]
      %v3107 = vld [vmem:[#allocation2 + $0x68] sm:$0xff]
      %v3108 = vld [vmem:[#allocation2 + $0x70] sm:$0xff]
      %v3109 = vld [vmem:[#allocation2 + $0x78] sm:$0xff]
      %v3110 = vld [vmem:[#allocation2 + $0x80] sm:$0xff]
      %v3111 = vld [vmem:[#allocation2 + $0x88] sm:$0xff]
      %v3112 = vld [vmem:[#allocation2 + $0x90] sm:$0xff]
      %v3113 = vld [vmem:[#allocation2 + $0xc8] sm:$0xff]
      %v3114 = vld [vmem:[#allocation2 + $0xd0] sm:$0xff]
      %v3115 = vld [vmem:[#allocation2 + $0xd8] sm:$0xff]
      %v3116 = vld [vmem:[#allocation2 + $0xe0] sm:$0xff]
      %v3117 = vld [vmem:[#allocation2 + $0xe8] sm:$0xff]
      %v3118 = vld [vmem:[#allocation2 + $0xf0] sm:$0xff]
      %v3119 = vld [vmem:[#allocation2 + $0xf8] sm:$0xff]
      %v3120 = vld [vmem:[#allocation2 + $0x100] sm:$0xff]
      %v3121 = vld [vmem:[#allocation2 + $0x108] sm:$0xff]
      %v3122 = vld [vmem:[#allocation2 + $0x110] sm:$0xff]
      %v3123 = vld [vmem:[#allocation2 + $0x118] sm:$0xff]
      %v3124 = vld [vmem:[#allocation2 + $0x120] sm:$0xff]
      %v3125 = vld [vmem:[#allocation2 + $0x128] sm:$0xff]
      %v3126 = vld [vmem:[#allocation2 + $0x130] sm:$0xff]
      %v3127 = vld [vmem:[#allocation2 + $0x138] sm:$0xff]
      %v3128 = vld [vmem:[#allocation2 + $0x140] sm:$0xff]
      %v3129 = vld [vmem:[#allocation2 + $0x178] sm:$0xff]
      %v3130 = vld [vmem:[#allocation2 + $0x180] sm:$0xff]
      %v3131 = vld [vmem:[#allocation2 + $0x188] sm:$0xff]
      %v3132 = vld [vmem:[#allocation2 + $0x190] sm:$0xff]
      %v3133 = vld [vmem:[#allocation2 + $0x198] sm:$0xff]
      %v3134 = vld [vmem:[#allocation2 + $0x1a0] sm:$0xff]
      %v3135 = vld [vmem:[#allocation2 + $0x1a8] sm:$0xff]
      %v3136 = vld [vmem:[#allocation2 + $0x1b0] sm:$0xff]
      %v3137 = vld [vmem:[#allocation2 + $0x1b8] sm:$0xff]
      %v3138 = vld [vmem:[#allocation2 + $0x1c0] sm:$0xff]
      %v3139 = vld [vmem:[#allocation2 + $0x1c8] sm:$0xff]
      %v3140 = vld [vmem:[#allocation2 + $0x1d0] sm:$0xff]
      %v3141 = vld [vmem:[#allocation2 + $0x1d8] sm:$0xff]
      %v3142 = vld [vmem:[#allocation2 + $0x1e0] sm:$0xff]
      %v3143 = vld [vmem:[#allocation2 + $0x1e8] sm:$0xff]
      %v3144 = vld [vmem:[#allocation2 + $0x1f0] sm:$0xff]
      %v3145 = vld [vmem:[#allocation2 + $0x228] sm:$0xf]
      %v3146 = vld [vmem:[#allocation2 + $0x230] sm:$0xf]
      %v3147 = vld [vmem:[#allocation2 + $0x238] sm:$0xf]
      %v3148 = vld [vmem:[#allocation2 + $0x240] sm:$0xf]
      %v3149 = vld [vmem:[#allocation2 + $0x248] sm:$0xf]
      %v3150 = vld [vmem:[#allocation2 + $0x250] sm:$0xf]
      %v3151 = vld [vmem:[#allocation2 + $0x258] sm:$0xf]
      %v3152 = vld [vmem:[#allocation2 + $0x260] sm:$0xf]
      %v3153 = vld [vmem:[#allocation2 + $0x268] sm:$0xf]
      %v3154 = vld [vmem:[#allocation2 + $0x270] sm:$0xf]
      %v3155 = vld [vmem:[#allocation2 + $0x278] sm:$0xf]
      %v3156 = vld [vmem:[#allocation2 + $0x280] sm:$0xf]
      %v3157 = vld [vmem:[#allocation2 + $0x288] sm:$0xf]
      %v3158 = vld [vmem:[#allocation2 + $0x290] sm:$0xf]
      %v3159 = vld [vmem:[#allocation2 + $0x298] sm:$0xf]
      %v3160 = vld [vmem:[#allocation2 + $0x2a0] sm:$0xf]
      %v3162 = vsel %vm1199, %v3096, 0
      %v3165 = vsel %vm1203, %v3145, 0
      %v3168 = vsel %vm1203, %v3146, 0
      %v3171 = vsel %vm1203, %v3147, 0
      %v3174 = vsel %vm1203, %v3148, 0
      %v3177 = vsel %vm1203, %v3149, 0
      %v3180 = vsel %vm1203, %v3150, 0
      %v3183 = vsel %vm1203, %v3151, 0
      %v3186 = vsel %vm1203, %v3152, 0
      %v3189 = vsel %vm1203, %v3153, 0
      %v3192 = vsel %vm1203, %v3154, 0
      %v3195 = vsel %vm1203, %v3155, 0
      %v3198 = vsel %vm1203, %v3156, 0
      %v3201 = vsel %vm1203, %v3157, 0
      %v3204 = vsel %vm1203, %v3158, 0
      %v3207 = vsel %vm1203, %v3159, 0
      %v3210 = vsel %vm1203, %v3160, 0
      %3212 = vmatprep.subr.mxu0 %v3098
      %3213 = vmatpush1.msra.mxu0 %v3097
      %3214 = vmatprep.subr.mxu0 %v3114
      %3215 = vmatpush1.msra.mxu0 %v3113
      %3216 = vmatprep.subr.mxu0 %v3130
      %3217 = vmatpush1.msra.mxu0 %v3129
      %3218 = vmatprep.subr.mxu0 %v3168
      %3219 = vmatpush1.msra.mxu0 %v3165
      %3220 = vmatprep.subr.mxu0 0.0
      %3221 = vmatpush1.msra.mxu0 0.0
      %3222 = vmatprep.subr.mxu0 0.0
      %3223 = vmatpush1.msra.mxu0 0.0
      %3224 = vmatprep.subr.mxu0 0.0
      %3225 = vmatpush1.msra.mxu0 0.0
      %3226 = vmatprep.subr.mxu0 0.0
      %3227 = vmatpush1.msra.mxu0 0.0
      %3228 = vmatprep.subr.mxu0 0.0
      %3229 = vmatpush1.msra.mxu0 0.0
      %3230 = vmatprep.subr.mxu0 0.0
      %3231 = vmatpush1.msra.mxu0 0.0
      %3232 = vmatprep.subr.mxu0 0.0
      %3233 = vmatpush1.msra.mxu0 0.0
      %3234 = vmatprep.subr.mxu0 0.0
      %3235 = vmatpush1.msra.mxu0 0.0
      %3236 = vmatprep.subr.mxu0 0.0
      %3237 = vmatpush1.msra.mxu0 0.0
      %3238 = vmatprep.subr.mxu0 0.0
      %3239 = vmatpush1.msra.mxu0 0.0
      %3240 = vmatprep.subr.mxu0 0.0
      %3241 = vmatpush1.msra.mxu0 0.0
      %3242 = vmatprep.subr.mxu0 0.0
      %3243 = vmatpush1.msra.mxu0 0.0
      %3244 = vmatprep.subr.mxu0 0.0
      %3245 = vmatpush1.msra.mxu0 0.0
      %3246 = vmatprep.subr.mxu0 0.0
      %3247 = vmatpush1.msra.mxu0 0.0
      %3248 = vmatprep.subr.mxu0 0.0
      %3249 = vmatpush1.msra.mxu0 0.0
      %3250 = vmatprep.subr.mxu0 0.0
      %3251 = vmatpush1.msra.mxu0 0.0
      %3252 = vmatprep.subr.mxu0 0.0
      %3253 = vmatpush1.msra.mxu0 0.0
      %3254 = vmatprep.subr.mxu0 0.0
      %3255 = vmatpush1.msra.mxu0 0.0
      %3256 = vmatprep.subr.mxu0 0.0
      %3257 = vmatpush1.msra.mxu0 0.0
      %3258 = vmatprep.subr.mxu0 0.0
      %3259 = vmatpush1.msra.mxu0 0.0
      %3260 = vmatprep.subr.mxu0 0.0
      %3261 = vmatpush1.msra.mxu0 0.0
      %3262 = vmatprep.subr.mxu0 0.0
      %3263 = vmatpush1.msra.mxu0 0.0
      %3264 = vmatprep.subr.mxu0 0.0
      %3265 = vmatpush1.msra.mxu0 0.0
      %3266 = vmatprep.subr.mxu0 0.0
      %3267 = vmatpush1.msra.mxu0 0.0
      %3268 = vmatprep.subr.mxu0 0.0
      %3269 = vmatpush1.msra.mxu0 0.0
      %3270 = vmatprep.subr.mxu0 0.0
      %3271 = vmatpush1.msra.mxu0 0.0
      %3272 = vmatprep.subr.mxu0 0.0
      %3273 = vmatpush1.msra.mxu0 0.0
      %3274 = vmatprep.subr.mxu0 0.0
      %3275 = vmatpush1.msra.mxu0 0.0
      %3276 = vmatprep.mubr.f32.mxu0 0.0
      %3277 = vmatmul.mubr.f32.gmra.mrb[0].mxu0 %v3162
      %v3278 = vpop.f32.mrb[0].mxu0
      %v3279 = vadd.f32 0.0, %v3278
      %v3280 = vpop.f32.mrb[0].mxu0
      %v3281 = vadd.f32 0.0, %v3280
      %3282 = vdwg.mxu0
      %3283 = vmatprep.subr.mxu0 %v3100
      %3284 = vmatpush1.msra.mxu0 %v3099
      %3285 = vmatprep.subr.mxu0 %v3116
      %3286 = vmatpush1.msra.mxu0 %v3115
      %3287 = vmatprep.subr.mxu0 %v3132
      %3288 = vmatpush1.msra.mxu0 %v3131
      %3289 = vmatprep.subr.mxu0 %v3174
      %3290 = vmatpush1.msra.mxu0 %v3171
      %3291 = vmatprep.subr.mxu0 0.0
      %3292 = vmatpush1.msra.mxu0 0.0
      %3293 = vmatprep.subr.mxu0 0.0
      %3294 = vmatpush1.msra.mxu0 0.0
      %3295 = vmatprep.subr.mxu0 0.0
      %3296 = vmatpush1.msra.mxu0 0.0
      %3297 = vmatprep.subr.mxu0 0.0
      %3298 = vmatpush1.msra.mxu0 0.0
      %3299 = vmatprep.subr.mxu0 0.0
      %3300 = vmatpush1.msra.mxu0 0.0
      %3301 = vmatprep.subr.mxu0 0.0
      %3302 = vmatpush1.msra.mxu0 0.0
      %3303 = vmatprep.subr.mxu0 0.0
      %3304 = vmatpush1.msra.mxu0 0.0
      %3305 = vmatprep.subr.mxu0 0.0
      %3306 = vmatpush1.msra.mxu0 0.0
      %3307 = vmatprep.subr.mxu0 0.0
      %3308 = vmatpush1.msra.mxu0 0.0
      %3309 = vmatprep.subr.mxu0 0.0
      %3310 = vmatpush1.msra.mxu0 0.0
      %3311 = vmatprep.subr.mxu0 0.0
      %3312 = vmatpush1.msra.mxu0 0.0
      %3313 = vmatprep.subr.mxu0 0.0
      %3314 = vmatpush1.msra.mxu0 0.0
      %3315 = vmatprep.subr.mxu0 0.0
      %3316 = vmatpush1.msra.mxu0 0.0
      %3317 = vmatprep.subr.mxu0 0.0
      %3318 = vmatpush1.msra.mxu0 0.0
      %3319 = vmatprep.subr.mxu0 0.0
      %3320 = vmatpush1.msra.mxu0 0.0
      %3321 = vmatprep.subr.mxu0 0.0
      %3322 = vmatpush1.msra.mxu0 0.0
      %3323 = vmatprep.subr.mxu0 0.0
      %3324 = vmatpush1.msra.mxu0 0.0
      %3325 = vmatprep.subr.mxu0 0.0
      %3326 = vmatpush1.msra.mxu0 0.0
      %3327 = vmatprep.subr.mxu0 0.0
      %3328 = vmatpush1.msra.mxu0 0.0
      %3329 = vmatprep.subr.mxu0 0.0
      %3330 = vmatpush1.msra.mxu0 0.0
      %3331 = vmatprep.subr.mxu0 0.0
      %3332 = vmatpush1.msra.mxu0 0.0
      %3333 = vmatprep.subr.mxu0 0.0
      %3334 = vmatpush1.msra.mxu0 0.0
      %3335 = vmatprep.subr.mxu0 0.0
      %3336 = vmatpush1.msra.mxu0 0.0
      %3337 = vmatprep.subr.mxu0 0.0
      %3338 = vmatpush1.msra.mxu0 0.0
      %3339 = vmatprep.subr.mxu0 0.0
      %3340 = vmatpush1.msra.mxu0 0.0
      %3341 = vmatprep.subr.mxu0 0.0
      %3342 = vmatpush1.msra.mxu0 0.0
      %3343 = vmatprep.subr.mxu0 0.0
      %3344 = vmatpush1.msra.mxu0 0.0
      %3345 = vmatprep.subr.mxu0 0.0
      %3346 = vmatpush1.msra.mxu0 0.0
      %3347 = vmatprep.mubr.f32.mxu0 0.0
      %3348 = vmatmul.mubr.f32.gmra.mrb[0].mxu0 %v3162
      %v3349 = vpop.f32.mrb[0].mxu0
      %v3350 = vadd.f32 0.0, %v3349
      %v3351 = vpop.f32.mrb[0].mxu0
      %v3352 = vadd.f32 0.0, %v3351
      %3353 = vdwg.mxu0
      %3354 = vmatprep.subr.mxu0 %v3102
      %3355 = vmatpush1.msra.mxu0 %v3101
      %3356 = vmatprep.subr.mxu0 %v3118
      %3357 = vmatpush1.msra.mxu0 %v3117
      %3358 = vmatprep.subr.mxu0 %v3134
      %3359 = vmatpush1.msra.mxu0 %v3133
      %3360 = vmatprep.subr.mxu0 %v3180
      %3361 = vmatpush1.msra.mxu0 %v3177
      %3362 = vmatprep.subr.mxu0 0.0
      %3363 = vmatpush1.msra.mxu0 0.0
      %3364 = vmatprep.subr.mxu0 0.0
      %3365 = vmatpush1.msra.mxu0 0.0
      %3366 = vmatprep.subr.mxu0 0.0
      %3367 = vmatpush1.msra.mxu0 0.0
      %3368 = vmatprep.subr.mxu0 0.0
      %3369 = vmatpush1.msra.mxu0 0.0
      %3370 = vmatprep.subr.mxu0 0.0
      %3371 = vmatpush1.msra.mxu0 0.0
      %3372 = vmatprep.subr.mxu0 0.0
      %3373 = vmatpush1.msra.mxu0 0.0
      %3374 = vmatprep.subr.mxu0 0.0
      %3375 = vmatpush1.msra.mxu0 0.0
      %3376 = vmatprep.subr.mxu0 0.0
      %3377 = vmatpush1.msra.mxu0 0.0
      %3378 = vmatprep.subr.mxu0 0.0
      %3379 = vmatpush1.msra.mxu0 0.0
      %3380 = vmatprep.subr.mxu0 0.0
      %3381 = vmatpush1.msra.mxu0 0.0
      %3382 = vmatprep.subr.mxu0 0.0
      %3383 = vmatpush1.msra.mxu0 0.0
      %3384 = vmatprep.subr.mxu0 0.0
      %3385 = vmatpush1.msra.mxu0 0.0
      %3386 = vmatprep.subr.mxu0 0.0
      %3387 = vmatpush1.msra.mxu0 0.0
      %3388 = vmatprep.subr.mxu0 0.0
      %3389 = vmatpush1.msra.mxu0 0.0
      %3390 = vmatprep.subr.mxu0 0.0
      %3391 = vmatpush1.msra.mxu0 0.0
      %3392 = vmatprep.subr.mxu0 0.0
      %3393 = vmatpush1.msra.mxu0 0.0
      %3394 = vmatprep.subr.mxu0 0.0
      %3395 = vmatpush1.msra.mxu0 0.0
      %3396 = vmatprep.subr.mxu0 0.0
      %3397 = vmatpush1.msra.mxu0 0.0
      %3398 = vmatprep.subr.mxu0 0.0
      %3399 = vmatpush1.msra.mxu0 0.0
      %3400 = vmatprep.subr.mxu0 0.0
      %3401 = vmatpush1.msra.mxu0 0.0
      %3402 = vmatprep.subr.mxu0 0.0
      %3403 = vmatpush1.msra.mxu0 0.0
      %3404 = vmatprep.subr.mxu0 0.0
      %3405 = vmatpush1.msra.mxu0 0.0
      %3406 = vmatprep.subr.mxu0 0.0
      %3407 = vmatpush1.msra.mxu0 0.0
      %3408 = vmatprep.subr.mxu0 0.0
      %3409 = vmatpush1.msra.mxu0 0.0
      %3410 = vmatprep.subr.mxu0 0.0
      %3411 = vmatpush1.msra.mxu0 0.0
      %3412 = vmatprep.subr.mxu0 0.0
      %3413 = vmatpush1.msra.mxu0 0.0
      %3414 = vmatprep.subr.mxu0 0.0
      %3415 = vmatpush1.msra.mxu0 0.0
      %3416 = vmatprep.subr.mxu0 0.0
      %3417 = vmatpush1.msra.mxu0 0.0
      %3418 = vmatprep.mubr.f32.mxu0 0.0
      %3419 = vmatmul.mubr.f32.gmra.mrb[0].mxu0 %v3162
      %v3420 = vpop.f32.mrb[0].mxu0
      %v3421 = vadd.f32 0.0, %v3420
      %v3422 = vpop.f32.mrb[0].mxu0
      %v3423 = vadd.f32 0.0, %v3422
      %3424 = vdwg.mxu0
      %3425 = vmatprep.subr.mxu0 %v3104
      %3426 = vmatpush1.msra.mxu0 %v3103
      %3427 = vmatprep.subr.mxu0 %v3120
      %3428 = vmatpush1.msra.mxu0 %v3119
      %3429 = vmatprep.subr.mxu0 %v3136
      %3430 = vmatpush1.msra.mxu0 %v3135
      %3431 = vmatprep.subr.mxu0 %v3186
      %3432 = vmatpush1.msra.mxu0 %v3183
      %3433 = vmatprep.subr.mxu0 0.0
      %3434 = vmatpush1.msra.mxu0 0.0
      %3435 = vmatprep.subr.mxu0 0.0
      %3436 = vmatpush1.msra.mxu0 0.0
      %3437 = vmatprep.subr.mxu0 0.0
      %3438 = vmatpush1.msra.mxu0 0.0
      %3439 = vmatprep.subr.mxu0 0.0
      %3440 = vmatpush1.msra.mxu0 0.0
      %3441 = vmatprep.subr.mxu0 0.0
      %3442 = vmatpush1.msra.mxu0 0.0
      %3443 = vmatprep.subr.mxu0 0.0
      %3444 = vmatpush1.msra.mxu0 0.0
      %3445 = vmatprep.subr.mxu0 0.0
      %3446 = vmatpush1.msra.mxu0 0.0
      %3447 = vmatprep.subr.mxu0 0.0
      %3448 = vmatpush1.msra.mxu0 0.0
      %3449 = vmatprep.subr.mxu0 0.0
      %3450 = vmatpush1.msra.mxu0 0.0
      %3451 = vmatprep.subr.mxu0 0.0
      %3452 = vmatpush1.msra.mxu0 0.0
      %3453 = vmatprep.subr.mxu0 0.0
      %3454 = vmatpush1.msra.mxu0 0.0
      %3455 = vmatprep.subr.mxu0 0.0
      %3456 = vmatpush1.msra.mxu0 0.0
      %3457 = vmatprep.subr.mxu0 0.0
      %3458 = vmatpush1.msra.mxu0 0.0
      %3459 = vmatprep.subr.mxu0 0.0
      %3460 = vmatpush1.msra.mxu0 0.0
      %3461 = vmatprep.subr.mxu0 0.0
      %3462 = vmatpush1.msra.mxu0 0.0
      %3463 = vmatprep.subr.mxu0 0.0
      %3464 = vmatpush1.msra.mxu0 0.0
      %3465 = vmatprep.subr.mxu0 0.0
      %3466 = vmatpush1.msra.mxu0 0.0
      %3467 = vmatprep.subr.mxu0 0.0
      %3468 = vmatpush1.msra.mxu0 0.0
      %3469 = vmatprep.subr.mxu0 0.0
      %3470 = vmatpush1.msra.mxu0 0.0
      %3471 = vmatprep.subr.mxu0 0.0
      %3472 = vmatpush1.msra.mxu0 0.0
      %3473 = vmatprep.subr.mxu0 0.0
      %3474 = vmatpush1.msra.mxu0 0.0
      %3475 = vmatprep.subr.mxu0 0.0
      %3476 = vmatpush1.msra.mxu0 0.0
      %3477 = vmatprep.subr.mxu0 0.0
      %3478 = vmatpush1.msra.mxu0 0.0
      %3479 = vmatprep.subr.mxu0 0.0
      %3480 = vmatpush1.msra.mxu0 0.0
      %3481 = vmatprep.subr.mxu0 0.0
      %3482 = vmatpush1.msra.mxu0 0.0
      %3483 = vmatprep.subr.mxu0 0.0
      %3484 = vmatpush1.msra.mxu0 0.0
      %3485 = vmatprep.subr.mxu0 0.0
      %3486 = vmatpush1.msra.mxu0 0.0
      %3487 = vmatprep.subr.mxu0 0.0
      %3488 = vmatpush1.msra.mxu0 0.0
      %3489 = vmatprep.mubr.f32.mxu0 0.0
      %3490 = vmatmul.mubr.f32.gmra.mrb[0].mxu0 %v3162
      %v3491 = vpop.f32.mrb[0].mxu0
      %v3492 = vadd.f32 0.0, %v3491
      %v3493 = vpop.f32.mrb[0].mxu0
      %v3494 = vadd.f32 0.0, %v3493
      %3495 = vdwg.mxu0
      %3496 = vmatprep.subr.mxu0 %v3106
      %3497 = vmatpush1.msra.mxu0 %v3105
      %3498 = vmatprep.subr.mxu0 %v3122
      %3499 = vmatpush1.msra.mxu0 %v3121
      %3500 = vmatprep.subr.mxu0 %v3138
      %3501 = vmatpush1.msra.mxu0 %v3137
      %3502 = vmatprep.subr.mxu0 %v3192
      %3503 = vmatpush1.msra.mxu0 %v3189
      %3504 = vmatprep.subr.mxu0 0.0
      %3505 = vmatpush1.msra.mxu0 0.0
      %3506 = vmatprep.subr.mxu0 0.0
      %3507 = vmatpush1.msra.mxu0 0.0
      %3508 = vmatprep.subr.mxu0 0.0
      %3509 = vmatpush1.msra.mxu0 0.0
      %3510 = vmatprep.subr.mxu0 0.0
      %3511 = vmatpush1.msra.mxu0 0.0
      %3512 = vmatprep.subr.mxu0 0.0
      %3513 = vmatpush1.msra.mxu0 0.0
      %3514 = vmatprep.subr.mxu0 0.0
      %3515 = vmatpush1.msra.mxu0 0.0
      %3516 = vmatprep.subr.mxu0 0.0
      %3517 = vmatpush1.msra.mxu0 0.0
      %3518 = vmatprep.subr.mxu0 0.0
      %3519 = vmatpush1.msra.mxu0 0.0
      %3520 = vmatprep.subr.mxu0 0.0
      %3521 = vmatpush1.msra.mxu0 0.0
      %3522 = vmatprep.subr.mxu0 0.0
      %3523 = vmatpush1.msra.mxu0 0.0
      %3524 = vmatprep.subr.mxu0 0.0
      %3525 = vmatpush1.msra.mxu0 0.0
      %3526 = vmatprep.subr.mxu0 0.0
      %3527 = vmatpush1.msra.mxu0 0.0
      %3528 = vmatprep.subr.mxu0 0.0
      %3529 = vmatpush1.msra.mxu0 0.0
      %3530 = vmatprep.subr.mxu0 0.0
      %3531 = vmatpush1.msra.mxu0 0.0
      %3532 = vmatprep.subr.mxu0 0.0
      %3533 = vmatpush1.msra.mxu0 0.0
      %3534 = vmatprep.subr.mxu0 0.0
      %3535 = vmatpush1.msra.mxu0 0.0
      %3536 = vmatprep.subr.mxu0 0.0
      %3537 = vmatpush1.msra.mxu0 0.0
      %3538 = vmatprep.subr.mxu0 0.0
      %3539 = vmatpush1.msra.mxu0 0.0
      %3540 = vmatprep.subr.mxu0 0.0
      %3541 = vmatpush1.msra.mxu0 0.0
      %3542 = vmatprep.subr.mxu0 0.0
      %3543 = vmatpush1.msra.mxu0 0.0
      %3544 = vmatprep.subr.mxu0 0.0
      %3545 = vmatpush1.msra.mxu0 0.0
      %3546 = vmatprep.subr.mxu0 0.0
      %3547 = vmatpush1.msra.mxu0 0.0
      %3548 = vmatprep.subr.mxu0 0.0
      %3549 = vmatpush1.msra.mxu0 0.0
      %3550 = vmatprep.subr.mxu0 0.0
      %3551 = vmatpush1.msra.mxu0 0.0
      %3552 = vmatprep.subr.mxu0 0.0
      %3553 = vmatpush1.msra.mxu0 0.0
      %3554 = vmatprep.subr.mxu0 0.0
      %3555 = vmatpush1.msra.mxu0 0.0
      %3556 = vmatprep.subr.mxu0 0.0
      %3557 = vmatpush1.msra.mxu0 0.0
      %3558 = vmatprep.subr.mxu0 0.0
      %3559 = vmatpush1.msra.mxu0 0.0
      %3560 = vmatprep.mubr.f32.mxu0 0.0
      %3561 = vmatmul.mubr.f32.gmra.mrb[0].mxu0 %v3162
      %v3562 = vpop.f32.mrb[0].mxu0
      %v3563 = vadd.f32 0.0, %v3562
      %v3564 = vpop.f32.mrb[0].mxu0
      %v3565 = vadd.f32 0.0, %v3564
      %3566 = vdwg.mxu0
      %3567 = vmatprep.subr.mxu0 %v3108
      %3568 = vmatpush1.msra.mxu0 %v3107
      %3569 = vmatprep.subr.mxu0 %v3124
      %3570 = vmatpush1.msra.mxu0 %v3123
      %3571 = vmatprep.subr.mxu0 %v3140
      %3572 = vmatpush1.msra.mxu0 %v3139
      %3573 = vmatprep.subr.mxu0 %v3198
      %3574 = vmatpush1.msra.mxu0 %v3195
      %3575 = vmatprep.subr.mxu0 0.0
      %3576 = vmatpush1.msra.mxu0 0.0
      %3577 = vmatprep.subr.mxu0 0.0
      %3578 = vmatpush1.msra.mxu0 0.0
      %3579 = vmatprep.subr.mxu0 0.0
      %3580 = vmatpush1.msra.mxu0 0.0
      %3581 = vmatprep.subr.mxu0 0.0
      %3582 = vmatpush1.msra.mxu0 0.0
      %3583 = vmatprep.subr.mxu0 0.0
      %3584 = vmatpush1.msra.mxu0 0.0
      %3585 = vmatprep.subr.mxu0 0.0
      %3586 = vmatpush1.msra.mxu0 0.0
      %3587 = vmatprep.subr.mxu0 0.0
      %3588 = vmatpush1.msra.mxu0 0.0
      %3589 = vmatprep.subr.mxu0 0.0
      %3590 = vmatpush1.msra.mxu0 0.0
      %3591 = vmatprep.subr.mxu0 0.0
      %3592 = vmatpush1.msra.mxu0 0.0
      %3593 = vmatprep.subr.mxu0 0.0
      %3594 = vmatpush1.msra.mxu0 0.0
      %3595 = vmatprep.subr.mxu0 0.0
      %3596 = vmatpush1.msra.mxu0 0.0
      %3597 = vmatprep.subr.mxu0 0.0
      %3598 = vmatpush1.msra.mxu0 0.0
      %3599 = vmatprep.subr.mxu0 0.0
      %3600 = vmatpush1.msra.mxu0 0.0
      %3601 = vmatprep.subr.mxu0 0.0
      %3602 = vmatpush1.msra.mxu0 0.0
      %3603 = vmatprep.subr.mxu0 0.0
      %3604 = vmatpush1.msra.mxu0 0.0
      %3605 = vmatprep.subr.mxu0 0.0
      %3606 = vmatpush1.msra.mxu0 0.0
      %3607 = vmatprep.subr.mxu0 0.0
      %3608 = vmatpush1.msra.mxu0 0.0
      %3609 = vmatprep.subr.mxu0 0.0
      %3610 = vmatpush1.msra.mxu0 0.0
      %3611 = vmatprep.subr.mxu0 0.0
      %3612 = vmatpush1.msra.mxu0 0.0
      %3613 = vmatprep.subr.mxu0 0.0
      %3614 = vmatpush1.msra.mxu0 0.0
      %3615 = vmatprep.subr.mxu0 0.0
      %3616 = vmatpush1.msra.mxu0 0.0
      %3617 = vmatprep.subr.mxu0 0.0
      %3618 = vmatpush1.msra.mxu0 0.0
      %3619 = vmatprep.subr.mxu0 0.0
      %3620 = vmatpush1.msra.mxu0 0.0
      %3621 = vmatprep.subr.mxu0 0.0
      %3622 = vmatpush1.msra.mxu0 0.0
      %3623 = vmatprep.subr.mxu0 0.0
      %3624 = vmatpush1.msra.mxu0 0.0
      %3625 = vmatprep.subr.mxu0 0.0
      %3626 = vmatpush1.msra.mxu0 0.0
      %3627 = vmatprep.subr.mxu0 0.0
      %3628 = vmatpush1.msra.mxu0 0.0
      %3629 = vmatprep.subr.mxu0 0.0
      %3630 = vmatpush1.msra.mxu0 0.0
      %3631 = vmatprep.mubr.f32.mxu0 0.0
      %3632 = vmatmul.mubr.f32.gmra.mrb[0].mxu0 %v3162
      %v3633 = vpop.f32.mrb[0].mxu0
      %v3634 = vadd.f32 0.0, %v3633
      %v3635 = vpop.f32.mrb[0].mxu0
      %v3636 = vadd.f32 0.0, %v3635
      %3637 = vdwg.mxu0
      %3638 = vmatprep.subr.mxu0 %v3110
      %3639 = vmatpush1.msra.mxu0 %v3109
      %3640 = vmatprep.subr.mxu0 %v3126
      %3641 = vmatpush1.msra.mxu0 %v3125
      %3642 = vmatprep.subr.mxu0 %v3142
      %3643 = vmatpush1.msra.mxu0 %v3141
      %3644 = vmatprep.subr.mxu0 %v3204
      %3645 = vmatpush1.msra.mxu0 %v3201
      %3646 = vmatprep.subr.mxu0 0.0
      %3647 = vmatpush1.msra.mxu0 0.0
      %3648 = vmatprep.subr.mxu0 0.0
      %3649 = vmatpush1.msra.mxu0 0.0
      %3650 = vmatprep.subr.mxu0 0.0
      %3651 = vmatpush1.msra.mxu0 0.0
      %3652 = vmatprep.subr.mxu0 0.0
      %3653 = vmatpush1.msra.mxu0 0.0
      %3654 = vmatprep.subr.mxu0 0.0
      %3655 = vmatpush1.msra.mxu0 0.0
      %3656 = vmatprep.subr.mxu0 0.0
      %3657 = vmatpush1.msra.mxu0 0.0
      %3658 = vmatprep.subr.mxu0 0.0
      %3659 = vmatpush1.msra.mxu0 0.0
      %3660 = vmatprep.subr.mxu0 0.0
      %3661 = vmatpush1.msra.mxu0 0.0
      %3662 = vmatprep.subr.mxu0 0.0
      %3663 = vmatpush1.msra.mxu0 0.0
      %3664 = vmatprep.subr.mxu0 0.0
      %3665 = vmatpush1.msra.mxu0 0.0
      %3666 = vmatprep.subr.mxu0 0.0
      %3667 = vmatpush1.msra.mxu0 0.0
      %3668 = vmatprep.subr.mxu0 0.0
      %3669 = vmatpush1.msra.mxu0 0.0
      %3670 = vmatprep.subr.mxu0 0.0
      %3671 = vmatpush1.msra.mxu0 0.0
      %3672 = vmatprep.subr.mxu0 0.0
      %3673 = vmatpush1.msra.mxu0 0.0
      %3674 = vmatprep.subr.mxu0 0.0
      %3675 = vmatpush1.msra.mxu0 0.0
      %3676 = vmatprep.subr.mxu0 0.0
      %3677 = vmatpush1.msra.mxu0 0.0
      %3678 = vmatprep.subr.mxu0 0.0
      %3679 = vmatpush1.msra.mxu0 0.0
      %3680 = vmatprep.subr.mxu0 0.0
      %3681 = vmatpush1.msra.mxu0 0.0
      %3682 = vmatprep.subr.mxu0 0.0
      %3683 = vmatpush1.msra.mxu0 0.0
      %3684 = vmatprep.subr.mxu0 0.0
      %3685 = vmatpush1.msra.mxu0 0.0
      %3686 = vmatprep.subr.mxu0 0.0
      %3687 = vmatpush1.msra.mxu0 0.0
      %3688 = vmatprep.subr.mxu0 0.0
      %3689 = vmatpush1.msra.mxu0 0.0
      %3690 = vmatprep.subr.mxu0 0.0
      %3691 = vmatpush1.msra.mxu0 0.0
      %3692 = vmatprep.subr.mxu0 0.0
      %3693 = vmatpush1.msra.mxu0 0.0
      %3694 = vmatprep.subr.mxu0 0.0
      %3695 = vmatpush1.msra.mxu0 0.0
      %3696 = vmatprep.subr.mxu0 0.0
      %3697 = vmatpush1.msra.mxu0 0.0
      %3698 = vmatprep.subr.mxu0 0.0
      %3699 = vmatpush1.msra.mxu0 0.0
      %3700 = vmatprep.subr.mxu0 0.0
      %3701 = vmatpush1.msra.mxu0 0.0
      %3702 = vmatprep.mubr.f32.mxu0 0.0
      %3703 = vmatmul.mubr.f32.gmra.mrb[0].mxu0 %v3162
      %v3704 = vpop.f32.mrb[0].mxu0
      %v3705 = vadd.f32 0.0, %v3704
      %v3706 = vpop.f32.mrb[0].mxu0
      %v3707 = vadd.f32 0.0, %v3706
      %3708 = vdwg.mxu0
      %3709 = vmatprep.subr.mxu0 %v3112
      %3710 = vmatpush1.msra.mxu0 %v3111
      %3711 = vmatprep.subr.mxu0 %v3128
      %3712 = vmatpush1.msra.mxu0 %v3127
      %3713 = vmatprep.subr.mxu0 %v3144
      %3714 = vmatpush1.msra.mxu0 %v3143
      %3715 = vmatprep.subr.mxu0 %v3210
      %3716 = vmatpush1.msra.mxu0 %v3207
      %3717 = vmatprep.subr.mxu0 0.0
      %3718 = vmatpush1.msra.mxu0 0.0
      %3719 = vmatprep.subr.mxu0 0.0
      %3720 = vmatpush1.msra.mxu0 0.0
      %3721 = vmatprep.subr.mxu0 0.0
      %3722 = vmatpush1.msra.mxu0 0.0
      %3723 = vmatprep.subr.mxu0 0.0
      %3724 = vmatpush1.msra.mxu0 0.0
      %3725 = vmatprep.subr.mxu0 0.0
      %3726 = vmatpush1.msra.mxu0 0.0
      %3727 = vmatprep.subr.mxu0 0.0
      %3728 = vmatpush1.msra.mxu0 0.0
      %3729 = vmatprep.subr.mxu0 0.0
      %3730 = vmatpush1.msra.mxu0 0.0
      %3731 = vmatprep.subr.mxu0 0.0
      %3732 = vmatpush1.msra.mxu0 0.0
      %3733 = vmatprep.subr.mxu0 0.0
      %3734 = vmatpush1.msra.mxu0 0.0
      %3735 = vmatprep.subr.mxu0 0.0
      %3736 = vmatpush1.msra.mxu0 0.0
      %3737 = vmatprep.subr.mxu0 0.0
      %3738 = vmatpush1.msra.mxu0 0.0
      %3739 = vmatprep.subr.mxu0 0.0
      %3740 = vmatpush1.msra.mxu0 0.0
      %3741 = vmatprep.subr.mxu0 0.0
      %3742 = vmatpush1.msra.mxu0 0.0
      %3743 = vmatprep.subr.mxu0 0.0
      %3744 = vmatpush1.msra.mxu0 0.0
      %3745 = vmatprep.subr.mxu0 0.0
      %3746 = vmatpush1.msra.mxu0 0.0
      %3747 = vmatprep.subr.mxu0 0.0
      %3748 = vmatpush1.msra.mxu0 0.0
      %3749 = vmatprep.subr.mxu0 0.0
      %3750 = vmatpush1.msra.mxu0 0.0
      %3751 = vmatprep.subr.mxu0 0.0
      %3752 = vmatpush1.msra.mxu0 0.0
      %3753 = vmatprep.subr.mxu0 0.0
      %3754 = vmatpush1.msra.mxu0 0.0
      %3755 = vmatprep.subr.mxu0 0.0
      %3756 = vmatpush1.msra.mxu0 0.0
      %3757 = vmatprep.subr.mxu0 0.0
      %3758 = vmatpush1.msra.mxu0 0.0
      %3759 = vmatprep.subr.mxu0 0.0
      %3760 = vmatpush1.msra.mxu0 0.0
      %3761 = vmatprep.subr.mxu0 0.0
      %3762 = vmatpush1.msra.mxu0 0.0
      %3763 = vmatprep.subr.mxu0 0.0
      %3764 = vmatpush1.msra.mxu0 0.0
      %3765 = vmatprep.subr.mxu0 0.0
      %3766 = vmatpush1.msra.mxu0 0.0
      %3767 = vmatprep.subr.mxu0 0.0
      %3768 = vmatpush1.msra.mxu0 0.0
      %3769 = vmatprep.subr.mxu0 0.0
      %3770 = vmatpush1.msra.mxu0 0.0
      %3771 = vmatprep.subr.mxu0 0.0
      %3772 = vmatpush1.msra.mxu0 0.0
      %3773 = vmatprep.mubr.f32.mxu0 0.0
      %3774 = vmatmul.mubr.f32.gmra.mrb[0].mxu0 %v3162
      %v3775 = vpop.f32.mrb[0].mxu0
      %v3776 = vadd.f32 0.0, %v3775
      %v3777 = vpop.f32.mrb[0].mxu0
      %v3778 = vadd.f32 0.0, %v3777
      %3779 = vdwg.mxu0
      %v3780 = vadd.f32 %v3079, %v3279
      %v3781 = vadd.f32 %v3080, %v3281
      %v3782 = vadd.f32 %v3081, %v3350
      %v3783 = vadd.f32 %v3082, %v3352
      %v3784 = vadd.f32 %v3083, %v3421
      %v3785 = vadd.f32 %v3084, %v3423
      %v3786 = vadd.f32 %v3085, %v3492
      %v3787 = vadd.f32 %v3086, %v3494
      %v3788 = vadd.f32 %v3087, %v3563
      %v3789 = vadd.f32 %v3088, %v3565
      %v3790 = vadd.f32 %v3089, %v3634
      %v3791 = vadd.f32 %v3090, %v3636
      %v3792 = vadd.f32 %v3091, %v3705
      %v3793 = vadd.f32 %v3092, %v3707
      %v3794 = vadd.f32 %v3093, %v3776
      %v3795 = vadd.f32 %v3094, %v3778
      %s3796 = scalar_lea.vmem %s1, 32
      %v3797 = vld [vmem:[%s3796] sm:$0xff]
      %v3798 = vld [vmem:[#allocation2 + $0x20] sm:$0xff]
      %v3799 = vld [vmem:[#allocation2 + $0x28] sm:$0xff]
      %v3800 = vld [vmem:[#allocation2 + $0x30] sm:$0xff]
      %v3801 = vld [vmem:[#allocation2 + $0x38] sm:$0xff]
      %v3802 = vld [vmem:[#allocation2 + $0x40] sm:$0xff]
      %v3803 = vld [vmem:[#allocation2 + $0x48] sm:$0xff]
      %v3804 = vld [vmem:[#allocation2 + $0x50] sm:$0xff]
      %v3805 = vld [vmem:[#allocation2 + $0x58] sm:$0xff]
      %v3806 = vld [vmem:[#allocation2 + $0x60] sm:$0xff]
      %v3807 = vld [vmem:[#allocation2 + $0x68] sm:$0xff]
      %v3808 = vld [vmem:[#allocation2 + $0x70] sm:$0xff]
      %v3809 = vld [vmem:[#allocation2 + $0x78] sm:$0xff]
      %v3810 = vld [vmem:[#allocation2 + $0x80] sm:$0xff]
      %v3811 = vld [vmem:[#allocation2 + $0x88] sm:$0xff]
      %v3812 = vld [vmem:[#allocation2 + $0x90] sm:$0xff]
      %v3813 = vld [vmem:[#allocation2 + $0x98] sm:$0xff]
      %v3814 = vld [vmem:[#allocation2 + $0xd0] sm:$0xff]
      %v3815 = vld [vmem:[#allocation2 + $0xd8] sm:$0xff]
      %v3816 = vld [vmem:[#allocation2 + $0xe0] sm:$0xff]
      %v3817 = vld [vmem:[#allocation2 + $0xe8] sm:$0xff]
      %v3818 = vld [vmem:[#allocation2 + $0xf0] sm:$0xff]
      %v3819 = vld [vmem:[#allocation2 + $0xf8] sm:$0xff]
      %v3820 = vld [vmem:[#allocation2 + $0x100] sm:$0xff]
      %v3821 = vld [vmem:[#allocation2 + $0x108] sm:$0xff]
      %v3822 = vld [vmem:[#allocation2 + $0x110] sm:$0xff]
      %v3823 = vld [vmem:[#allocation2 + $0x118] sm:$0xff]
      %v3824 = vld [vmem:[#allocation2 + $0x120] sm:$0xff]
      %v3825 = vld [vmem:[#allocation2 + $0x128] sm:$0xff]
      %v3826 = vld [vmem:[#allocation2 + $0x130] sm:$0xff]
      %v3827 = vld [vmem:[#allocation2 + $0x138] sm:$0xff]
      %v3828 = vld [vmem:[#allocation2 + $0x140] sm:$0xff]
      %v3829 = vld [vmem:[#allocation2 + $0x148] sm:$0xff]
      %v3830 = vld [vmem:[#allocation2 + $0x180] sm:$0xff]
      %v3831 = vld [vmem:[#allocation2 + $0x188] sm:$0xff]
      %v3832 = vld [vmem:[#allocation2 + $0x190] sm:$0xff]
      %v3833 = vld [vmem:[#allocation2 + $0x198] sm:$0xff]
      %v3834 = vld [vmem:[#allocation2 + $0x1a0] sm:$0xff]
      %v3835 = vld [vmem:[#allocation2 + $0x1a8] sm:$0xff]
      %v3836 = vld [vmem:[#allocation2 + $0x1b0] sm:$0xff]
      %v3837 = vld [vmem:[#allocation2 + $0x1b8] sm:$0xff]
      %v3838 = vld [vmem:[#allocation2 + $0x1c0] sm:$0xff]
      %v3839 = vld [vmem:[#allocation2 + $0x1c8] sm:$0xff]
      %v3840 = vld [vmem:[#allocation2 + $0x1d0] sm:$0xff]
      %v3841 = vld [vmem:[#allocation2 + $0x1d8] sm:$0xff]
      %v3842 = vld [vmem:[#allocation2 + $0x1e0] sm:$0xff]
      %v3843 = vld [vmem:[#allocation2 + $0x1e8] sm:$0xff]
      %v3844 = vld [vmem:[#allocation2 + $0x1f0] sm:$0xff]
      %v3845 = vld [vmem:[#allocation2 + $0x1f8] sm:$0xff]
      %v3846 = vld [vmem:[#allocation2 + $0x230] sm:$0xf]
      %v3847 = vld [vmem:[#allocation2 + $0x238] sm:$0xf]
      %v3848 = vld [vmem:[#allocation2 + $0x240] sm:$0xf]
      %v3849 = vld [vmem:[#allocation2 + $0x248] sm:$0xf]
      %v3850 = vld [vmem:[#allocation2 + $0x250] sm:$0xf]
      %v3851 = vld [vmem:[#allocation2 + $0x258] sm:$0xf]
      %v3852 = vld [vmem:[#allocation2 + $0x260] sm:$0xf]
      %v3853 = vld [vmem:[#allocation2 + $0x268] sm:$0xf]
      %v3854 = vld [vmem:[#allocation2 + $0x270] sm:$0xf]
      %v3855 = vld [vmem:[#allocation2 + $0x278] sm:$0xf]
      %v3856 = vld [vmem:[#allocation2 + $0x280] sm:$0xf]
      %v3857 = vld [vmem:[#allocation2 + $0x288] sm:$0xf]
      %v3858 = vld [vmem:[#allocation2 + $0x290] sm:$0xf]
      %v3859 = vld [vmem:[#allocation2 + $0x298] sm:$0xf]
      %v3860 = vld [vmem:[#allocation2 + $0x2a0] sm:$0xf]
      %v3861 = vld [vmem:[#allocation2 + $0x2a8] sm:$0xf]
      %v3863 = vsel %vm1199, %v3797, 0
      %v3866 = vsel %vm1203, %v3846, 0
      %v3869 = vsel %vm1203, %v3847, 0
      %v3872 = vsel %vm1203, %v3848, 0
      %v3875 = vsel %vm1203, %v3849, 0
      %v3878 = vsel %vm1203, %v3850, 0
      %v3881 = vsel %vm1203, %v3851, 0
      %v3884 = vsel %vm1203, %v3852, 0
      %v3887 = vsel %vm1203, %v3853, 0
      %v3890 = vsel %vm1203, %v3854, 0
      %v3893 = vsel %vm1203, %v3855, 0
      %v3896 = vsel %vm1203, %v3856, 0
      %v3899 = vsel %vm1203, %v3857, 0
      %v3902 = vsel %vm1203, %v3858, 0
      %v3905 = vsel %vm1203, %v3859, 0
      %v3908 = vsel %vm1203, %v3860, 0
      %v3911 = vsel %vm1203, %v3861, 0
      %3913 = vmatprep.subr.mxu0 %v3799
      %3914 = vmatpush1.msra.mxu0 %v3798
      %3915 = vmatprep.subr.mxu0 %v3815
      %3916 = vmatpush1.msra.mxu0 %v3814
      %3917 = vmatprep.subr.mxu0 %v3831
      %3918 = vmatpush1.msra.mxu0 %v3830
      %3919 = vmatprep.subr.mxu0 %v3869
      %3920 = vmatpush1.msra.mxu0 %v3866
      %3921 = vmatprep.subr.mxu0 0.0
      %3922 = vmatpush1.msra.mxu0 0.0
      %3923 = vmatprep.subr.mxu0 0.0
      %3924 = vmatpush1.msra.mxu0 0.0
      %3925 = vmatprep.subr.mxu0 0.0
      %3926 = vmatpush1.msra.mxu0 0.0
      %3927 = vmatprep.subr.mxu0 0.0
      %3928 = vmatpush1.msra.mxu0 0.0
      %3929 = vmatprep.subr.mxu0 0.0
      %3930 = vmatpush1.msra.mxu0 0.0
      %3931 = vmatprep.subr.mxu0 0.0
      %3932 = vmatpush1.msra.mxu0 0.0
      %3933 = vmatprep.subr.mxu0 0.0
      %3934 = vmatpush1.msra.mxu0 0.0
      %3935 = vmatprep.subr.mxu0 0.0
      %3936 = vmatpush1.msra.mxu0 0.0
      %3937 = vmatprep.subr.mxu0 0.0
      %3938 = vmatpush1.msra.mxu0 0.0
      %3939 = vmatprep.subr.mxu0 0.0
      %3940 = vmatpush1.msra.mxu0 0.0
      %3941 = vmatprep.subr.mxu0 0.0
      %3942 = vmatpush1.msra.mxu0 0.0
      %3943 = vmatprep.subr.mxu0 0.0
      %3944 = vmatpush1.msra.mxu0 0.0
      %3945 = vmatprep.subr.mxu0 0.0
      %3946 = vmatpush1.msra.mxu0 0.0
      %3947 = vmatprep.subr.mxu0 0.0
      %3948 = vmatpush1.msra.mxu0 0.0
      %3949 = vmatprep.subr.mxu0 0.0
      %3950 = vmatpush1.msra.mxu0 0.0
      %3951 = vmatprep.subr.mxu0 0.0
      %3952 = vmatpush1.msra.mxu0 0.0
      %3953 = vmatprep.subr.mxu0 0.0
      %3954 = vmatpush1.msra.mxu0 0.0
      %3955 = vmatprep.subr.mxu0 0.0
      %3956 = vmatpush1.msra.mxu0 0.0
      %3957 = vmatprep.subr.mxu0 0.0
      %3958 = vmatpush1.msra.mxu0 0.0
      %3959 = vmatprep.subr.mxu0 0.0
      %3960 = vmatpush1.msra.mxu0 0.0
      %3961 = vmatprep.subr.mxu0 0.0
      %3962 = vmatpush1.msra.mxu0 0.0
      %3963 = vmatprep.subr.mxu0 0.0
      %3964 = vmatpush1.msra.mxu0 0.0
      %3965 = vmatprep.subr.mxu0 0.0
      %3966 = vmatpush1.msra.mxu0 0.0
      %3967 = vmatprep.subr.mxu0 0.0
      %3968 = vmatpush1.msra.mxu0 0.0
      %3969 = vmatprep.subr.mxu0 0.0
      %3970 = vmatpush1.msra.mxu0 0.0
      %3971 = vmatprep.subr.mxu0 0.0
      %3972 = vmatpush1.msra.mxu0 0.0
      %3973 = vmatprep.subr.mxu0 0.0
      %3974 = vmatpush1.msra.mxu0 0.0
      %3975 = vmatprep.subr.mxu0 0.0
      %3976 = vmatpush1.msra.mxu0 0.0
      %3977 = vmatprep.mubr.f32.mxu0 0.0
      %3978 = vmatmul.mubr.f32.gmra.mrb[0].mxu0 %v3863
      %v3979 = vpop.f32.mrb[0].mxu0
      %v3980 = vadd.f32 0.0, %v3979
      %v3981 = vpop.f32.mrb[0].mxu0
      %v3982 = vadd.f32 0.0, %v3981
      %3983 = vdwg.mxu0
      %3984 = vmatprep.subr.mxu0 %v3801
      %3985 = vmatpush1.msra.mxu0 %v3800
      %3986 = vmatprep.subr.mxu0 %v3817
      %3987 = vmatpush1.msra.mxu0 %v3816
      %3988 = vmatprep.subr.mxu0 %v3833
      %3989 = vmatpush1.msra.mxu0 %v3832
      %3990 = vmatprep.subr.mxu0 %v3875
      %3991 = vmatpush1.msra.mxu0 %v3872
      %3992 = vmatprep.subr.mxu0 0.0
      %3993 = vmatpush1.msra.mxu0 0.0
      %3994 = vmatprep.subr.mxu0 0.0
      %3995 = vmatpush1.msra.mxu0 0.0
      %3996 = vmatprep.subr.mxu0 0.0
      %3997 = vmatpush1.msra.mxu0 0.0
      %3998 = vmatprep.subr.mxu0 0.0
      %3999 = vmatpush1.msra.mxu0 0.0
      %4000 = vmatprep.subr.mxu0 0.0
      %4001 = vmatpush1.msra.mxu0 0.0
      %4002 = vmatprep.subr.mxu0 0.0
      %4003 = vmatpush1.msra.mxu0 0.0
      %4004 = vmatprep.subr.mxu0 0.0
      %4005 = vmatpush1.msra.mxu0 0.0
      %4006 = vmatprep.subr.mxu0 0.0
      %4007 = vmatpush1.msra.mxu0 0.0
      %4008 = vmatprep.subr.mxu0 0.0
      %4009 = vmatpush1.msra.mxu0 0.0
      %4010 = vmatprep.subr.mxu0 0.0
      %4011 = vmatpush1.msra.mxu0 0.0
      %4012 = vmatprep.subr.mxu0 0.0
      %4013 = vmatpush1.msra.mxu0 0.0
      %4014 = vmatprep.subr.mxu0 0.0
      %4015 = vmatpush1.msra.mxu0 0.0
      %4016 = vmatprep.subr.mxu0 0.0
      %4017 = vmatpush1.msra.mxu0 0.0
      %4018 = vmatprep.subr.mxu0 0.0
      %4019 = vmatpush1.msra.mxu0 0.0
      %4020 = vmatprep.subr.mxu0 0.0
      %4021 = vmatpush1.msra.mxu0 0.0
      %4022 = vmatprep.subr.mxu0 0.0
      %4023 = vmatpush1.msra.mxu0 0.0
      %4024 = vmatprep.subr.mxu0 0.0
      %4025 = vmatpush1.msra.mxu0 0.0
      %4026 = vmatprep.subr.mxu0 0.0
      %4027 = vmatpush1.msra.mxu0 0.0
      %4028 = vmatprep.subr.mxu0 0.0
      %4029 = vmatpush1.msra.mxu0 0.0
      %4030 = vmatprep.subr.mxu0 0.0
      %4031 = vmatpush1.msra.mxu0 0.0
      %4032 = vmatprep.subr.mxu0 0.0
      %4033 = vmatpush1.msra.mxu0 0.0
      %4034 = vmatprep.subr.mxu0 0.0
      %4035 = vmatpush1.msra.mxu0 0.0
      %4036 = vmatprep.subr.mxu0 0.0
      %4037 = vmatpush1.msra.mxu0 0.0
      %4038 = vmatprep.subr.mxu0 0.0
      %4039 = vmatpush1.msra.mxu0 0.0
      %4040 = vmatprep.subr.mxu0 0.0
      %4041 = vmatpush1.msra.mxu0 0.0
      %4042 = vmatprep.subr.mxu0 0.0
      %4043 = vmatpush1.msra.mxu0 0.0
      %4044 = vmatprep.subr.mxu0 0.0
      %4045 = vmatpush1.msra.mxu0 0.0
      %4046 = vmatprep.subr.mxu0 0.0
      %4047 = vmatpush1.msra.mxu0 0.0
      %4048 = vmatprep.mubr.f32.mxu0 0.0
      %4049 = vmatmul.mubr.f32.gmra.mrb[0].mxu0 %v3863
      %v4050 = vpop.f32.mrb[0].mxu0
      %v4051 = vadd.f32 0.0, %v4050
      %v4052 = vpop.f32.mrb[0].mxu0
      %v4053 = vadd.f32 0.0, %v4052
      %4054 = vdwg.mxu0
      %4055 = vmatprep.subr.mxu0 %v3803
      %4056 = vmatpush1.msra.mxu0 %v3802
      %4057 = vmatprep.subr.mxu0 %v3819
      %4058 = vmatpush1.msra.mxu0 %v3818
      %4059 = vmatprep.subr.mxu0 %v3835
      %4060 = vmatpush1.msra.mxu0 %v3834
      %4061 = vmatprep.subr.mxu0 %v3881
      %4062 = vmatpush1.msra.mxu0 %v3878
      %4063 = vmatprep.subr.mxu0 0.0
      %4064 = vmatpush1.msra.mxu0 0.0
      %4065 = vmatprep.subr.mxu0 0.0
      %4066 = vmatpush1.msra.mxu0 0.0
      %4067 = vmatprep.subr.mxu0 0.0
      %4068 = vmatpush1.msra.mxu0 0.0
      %4069 = vmatprep.subr.mxu0 0.0
      %4070 = vmatpush1.msra.mxu0 0.0
      %4071 = vmatprep.subr.mxu0 0.0
      %4072 = vmatpush1.msra.mxu0 0.0
      %4073 = vmatprep.subr.mxu0 0.0
      %4074 = vmatpush1.msra.mxu0 0.0
      %4075 = vmatprep.subr.mxu0 0.0
      %4076 = vmatpush1.msra.mxu0 0.0
      %4077 = vmatprep.subr.mxu0 0.0
      %4078 = vmatpush1.msra.mxu0 0.0
      %4079 = vmatprep.subr.mxu0 0.0
      %4080 = vmatpush1.msra.mxu0 0.0
      %4081 = vmatprep.subr.mxu0 0.0
      %4082 = vmatpush1.msra.mxu0 0.0
      %4083 = vmatprep.subr.mxu0 0.0
      %4084 = vmatpush1.msra.mxu0 0.0
      %4085 = vmatprep.subr.mxu0 0.0
      %4086 = vmatpush1.msra.mxu0 0.0
      %4087 = vmatprep.subr.mxu0 0.0
      %4088 = vmatpush1.msra.mxu0 0.0
      %4089 = vmatprep.subr.mxu0 0.0
      %4090 = vmatpush1.msra.mxu0 0.0
      %4091 = vmatprep.subr.mxu0 0.0
      %4092 = vmatpush1.msra.mxu0 0.0
      %4093 = vmatprep.subr.mxu0 0.0
      %4094 = vmatpush1.msra.mxu0 0.0
      %4095 = vmatprep.subr.mxu0 0.0
      %4096 = vmatpush1.msra.mxu0 0.0
      %4097 = vmatprep.subr.mxu0 0.0
      %4098 = vmatpush1.msra.mxu0 0.0
      %4099 = vmatprep.subr.mxu0 0.0
      %4100 = vmatpush1.msra.mxu0 0.0
      %4101 = vmatprep.subr.mxu0 0.0
      %4102 = vmatpush1.msra.mxu0 0.0
      %4103 = vmatprep.subr.mxu0 0.0
      %4104 = vmatpush1.msra.mxu0 0.0
      %4105 = vmatprep.subr.mxu0 0.0
      %4106 = vmatpush1.msra.mxu0 0.0
      %4107 = vmatprep.subr.mxu0 0.0
      %4108 = vmatpush1.msra.mxu0 0.0
      %4109 = vmatprep.subr.mxu0 0.0
      %4110 = vmatpush1.msra.mxu0 0.0
      %4111 = vmatprep.subr.mxu0 0.0
      %4112 = vmatpush1.msra.mxu0 0.0
      %4113 = vmatprep.subr.mxu0 0.0
      %4114 = vmatpush1.msra.mxu0 0.0
      %4115 = vmatprep.subr.mxu0 0.0
      %4116 = vmatpush1.msra.mxu0 0.0
      %4117 = vmatprep.subr.mxu0 0.0
      %4118 = vmatpush1.msra.mxu0 0.0
      %4119 = vmatprep.mubr.f32.mxu0 0.0
      %4120 = vmatmul.mubr.f32.gmra.mrb[0].mxu0 %v3863
      %v4121 = vpop.f32.mrb[0].mxu0
      %v4122 = vadd.f32 0.0, %v4121
      %v4123 = vpop.f32.mrb[0].mxu0
      %v4124 = vadd.f32 0.0, %v4123
      %4125 = vdwg.mxu0
      %4126 = vmatprep.subr.mxu0 %v3805
      %4127 = vmatpush1.msra.mxu0 %v3804
      %4128 = vmatprep.subr.mxu0 %v3821
      %4129 = vmatpush1.msra.mxu0 %v3820
      %4130 = vmatprep.subr.mxu0 %v3837
      %4131 = vmatpush1.msra.mxu0 %v3836
      %4132 = vmatprep.subr.mxu0 %v3887
      %4133 = vmatpush1.msra.mxu0 %v3884
      %4134 = vmatprep.subr.mxu0 0.0
      %4135 = vmatpush1.msra.mxu0 0.0
      %4136 = vmatprep.subr.mxu0 0.0
      %4137 = vmatpush1.msra.mxu0 0.0
      %4138 = vmatprep.subr.mxu0 0.0
      %4139 = vmatpush1.msra.mxu0 0.0
      %4140 = vmatprep.subr.mxu0 0.0
      %4141 = vmatpush1.msra.mxu0 0.0
      %4142 = vmatprep.subr.mxu0 0.0
      %4143 = vmatpush1.msra.mxu0 0.0
      %4144 = vmatprep.subr.mxu0 0.0
      %4145 = vmatpush1.msra.mxu0 0.0
      %4146 = vmatprep.subr.mxu0 0.0
      %4147 = vmatpush1.msra.mxu0 0.0
      %4148 = vmatprep.subr.mxu0 0.0
      %4149 = vmatpush1.msra.mxu0 0.0
      %4150 = vmatprep.subr.mxu0 0.0
      %4151 = vmatpush1.msra.mxu0 0.0
      %4152 = vmatprep.subr.mxu0 0.0
      %4153 = vmatpush1.msra.mxu0 0.0
      %4154 = vmatprep.subr.mxu0 0.0
      %4155 = vmatpush1.msra.mxu0 0.0
      %4156 = vmatprep.subr.mxu0 0.0
      %4157 = vmatpush1.msra.mxu0 0.0
      %4158 = vmatprep.subr.mxu0 0.0
      %4159 = vmatpush1.msra.mxu0 0.0
      %4160 = vmatprep.subr.mxu0 0.0
      %4161 = vmatpush1.msra.mxu0 0.0
      %4162 = vmatprep.subr.mxu0 0.0
      %4163 = vmatpush1.msra.mxu0 0.0
      %4164 = vmatprep.subr.mxu0 0.0
      %4165 = vmatpush1.msra.mxu0 0.0
      %4166 = vmatprep.subr.mxu0 0.0
      %4167 = vmatpush1.msra.mxu0 0.0
      %4168 = vmatprep.subr.mxu0 0.0
      %4169 = vmatpush1.msra.mxu0 0.0
      %4170 = vmatprep.subr.mxu0 0.0
      %4171 = vmatpush1.msra.mxu0 0.0
      %4172 = vmatprep.subr.mxu0 0.0
      %4173 = vmatpush1.msra.mxu0 0.0
      %4174 = vmatprep.subr.mxu0 0.0
      %4175 = vmatpush1.msra.mxu0 0.0
      %4176 = vmatprep.subr.mxu0 0.0
      %4177 = vmatpush1.msra.mxu0 0.0
      %4178 = vmatprep.subr.mxu0 0.0
      %4179 = vmatpush1.msra.mxu0 0.0
      %4180 = vmatprep.subr.mxu0 0.0
      %4181 = vmatpush1.msra.mxu0 0.0
      %4182 = vmatprep.subr.mxu0 0.0
      %4183 = vmatpush1.msra.mxu0 0.0
      %4184 = vmatprep.subr.mxu0 0.0
      %4185 = vmatpush1.msra.mxu0 0.0
      %4186 = vmatprep.subr.mxu0 0.0
      %4187 = vmatpush1.msra.mxu0 0.0
      %4188 = vmatprep.subr.mxu0 0.0
      %4189 = vmatpush1.msra.mxu0 0.0
      %4190 = vmatprep.mubr.f32.mxu0 0.0
      %4191 = vmatmul.mubr.f32.gmra.mrb[0].mxu0 %v3863
      %v4192 = vpop.f32.mrb[0].mxu0
      %v4193 = vadd.f32 0.0, %v4192
      %v4194 = vpop.f32.mrb[0].mxu0
      %v4195 = vadd.f32 0.0, %v4194
      %4196 = vdwg.mxu0
      %4197 = vmatprep.subr.mxu0 %v3807
      %4198 = vmatpush1.msra.mxu0 %v3806
      %4199 = vmatprep.subr.mxu0 %v3823
      %4200 = vmatpush1.msra.mxu0 %v3822
      %4201 = vmatprep.subr.mxu0 %v3839
      %4202 = vmatpush1.msra.mxu0 %v3838
      %4203 = vmatprep.subr.mxu0 %v3893
      %4204 = vmatpush1.msra.mxu0 %v3890
      %4205 = vmatprep.subr.mxu0 0.0
      %4206 = vmatpush1.msra.mxu0 0.0
      %4207 = vmatprep.subr.mxu0 0.0
      %4208 = vmatpush1.msra.mxu0 0.0
      %4209 = vmatprep.subr.mxu0 0.0
      %4210 = vmatpush1.msra.mxu0 0.0
      %4211 = vmatprep.subr.mxu0 0.0
      %4212 = vmatpush1.msra.mxu0 0.0
      %4213 = vmatprep.subr.mxu0 0.0
      %4214 = vmatpush1.msra.mxu0 0.0
      %4215 = vmatprep.subr.mxu0 0.0
      %4216 = vmatpush1.msra.mxu0 0.0
      %4217 = vmatprep.subr.mxu0 0.0
      %4218 = vmatpush1.msra.mxu0 0.0
      %4219 = vmatprep.subr.mxu0 0.0
      %4220 = vmatpush1.msra.mxu0 0.0
      %4221 = vmatprep.subr.mxu0 0.0
      %4222 = vmatpush1.msra.mxu0 0.0
      %4223 = vmatprep.subr.mxu0 0.0
      %4224 = vmatpush1.msra.mxu0 0.0
      %4225 = vmatprep.subr.mxu0 0.0
      %4226 = vmatpush1.msra.mxu0 0.0
      %4227 = vmatprep.subr.mxu0 0.0
      %4228 = vmatpush1.msra.mxu0 0.0
      %4229 = vmatprep.subr.mxu0 0.0
      %4230 = vmatpush1.msra.mxu0 0.0
      %4231 = vmatprep.subr.mxu0 0.0
      %4232 = vmatpush1.msra.mxu0 0.0
      %4233 = vmatprep.subr.mxu0 0.0
      %4234 = vmatpush1.msra.mxu0 0.0
      %4235 = vmatprep.subr.mxu0 0.0
      %4236 = vmatpush1.msra.mxu0 0.0
      %4237 = vmatprep.subr.mxu0 0.0
      %4238 = vmatpush1.msra.mxu0 0.0
      %4239 = vmatprep.subr.mxu0 0.0
      %4240 = vmatpush1.msra.mxu0 0.0
      %4241 = vmatprep.subr.mxu0 0.0
      %4242 = vmatpush1.msra.mxu0 0.0
      %4243 = vmatprep.subr.mxu0 0.0
      %4244 = vmatpush1.msra.mxu0 0.0
      %4245 = vmatprep.subr.mxu0 0.0
      %4246 = vmatpush1.msra.mxu0 0.0
      %4247 = vmatprep.subr.mxu0 0.0
      %4248 = vmatpush1.msra.mxu0 0.0
      %4249 = vmatprep.subr.mxu0 0.0
      %4250 = vmatpush1.msra.mxu0 0.0
      %4251 = vmatprep.subr.mxu0 0.0
      %4252 = vmatpush1.msra.mxu0 0.0
      %4253 = vmatprep.subr.mxu0 0.0
      %4254 = vmatpush1.msra.mxu0 0.0
      %4255 = vmatprep.subr.mxu0 0.0
      %4256 = vmatpush1.msra.mxu0 0.0
      %4257 = vmatprep.subr.mxu0 0.0
      %4258 = vmatpush1.msra.mxu0 0.0
      %4259 = vmatprep.subr.mxu0 0.0
      %4260 = vmatpush1.msra.mxu0 0.0
      %4261 = vmatprep.mubr.f32.mxu0 0.0
      %4262 = vmatmul.mubr.f32.gmra.mrb[0].mxu0 %v3863
      %v4263 = vpop.f32.mrb[0].mxu0
      %v4264 = vadd.f32 0.0, %v4263
      %v4265 = vpop.f32.mrb[0].mxu0
      %v4266 = vadd.f32 0.0, %v4265
      %4267 = vdwg.mxu0
      %4268 = vmatprep.subr.mxu0 %v3809
      %4269 = vmatpush1.msra.mxu0 %v3808
      %4270 = vmatprep.subr.mxu0 %v3825
      %4271 = vmatpush1.msra.mxu0 %v3824
      %4272 = vmatprep.subr.mxu0 %v3841
      %4273 = vmatpush1.msra.mxu0 %v3840
      %4274 = vmatprep.subr.mxu0 %v3899
      %4275 = vmatpush1.msra.mxu0 %v3896
      %4276 = vmatprep.subr.mxu0 0.0
      %4277 = vmatpush1.msra.mxu0 0.0
      %4278 = vmatprep.subr.mxu0 0.0
      %4279 = vmatpush1.msra.mxu0 0.0
      %4280 = vmatprep.subr.mxu0 0.0
      %4281 = vmatpush1.msra.mxu0 0.0
      %4282 = vmatprep.subr.mxu0 0.0
      %4283 = vmatpush1.msra.mxu0 0.0
      %4284 = vmatprep.subr.mxu0 0.0
      %4285 = vmatpush1.msra.mxu0 0.0
      %4286 = vmatprep.subr.mxu0 0.0
      %4287 = vmatpush1.msra.mxu0 0.0
      %4288 = vmatprep.subr.mxu0 0.0
      %4289 = vmatpush1.msra.mxu0 0.0
      %4290 = vmatprep.subr.mxu0 0.0
      %4291 = vmatpush1.msra.mxu0 0.0
      %4292 = vmatprep.subr.mxu0 0.0
      %4293 = vmatpush1.msra.mxu0 0.0
      %4294 = vmatprep.subr.mxu0 0.0
      %4295 = vmatpush1.msra.mxu0 0.0
      %4296 = vmatprep.subr.mxu0 0.0
      %4297 = vmatpush1.msra.mxu0 0.0
      %4298 = vmatprep.subr.mxu0 0.0
      %4299 = vmatpush1.msra.mxu0 0.0
      %4300 = vmatprep.subr.mxu0 0.0
      %4301 = vmatpush1.msra.mxu0 0.0
      %4302 = vmatprep.subr.mxu0 0.0
      %4303 = vmatpush1.msra.mxu0 0.0
      %4304 = vmatprep.subr.mxu0 0.0
      %4305 = vmatpush1.msra.mxu0 0.0
      %4306 = vmatprep.subr.mxu0 0.0
      %4307 = vmatpush1.msra.mxu0 0.0
      %4308 = vmatprep.subr.mxu0 0.0
      %4309 = vmatpush1.msra.mxu0 0.0
      %4310 = vmatprep.subr.mxu0 0.0
      %4311 = vmatpush1.msra.mxu0 0.0
      %4312 = vmatprep.subr.mxu0 0.0
      %4313 = vmatpush1.msra.mxu0 0.0
      %4314 = vmatprep.subr.mxu0 0.0
      %4315 = vmatpush1.msra.mxu0 0.0
      %4316 = vmatprep.subr.mxu0 0.0
      %4317 = vmatpush1.msra.mxu0 0.0
      %4318 = vmatprep.subr.mxu0 0.0
      %4319 = vmatpush1.msra.mxu0 0.0
      %4320 = vmatprep.subr.mxu0 0.0
      %4321 = vmatpush1.msra.mxu0 0.0
      %4322 = vmatprep.subr.mxu0 0.0
      %4323 = vmatpush1.msra.mxu0 0.0
      %4324 = vmatprep.subr.mxu0 0.0
      %4325 = vmatpush1.msra.mxu0 0.0
      %4326 = vmatprep.subr.mxu0 0.0
      %4327 = vmatpush1.msra.mxu0 0.0
      %4328 = vmatprep.subr.mxu0 0.0
      %4329 = vmatpush1.msra.mxu0 0.0
      %4330 = vmatprep.subr.mxu0 0.0
      %4331 = vmatpush1.msra.mxu0 0.0
      %4332 = vmatprep.mubr.f32.mxu0 0.0
      %4333 = vmatmul.mubr.f32.gmra.mrb[0].mxu0 %v3863
      %v4334 = vpop.f32.mrb[0].mxu0
      %v4335 = vadd.f32 0.0, %v4334
      %v4336 = vpop.f32.mrb[0].mxu0
      %v4337 = vadd.f32 0.0, %v4336
      %4338 = vdwg.mxu0
      %4339 = vmatprep.subr.mxu0 %v3811
      %4340 = vmatpush1.msra.mxu0 %v3810
      %4341 = vmatprep.subr.mxu0 %v3827
      %4342 = vmatpush1.msra.mxu0 %v3826
      %4343 = vmatprep.subr.mxu0 %v3843
      %4344 = vmatpush1.msra.mxu0 %v3842
      %4345 = vmatprep.subr.mxu0 %v3905
      %4346 = vmatpush1.msra.mxu0 %v3902
      %4347 = vmatprep.subr.mxu0 0.0
      %4348 = vmatpush1.msra.mxu0 0.0
      %4349 = vmatprep.subr.mxu0 0.0
      %4350 = vmatpush1.msra.mxu0 0.0
      %4351 = vmatprep.subr.mxu0 0.0
      %4352 = vmatpush1.msra.mxu0 0.0
      %4353 = vmatprep.subr.mxu0 0.0
      %4354 = vmatpush1.msra.mxu0 0.0
      %4355 = vmatprep.subr.mxu0 0.0
      %4356 = vmatpush1.msra.mxu0 0.0
      %4357 = vmatprep.subr.mxu0 0.0
      %4358 = vmatpush1.msra.mxu0 0.0
      %4359 = vmatprep.subr.mxu0 0.0
      %4360 = vmatpush1.msra.mxu0 0.0
      %4361 = vmatprep.subr.mxu0 0.0
      %4362 = vmatpush1.msra.mxu0 0.0
      %4363 = vmatprep.subr.mxu0 0.0
      %4364 = vmatpush1.msra.mxu0 0.0
      %4365 = vmatprep.subr.mxu0 0.0
      %4366 = vmatpush1.msra.mxu0 0.0
      %4367 = vmatprep.subr.mxu0 0.0
      %4368 = vmatpush1.msra.mxu0 0.0
      %4369 = vmatprep.subr.mxu0 0.0
      %4370 = vmatpush1.msra.mxu0 0.0
      %4371 = vmatprep.subr.mxu0 0.0
      %4372 = vmatpush1.msra.mxu0 0.0
      %4373 = vmatprep.subr.mxu0 0.0
      %4374 = vmatpush1.msra.mxu0 0.0
      %4375 = vmatprep.subr.mxu0 0.0
      %4376 = vmatpush1.msra.mxu0 0.0
      %4377 = vmatprep.subr.mxu0 0.0
      %4378 = vmatpush1.msra.mxu0 0.0
      %4379 = vmatprep.subr.mxu0 0.0
      %4380 = vmatpush1.msra.mxu0 0.0
      %4381 = vmatprep.subr.mxu0 0.0
      %4382 = vmatpush1.msra.mxu0 0.0
      %4383 = vmatprep.subr.mxu0 0.0
      %4384 = vmatpush1.msra.mxu0 0.0
      %4385 = vmatprep.subr.mxu0 0.0
      %4386 = vmatpush1.msra.mxu0 0.0
      %4387 = vmatprep.subr.mxu0 0.0
      %4388 = vmatpush1.msra.mxu0 0.0
      %4389 = vmatprep.subr.mxu0 0.0
      %4390 = vmatpush1.msra.mxu0 0.0
      %4391 = vmatprep.subr.mxu0 0.0
      %4392 = vmatpush1.msra.mxu0 0.0
      %4393 = vmatprep.subr.mxu0 0.0
      %4394 = vmatpush1.msra.mxu0 0.0
      %4395 = vmatprep.subr.mxu0 0.0
      %4396 = vmatpush1.msra.mxu0 0.0
      %4397 = vmatprep.subr.mxu0 0.0
      %4398 = vmatpush1.msra.mxu0 0.0
      %4399 = vmatprep.subr.mxu0 0.0
      %4400 = vmatpush1.msra.mxu0 0.0
      %4401 = vmatprep.subr.mxu0 0.0
      %4402 = vmatpush1.msra.mxu0 0.0
      %4403 = vmatprep.mubr.f32.mxu0 0.0
      %4404 = vmatmul.mubr.f32.gmra.mrb[0].mxu0 %v3863
      %v4405 = vpop.f32.mrb[0].mxu0
      %v4406 = vadd.f32 0.0, %v4405
      %v4407 = vpop.f32.mrb[0].mxu0
      %v4408 = vadd.f32 0.0, %v4407
      %4409 = vdwg.mxu0
      %4410 = vmatprep.subr.mxu0 %v3813
      %4411 = vmatpush1.msra.mxu0 %v3812
      %4412 = vmatprep.subr.mxu0 %v3829
      %4413 = vmatpush1.msra.mxu0 %v3828
      %4414 = vmatprep.subr.mxu0 %v3845
      %4415 = vmatpush1.msra.mxu0 %v3844
      %4416 = vmatprep.subr.mxu0 %v3911
      %4417 = vmatpush1.msra.mxu0 %v3908
      %4418 = vmatprep.subr.mxu0 0.0
      %4419 = vmatpush1.msra.mxu0 0.0
      %4420 = vmatprep.subr.mxu0 0.0
      %4421 = vmatpush1.msra.mxu0 0.0
      %4422 = vmatprep.subr.mxu0 0.0
      %4423 = vmatpush1.msra.mxu0 0.0
      %4424 = vmatprep.subr.mxu0 0.0
      %4425 = vmatpush1.msra.mxu0 0.0
      %4426 = vmatprep.subr.mxu0 0.0
      %4427 = vmatpush1.msra.mxu0 0.0
      %4428 = vmatprep.subr.mxu0 0.0
      %4429 = vmatpush1.msra.mxu0 0.0
      %4430 = vmatprep.subr.mxu0 0.0
      %4431 = vmatpush1.msra.mxu0 0.0
      %4432 = vmatprep.subr.mxu0 0.0
      %4433 = vmatpush1.msra.mxu0 0.0
      %4434 = vmatprep.subr.mxu0 0.0
      %4435 = vmatpush1.msra.mxu0 0.0
      %4436 = vmatprep.subr.mxu0 0.0
      %4437 = vmatpush1.msra.mxu0 0.0
      %4438 = vmatprep.subr.mxu0 0.0
      %4439 = vmatpush1.msra.mxu0 0.0
      %4440 = vmatprep.subr.mxu0 0.0
      %4441 = vmatpush1.msra.mxu0 0.0
      %4442 = vmatprep.subr.mxu0 0.0
      %4443 = vmatpush1.msra.mxu0 0.0
      %4444 = vmatprep.subr.mxu0 0.0
      %4445 = vmatpush1.msra.mxu0 0.0
      %4446 = vmatprep.subr.mxu0 0.0
      %4447 = vmatpush1.msra.mxu0 0.0
      %4448 = vmatprep.subr.mxu0 0.0
      %4449 = vmatpush1.msra.mxu0 0.0
      %4450 = vmatprep.subr.mxu0 0.0
      %4451 = vmatpush1.msra.mxu0 0.0
      %4452 = vmatprep.subr.mxu0 0.0
      %4453 = vmatpush1.msra.mxu0 0.0
      %4454 = vmatprep.subr.mxu0 0.0
      %4455 = vmatpush1.msra.mxu0 0.0
      %4456 = vmatprep.subr.mxu0 0.0
      %4457 = vmatpush1.msra.mxu0 0.0
      %4458 = vmatprep.subr.mxu0 0.0
      %4459 = vmatpush1.msra.mxu0 0.0
      %4460 = vmatprep.subr.mxu0 0.0
      %4461 = vmatpush1.msra.mxu0 0.0
      %4462 = vmatprep.subr.mxu0 0.0
      %4463 = vmatpush1.msra.mxu0 0.0
      %4464 = vmatprep.subr.mxu0 0.0
      %4465 = vmatpush1.msra.mxu0 0.0
      %4466 = vmatprep.subr.mxu0 0.0
      %4467 = vmatpush1.msra.mxu0 0.0
      %4468 = vmatprep.subr.mxu0 0.0
      %4469 = vmatpush1.msra.mxu0 0.0
      %4470 = vmatprep.subr.mxu0 0.0
      %4471 = vmatpush1.msra.mxu0 0.0
      %4472 = vmatprep.subr.mxu0 0.0
      %4473 = vmatpush1.msra.mxu0 0.0
      %4474 = vmatprep.mubr.f32.mxu0 0.0
      %4475 = vmatmul.mubr.f32.gmra.mrb[0].mxu0 %v3863
      %v4476 = vpop.f32.mrb[0].mxu0
      %v4477 = vadd.f32 0.0, %v4476
      %v4478 = vpop.f32.mrb[0].mxu0
      %v4479 = vadd.f32 0.0, %v4478
      %4480 = vdwg.mxu0
      %v4481 = vadd.f32 %v3780, %v3980
      %v4482 = vadd.f32 %v3781, %v3982
      %v4483 = vadd.f32 %v3782, %v4051
      %v4484 = vadd.f32 %v3783, %v4053
      %v4485 = vadd.f32 %v3784, %v4122
      %v4486 = vadd.f32 %v3785, %v4124
      %v4487 = vadd.f32 %v3786, %v4193
      %v4488 = vadd.f32 %v3787, %v4195
      %v4489 = vadd.f32 %v3788, %v4264
      %v4490 = vadd.f32 %v3789, %v4266
      %v4491 = vadd.f32 %v3790, %v4335
      %v4492 = vadd.f32 %v3791, %v4337
      %v4493 = vadd.f32 %v3792, %v4406
      %v4494 = vadd.f32 %v3793, %v4408
      %v4495 = vadd.f32 %v3794, %v4477
      %v4496 = vadd.f32 %v3795, %v4479
      %s4497 = scalar_lea.vmem %s1, 40
      %v4498 = vld [vmem:[%s4497] sm:$0xff]
      %v4499 = vld [vmem:[#allocation2 + $0x28] sm:$0xff]
      %v4500 = vld [vmem:[#allocation2 + $0x30] sm:$0xff]
      %v4501 = vld [vmem:[#allocation2 + $0x38] sm:$0xff]
      %v4502 = vld [vmem:[#allocation2 + $0x40] sm:$0xff]
      %v4503 = vld [vmem:[#allocation2 + $0x48] sm:$0xff]
      %v4504 = vld [vmem:[#allocation2 + $0x50] sm:$0xff]
      %v4505 = vld [vmem:[#allocation2 + $0x58] sm:$0xff]
      %v4506 = vld [vmem:[#allocation2 + $0x60] sm:$0xff]
      %v4507 = vld [vmem:[#allocation2 + $0x68] sm:$0xff]
      %v4508 = vld [vmem:[#allocation2 + $0x70] sm:$0xff]
      %v4509 = vld [vmem:[#allocation2 + $0x78] sm:$0xff]
      %v4510 = vld [vmem:[#allocation2 + $0x80] sm:$0xff]
      %v4511 = vld [vmem:[#allocation2 + $0x88] sm:$0xff]
      %v4512 = vld [vmem:[#allocation2 + $0x90] sm:$0xff]
      %v4513 = vld [vmem:[#allocation2 + $0x98] sm:$0xff]
      %v4514 = vld [vmem:[#allocation2 + $0xa0] sm:$0xff]
      %v4515 = vld [vmem:[#allocation2 + $0xd8] sm:$0xff]
      %v4516 = vld [vmem:[#allocation2 + $0xe0] sm:$0xff]
      %v4517 = vld [vmem:[#allocation2 + $0xe8] sm:$0xff]
      %v4518 = vld [vmem:[#allocation2 + $0xf0] sm:$0xff]
      %v4519 = vld [vmem:[#allocation2 + $0xf8] sm:$0xff]
      %v4520 = vld [vmem:[#allocation2 + $0x100] sm:$0xff]
      %v4521 = vld [vmem:[#allocation2 + $0x108] sm:$0xff]
      %v4522 = vld [vmem:[#allocation2 + $0x110] sm:$0xff]
      %v4523 = vld [vmem:[#allocation2 + $0x118] sm:$0xff]
      %v4524 = vld [vmem:[#allocation2 + $0x120] sm:$0xff]
      %v4525 = vld [vmem:[#allocation2 + $0x128] sm:$0xff]
      %v4526 = vld [vmem:[#allocation2 + $0x130] sm:$0xff]
      %v4527 = vld [vmem:[#allocation2 + $0x138] sm:$0xff]
      %v4528 = vld [vmem:[#allocation2 + $0x140] sm:$0xff]
      %v4529 = vld [vmem:[#allocation2 + $0x148] sm:$0xff]
      %v4530 = vld [vmem:[#allocation2 + $0x150] sm:$0xff]
      %v4531 = vld [vmem:[#allocation2 + $0x188] sm:$0xff]
      %v4532 = vld [vmem:[#allocation2 + $0x190] sm:$0xff]
      %v4533 = vld [vmem:[#allocation2 + $0x198] sm:$0xff]
      %v4534 = vld [vmem:[#allocation2 + $0x1a0] sm:$0xff]
      %v4535 = vld [vmem:[#allocation2 + $0x1a8] sm:$0xff]
      %v4536 = vld [vmem:[#allocation2 + $0x1b0] sm:$0xff]
      %v4537 = vld [vmem:[#allocation2 + $0x1b8] sm:$0xff]
      %v4538 = vld [vmem:[#allocation2 + $0x1c0] sm:$0xff]
      %v4539 = vld [vmem:[#allocation2 + $0x1c8] sm:$0xff]
      %v4540 = vld [vmem:[#allocation2 + $0x1d0] sm:$0xff]
      %v4541 = vld [vmem:[#allocation2 + $0x1d8] sm:$0xff]
      %v4542 = vld [vmem:[#allocation2 + $0x1e0] sm:$0xff]
      %v4543 = vld [vmem:[#allocation2 + $0x1e8] sm:$0xff]
      %v4544 = vld [vmem:[#allocation2 + $0x1f0] sm:$0xff]
      %v4545 = vld [vmem:[#allocation2 + $0x1f8] sm:$0xff]
      %v4546 = vld [vmem:[#allocation2 + $0x200] sm:$0xff]
      %v4547 = vld [vmem:[#allocation2 + $0x238] sm:$0xf]
      %v4548 = vld [vmem:[#allocation2 + $0x240] sm:$0xf]
      %v4549 = vld [vmem:[#allocation2 + $0x248] sm:$0xf]
      %v4550 = vld [vmem:[#allocation2 + $0x250] sm:$0xf]
      %v4551 = vld [vmem:[#allocation2 + $0x258] sm:$0xf]
      %v4552 = vld [vmem:[#allocation2 + $0x260] sm:$0xf]
      %v4553 = vld [vmem:[#allocation2 + $0x268] sm:$0xf]
      %v4554 = vld [vmem:[#allocation2 + $0x270] sm:$0xf]
      %v4555 = vld [vmem:[#allocation2 + $0x278] sm:$0xf]
      %v4556 = vld [vmem:[#allocation2 + $0x280] sm:$0xf]
      %v4557 = vld [vmem:[#allocation2 + $0x288] sm:$0xf]
      %v4558 = vld [vmem:[#allocation2 + $0x290] sm:$0xf]
      %v4559 = vld [vmem:[#allocation2 + $0x298] sm:$0xf]
      %v4560 = vld [vmem:[#allocation2 + $0x2a0] sm:$0xf]
      %v4561 = vld [vmem:[#allocation2 + $0x2a8] sm:$0xf]
      %v4562 = vld [vmem:[#allocation2 + $0x2b0] sm:$0xf]
      %v4564 = vsel %vm1199, %v4498, 0
      %v4567 = vsel %vm1203, %v4547, 0
      %v4570 = vsel %vm1203, %v4548, 0
      %v4573 = vsel %vm1203, %v4549, 0
      %v4576 = vsel %vm1203, %v4550, 0
      %v4579 = vsel %vm1203, %v4551, 0
      %v4582 = vsel %vm1203, %v4552, 0
      %v4585 = vsel %vm1203, %v4553, 0
      %v4588 = vsel %vm1203, %v4554, 0
      %v4591 = vsel %vm1203, %v4555, 0
      %v4594 = vsel %vm1203, %v4556, 0
      %v4597 = vsel %vm1203, %v4557, 0
      %v4600 = vsel %vm1203, %v4558, 0
      %v4603 = vsel %vm1203, %v4559, 0
      %v4606 = vsel %vm1203, %v4560, 0
      %v4609 = vsel %vm1203, %v4561, 0
      %v4612 = vsel %vm1203, %v4562, 0
      %4614 = vmatprep.subr.mxu0 %v4500
      %4615 = vmatpush1.msra.mxu0 %v4499
      %4616 = vmatprep.subr.mxu0 %v4516
      %4617 = vmatpush1.msra.mxu0 %v4515
      %4618 = vmatprep.subr.mxu0 %v4532
      %4619 = vmatpush1.msra.mxu0 %v4531
      %4620 = vmatprep.subr.mxu0 %v4570
      %4621 = vmatpush1.msra.mxu0 %v4567
      %4622 = vmatprep.subr.mxu0 0.0
      %4623 = vmatpush1.msra.mxu0 0.0
      %4624 = vmatprep.subr.mxu0 0.0
      %4625 = vmatpush1.msra.mxu0 0.0
      %4626 = vmatprep.subr.mxu0 0.0
      %4627 = vmatpush1.msra.mxu0 0.0
      %4628 = vmatprep.subr.mxu0 0.0
      %4629 = vmatpush1.msra.mxu0 0.0
      %4630 = vmatprep.subr.mxu0 0.0
      %4631 = vmatpush1.msra.mxu0 0.0
      %4632 = vmatprep.subr.mxu0 0.0
      %4633 = vmatpush1.msra.mxu0 0.0
      %4634 = vmatprep.subr.mxu0 0.0
      %4635 = vmatpush1.msra.mxu0 0.0
      %4636 = vmatprep.subr.mxu0 0.0
      %4637 = vmatpush1.msra.mxu0 0.0
      %4638 = vmatprep.subr.mxu0 0.0
      %4639 = vmatpush1.msra.mxu0 0.0
      %4640 = vmatprep.subr.mxu0 0.0
      %4641 = vmatpush1.msra.mxu0 0.0
      %4642 = vmatprep.subr.mxu0 0.0
      %4643 = vmatpush1.msra.mxu0 0.0
      %4644 = vmatprep.subr.mxu0 0.0
      %4645 = vmatpush1.msra.mxu0 0.0
      %4646 = vmatprep.subr.mxu0 0.0
      %4647 = vmatpush1.msra.mxu0 0.0
      %4648 = vmatprep.subr.mxu0 0.0
      %4649 = vmatpush1.msra.mxu0 0.0
      %4650 = vmatprep.subr.mxu0 0.0
      %4651 = vmatpush1.msra.mxu0 0.0
      %4652 = vmatprep.subr.mxu0 0.0
      %4653 = vmatpush1.msra.mxu0 0.0
      %4654 = vmatprep.subr.mxu0 0.0
      %4655 = vmatpush1.msra.mxu0 0.0
      %4656 = vmatprep.subr.mxu0 0.0
      %4657 = vmatpush1.msra.mxu0 0.0
      %4658 = vmatprep.subr.mxu0 0.0
      %4659 = vmatpush1.msra.mxu0 0.0
      %4660 = vmatprep.subr.mxu0 0.0
      %4661 = vmatpush1.msra.mxu0 0.0
      %4662 = vmatprep.subr.mxu0 0.0
      %4663 = vmatpush1.msra.mxu0 0.0
      %4664 = vmatprep.subr.mxu0 0.0
      %4665 = vmatpush1.msra.mxu0 0.0
      %4666 = vmatprep.subr.mxu0 0.0
      %4667 = vmatpush1.msra.mxu0 0.0
      %4668 = vmatprep.subr.mxu0 0.0
      %4669 = vmatpush1.msra.mxu0 0.0
      %4670 = vmatprep.subr.mxu0 0.0
      %4671 = vmatpush1.msra.mxu0 0.0
      %4672 = vmatprep.subr.mxu0 0.0
      %4673 = vmatpush1.msra.mxu0 0.0
      %4674 = vmatprep.subr.mxu0 0.0
      %4675 = vmatpush1.msra.mxu0 0.0
      %4676 = vmatprep.subr.mxu0 0.0
      %4677 = vmatpush1.msra.mxu0 0.0
      %4678 = vmatprep.mubr.f32.mxu0 0.0
      %4679 = vmatmul.mubr.f32.gmra.mrb[0].mxu0 %v4564
      %v4680 = vpop.f32.mrb[0].mxu0
      %v4681 = vadd.f32 0.0, %v4680
      %v4682 = vpop.f32.mrb[0].mxu0
      %v4683 = vadd.f32 0.0, %v4682
      %4684 = vdwg.mxu0
      %4685 = vmatprep.subr.mxu0 %v4502
      %4686 = vmatpush1.msra.mxu0 %v4501
      %4687 = vmatprep.subr.mxu0 %v4518
      %4688 = vmatpush1.msra.mxu0 %v4517
      %4689 = vmatprep.subr.mxu0 %v4534
      %4690 = vmatpush1.msra.mxu0 %v4533
      %4691 = vmatprep.subr.mxu0 %v4576
      %4692 = vmatpush1.msra.mxu0 %v4573
      %4693 = vmatprep.subr.mxu0 0.0
      %4694 = vmatpush1.msra.mxu0 0.0
      %4695 = vmatprep.subr.mxu0 0.0
      %4696 = vmatpush1.msra.mxu0 0.0
      %4697 = vmatprep.subr.mxu0 0.0
      %4698 = vmatpush1.msra.mxu0 0.0
      %4699 = vmatprep.subr.mxu0 0.0
      %4700 = vmatpush1.msra.mxu0 0.0
      %4701 = vmatprep.subr.mxu0 0.0
      %4702 = vmatpush1.msra.mxu0 0.0
      %4703 = vmatprep.subr.mxu0 0.0
      %4704 = vmatpush1.msra.mxu0 0.0
      %4705 = vmatprep.subr.mxu0 0.0
      %4706 = vmatpush1.msra.mxu0 0.0
      %4707 = vmatprep.subr.mxu0 0.0
      %4708 = vmatpush1.msra.mxu0 0.0
      %4709 = vmatprep.subr.mxu0 0.0
      %4710 = vmatpush1.msra.mxu0 0.0
      %4711 = vmatprep.subr.mxu0 0.0
      %4712 = vmatpush1.msra.mxu0 0.0
      %4713 = vmatprep.subr.mxu0 0.0
      %4714 = vmatpush1.msra.mxu0 0.0
      %4715 = vmatprep.subr.mxu0 0.0
      %4716 = vmatpush1.msra.mxu0 0.0
      %4717 = vmatprep.subr.mxu0 0.0
      %4718 = vmatpush1.msra.mxu0 0.0
      %4719 = vmatprep.subr.mxu0 0.0
      %4720 = vmatpush1.msra.mxu0 0.0
      %4721 = vmatprep.subr.mxu0 0.0
      %4722 = vmatpush1.msra.mxu0 0.0
      %4723 = vmatprep.subr.mxu0 0.0
      %4724 = vmatpush1.msra.mxu0 0.0
      %4725 = vmatprep.subr.mxu0 0.0
      %4726 = vmatpush1.msra.mxu0 0.0
      %4727 = vmatprep.subr.mxu0 0.0
      %4728 = vmatpush1.msra.mxu0 0.0
      %4729 = vmatprep.subr.mxu0 0.0
      %4730 = vmatpush1.msra.mxu0 0.0
      %4731 = vmatprep.subr.mxu0 0.0
      %4732 = vmatpush1.msra.mxu0 0.0
      %4733 = vmatprep.subr.mxu0 0.0
      %4734 = vmatpush1.msra.mxu0 0.0
      %4735 = vmatprep.subr.mxu0 0.0
      %4736 = vmatpush1.msra.mxu0 0.0
      %4737 = vmatprep.subr.mxu0 0.0
      %4738 = vmatpush1.msra.mxu0 0.0
      %4739 = vmatprep.subr.mxu0 0.0
      %4740 = vmatpush1.msra.mxu0 0.0
      %4741 = vmatprep.subr.mxu0 0.0
      %4742 = vmatpush1.msra.mxu0 0.0
      %4743 = vmatprep.subr.mxu0 0.0
      %4744 = vmatpush1.msra.mxu0 0.0
      %4745 = vmatprep.subr.mxu0 0.0
      %4746 = vmatpush1.msra.mxu0 0.0
      %4747 = vmatprep.subr.mxu0 0.0
      %4748 = vmatpush1.msra.mxu0 0.0
      %4749 = vmatprep.mubr.f32.mxu0 0.0
      %4750 = vmatmul.mubr.f32.gmra.mrb[0].mxu0 %v4564
      %v4751 = vpop.f32.mrb[0].mxu0
      %v4752 = vadd.f32 0.0, %v4751
      %v4753 = vpop.f32.mrb[0].mxu0
      %v4754 = vadd.f32 0.0, %v4753
      %4755 = vdwg.mxu0
      %4756 = vmatprep.subr.mxu0 %v4504
      %4757 = vmatpush1.msra.mxu0 %v4503
      %4758 = vmatprep.subr.mxu0 %v4520
      %4759 = vmatpush1.msra.mxu0 %v4519
      %4760 = vmatprep.subr.mxu0 %v4536
      %4761 = vmatpush1.msra.mxu0 %v4535
      %4762 = vmatprep.subr.mxu0 %v4582
      %4763 = vmatpush1.msra.mxu0 %v4579
      %4764 = vmatprep.subr.mxu0 0.0
      %4765 = vmatpush1.msra.mxu0 0.0
      %4766 = vmatprep.subr.mxu0 0.0
      %4767 = vmatpush1.msra.mxu0 0.0
      %4768 = vmatprep.subr.mxu0 0.0
      %4769 = vmatpush1.msra.mxu0 0.0
      %4770 = vmatprep.subr.mxu0 0.0
      %4771 = vmatpush1.msra.mxu0 0.0
      %4772 = vmatprep.subr.mxu0 0.0
      %4773 = vmatpush1.msra.mxu0 0.0
      %4774 = vmatprep.subr.mxu0 0.0
      %4775 = vmatpush1.msra.mxu0 0.0
      %4776 = vmatprep.subr.mxu0 0.0
      %4777 = vmatpush1.msra.mxu0 0.0
      %4778 = vmatprep.subr.mxu0 0.0
      %4779 = vmatpush1.msra.mxu0 0.0
      %4780 = vmatprep.subr.mxu0 0.0
      %4781 = vmatpush1.msra.mxu0 0.0
      %4782 = vmatprep.subr.mxu0 0.0
      %4783 = vmatpush1.msra.mxu0 0.0
      %4784 = vmatprep.subr.mxu0 0.0
      %4785 = vmatpush1.msra.mxu0 0.0
      %4786 = vmatprep.subr.mxu0 0.0
      %4787 = vmatpush1.msra.mxu0 0.0
      %4788 = vmatprep.subr.mxu0 0.0
      %4789 = vmatpush1.msra.mxu0 0.0
      %4790 = vmatprep.subr.mxu0 0.0
      %4791 = vmatpush1.msra.mxu0 0.0
      %4792 = vmatprep.subr.mxu0 0.0
      %4793 = vmatpush1.msra.mxu0 0.0
      %4794 = vmatprep.subr.mxu0 0.0
      %4795 = vmatpush1.msra.mxu0 0.0
      %4796 = vmatprep.subr.mxu0 0.0
      %4797 = vmatpush1.msra.mxu0 0.0
      %4798 = vmatprep.subr.mxu0 0.0
      %4799 = vmatpush1.msra.mxu0 0.0
      %4800 = vmatprep.subr.mxu0 0.0
      %4801 = vmatpush1.msra.mxu0 0.0
      %4802 = vmatprep.subr.mxu0 0.0
      %4803 = vmatpush1.msra.mxu0 0.0
      %4804 = vmatprep.subr.mxu0 0.0
      %4805 = vmatpush1.msra.mxu0 0.0
      %4806 = vmatprep.subr.mxu0 0.0
      %4807 = vmatpush1.msra.mxu0 0.0
      %4808 = vmatprep.subr.mxu0 0.0
      %4809 = vmatpush1.msra.mxu0 0.0
      %4810 = vmatprep.subr.mxu0 0.0
      %4811 = vmatpush1.msra.mxu0 0.0
      %4812 = vmatprep.subr.mxu0 0.0
      %4813 = vmatpush1.msra.mxu0 0.0
      %4814 = vmatprep.subr.mxu0 0.0
      %4815 = vmatpush1.msra.mxu0 0.0
      %4816 = vmatprep.subr.mxu0 0.0
      %4817 = vmatpush1.msra.mxu0 0.0
      %4818 = vmatprep.subr.mxu0 0.0
      %4819 = vmatpush1.msra.mxu0 0.0
      %4820 = vmatprep.mubr.f32.mxu0 0.0
      %4821 = vmatmul.mubr.f32.gmra.mrb[0].mxu0 %v4564
      %v4822 = vpop.f32.mrb[0].mxu0
      %v4823 = vadd.f32 0.0, %v4822
      %v4824 = vpop.f32.mrb[0].mxu0
      %v4825 = vadd.f32 0.0, %v4824
      %4826 = vdwg.mxu0
      %4827 = vmatprep.subr.mxu0 %v4506
      %4828 = vmatpush1.msra.mxu0 %v4505
      %4829 = vmatprep.subr.mxu0 %v4522
      %4830 = vmatpush1.msra.mxu0 %v4521
      %4831 = vmatprep.subr.mxu0 %v4538
      %4832 = vmatpush1.msra.mxu0 %v4537
      %4833 = vmatprep.subr.mxu0 %v4588
      %4834 = vmatpush1.msra.mxu0 %v4585
      %4835 = vmatprep.subr.mxu0 0.0
      %4836 = vmatpush1.msra.mxu0 0.0
      %4837 = vmatprep.subr.mxu0 0.0
      %4838 = vmatpush1.msra.mxu0 0.0
      %4839 = vmatprep.subr.mxu0 0.0
      %4840 = vmatpush1.msra.mxu0 0.0
      %4841 = vmatprep.subr.mxu0 0.0
      %4842 = vmatpush1.msra.mxu0 0.0
      %4843 = vmatprep.subr.mxu0 0.0
      %4844 = vmatpush1.msra.mxu0 0.0
      %4845 = vmatprep.subr.mxu0 0.0
      %4846 = vmatpush1.msra.mxu0 0.0
      %4847 = vmatprep.subr.mxu0 0.0
      %4848 = vmatpush1.msra.mxu0 0.0
      %4849 = vmatprep.subr.mxu0 0.0
      %4850 = vmatpush1.msra.mxu0 0.0
      %4851 = vmatprep.subr.mxu0 0.0
      %4852 = vmatpush1.msra.mxu0 0.0
      %4853 = vmatprep.subr.mxu0 0.0
      %4854 = vmatpush1.msra.mxu0 0.0
      %4855 = vmatprep.subr.mxu0 0.0
      %4856 = vmatpush1.msra.mxu0 0.0
      %4857 = vmatprep.subr.mxu0 0.0
      %4858 = vmatpush1.msra.mxu0 0.0
      %4859 = vmatprep.subr.mxu0 0.0
      %4860 = vmatpush1.msra.mxu0 0.0
      %4861 = vmatprep.subr.mxu0 0.0
      %4862 = vmatpush1.msra.mxu0 0.0
      %4863 = vmatprep.subr.mxu0 0.0
      %4864 = vmatpush1.msra.mxu0 0.0
      %4865 = vmatprep.subr.mxu0 0.0
      %4866 = vmatpush1.msra.mxu0 0.0
      %4867 = vmatprep.subr.mxu0 0.0
      %4868 = vmatpush1.msra.mxu0 0.0
      %4869 = vmatprep.subr.mxu0 0.0
      %4870 = vmatpush1.msra.mxu0 0.0
      %4871 = vmatprep.subr.mxu0 0.0
      %4872 = vmatpush1.msra.mxu0 0.0
      %4873 = vmatprep.subr.mxu0 0.0
      %4874 = vmatpush1.msra.mxu0 0.0
      %4875 = vmatprep.subr.mxu0 0.0
      %4876 = vmatpush1.msra.mxu0 0.0
      %4877 = vmatprep.subr.mxu0 0.0
      %4878 = vmatpush1.msra.mxu0 0.0
      %4879 = vmatprep.subr.mxu0 0.0
      %4880 = vmatpush1.msra.mxu0 0.0
      %4881 = vmatprep.subr.mxu0 0.0
      %4882 = vmatpush1.msra.mxu0 0.0
      %4883 = vmatprep.subr.mxu0 0.0
      %4884 = vmatpush1.msra.mxu0 0.0
      %4885 = vmatprep.subr.mxu0 0.0
      %4886 = vmatpush1.msra.mxu0 0.0
      %4887 = vmatprep.subr.mxu0 0.0
      %4888 = vmatpush1.msra.mxu0 0.0
      %4889 = vmatprep.subr.mxu0 0.0
      %4890 = vmatpush1.msra.mxu0 0.0
      %4891 = vmatprep.mubr.f32.mxu0 0.0
      %4892 = vmatmul.mubr.f32.gmra.mrb[0].mxu0 %v4564
      %v4893 = vpop.f32.mrb[0].mxu0
      %v4894 = vadd.f32 0.0, %v4893
      %v4895 = vpop.f32.mrb[0].mxu0
      %v4896 = vadd.f32 0.0, %v4895
      %4897 = vdwg.mxu0
      %4898 = vmatprep.subr.mxu0 %v4508
      %4899 = vmatpush1.msra.mxu0 %v4507
      %4900 = vmatprep.subr.mxu0 %v4524
      %4901 = vmatpush1.msra.mxu0 %v4523
      %4902 = vmatprep.subr.mxu0 %v4540
      %4903 = vmatpush1.msra.mxu0 %v4539
      %4904 = vmatprep.subr.mxu0 %v4594
      %4905 = vmatpush1.msra.mxu0 %v4591
      %4906 = vmatprep.subr.mxu0 0.0
      %4907 = vmatpush1.msra.mxu0 0.0
      %4908 = vmatprep.subr.mxu0 0.0
      %4909 = vmatpush1.msra.mxu0 0.0
      %4910 = vmatprep.subr.mxu0 0.0
      %4911 = vmatpush1.msra.mxu0 0.0
      %4912 = vmatprep.subr.mxu0 0.0
      %4913 = vmatpush1.msra.mxu0 0.0
      %4914 = vmatprep.subr.mxu0 0.0
      %4915 = vmatpush1.msra.mxu0 0.0
      %4916 = vmatprep.subr.mxu0 0.0
      %4917 = vmatpush1.msra.mxu0 0.0
      %4918 = vmatprep.subr.mxu0 0.0
      %4919 = vmatpush1.msra.mxu0 0.0
      %4920 = vmatprep.subr.mxu0 0.0
      %4921 = vmatpush1.msra.mxu0 0.0
      %4922 = vmatprep.subr.mxu0 0.0
      %4923 = vmatpush1.msra.mxu0 0.0
      %4924 = vmatprep.subr.mxu0 0.0
      %4925 = vmatpush1.msra.mxu0 0.0
      %4926 = vmatprep.subr.mxu0 0.0
      %4927 = vmatpush1.msra.mxu0 0.0
      %4928 = vmatprep.subr.mxu0 0.0
      %4929 = vmatpush1.msra.mxu0 0.0
      %4930 = vmatprep.subr.mxu0 0.0
      %4931 = vmatpush1.msra.mxu0 0.0
      %4932 = vmatprep.subr.mxu0 0.0
      %4933 = vmatpush1.msra.mxu0 0.0
      %4934 = vmatprep.subr.mxu0 0.0
      %4935 = vmatpush1.msra.mxu0 0.0
      %4936 = vmatprep.subr.mxu0 0.0
      %4937 = vmatpush1.msra.mxu0 0.0
      %4938 = vmatprep.subr.mxu0 0.0
      %4939 = vmatpush1.msra.mxu0 0.0
      %4940 = vmatprep.subr.mxu0 0.0
      %4941 = vmatpush1.msra.mxu0 0.0
      %4942 = vmatprep.subr.mxu0 0.0
      %4943 = vmatpush1.msra.mxu0 0.0
      %4944 = vmatprep.subr.mxu0 0.0
      %4945 = vmatpush1.msra.mxu0 0.0
      %4946 = vmatprep.subr.mxu0 0.0
      %4947 = vmatpush1.msra.mxu0 0.0
      %4948 = vmatprep.subr.mxu0 0.0
      %4949 = vmatpush1.msra.mxu0 0.0
      %4950 = vmatprep.subr.mxu0 0.0
      %4951 = vmatpush1.msra.mxu0 0.0
      %4952 = vmatprep.subr.mxu0 0.0
      %4953 = vmatpush1.msra.mxu0 0.0
      %4954 = vmatprep.subr.mxu0 0.0
      %4955 = vmatpush1.msra.mxu0 0.0
      %4956 = vmatprep.subr.mxu0 0.0
      %4957 = vmatpush1.msra.mxu0 0.0
      %4958 = vmatprep.subr.mxu0 0.0
      %4959 = vmatpush1.msra.mxu0 0.0
      %4960 = vmatprep.subr.mxu0 0.0
      %4961 = vmatpush1.msra.mxu0 0.0
      %4962 = vmatprep.mubr.f32.mxu0 0.0
      %4963 = vmatmul.mubr.f32.gmra.mrb[0].mxu0 %v4564
      %v4964 = vpop.f32.mrb[0].mxu0
      %v4965 = vadd.f32 0.0, %v4964
      %v4966 = vpop.f32.mrb[0].mxu0
      %v4967 = vadd.f32 0.0, %v4966
      %4968 = vdwg.mxu0
      %4969 = vmatprep.subr.mxu0 %v4510
      %4970 = vmatpush1.msra.mxu0 %v4509
      %4971 = vmatprep.subr.mxu0 %v4526
      %4972 = vmatpush1.msra.mxu0 %v4525
      %4973 = vmatprep.subr.mxu0 %v4542
      %4974 = vmatpush1.msra.mxu0 %v4541
      %4975 = vmatprep.subr.mxu0 %v4600
      %4976 = vmatpush1.msra.mxu0 %v4597
      %4977 = vmatprep.subr.mxu0 0.0
      %4978 = vmatpush1.msra.mxu0 0.0
      %4979 = vmatprep.subr.mxu0 0.0
      %4980 = vmatpush1.msra.mxu0 0.0
      %4981 = vmatprep.subr.mxu0 0.0
      %4982 = vmatpush1.msra.mxu0 0.0
      %4983 = vmatprep.subr.mxu0 0.0
      %4984 = vmatpush1.msra.mxu0 0.0
      %4985 = vmatprep.subr.mxu0 0.0
      %4986 = vmatpush1.msra.mxu0 0.0
      %4987 = vmatprep.subr.mxu0 0.0
      %4988 = vmatpush1.msra.mxu0 0.0
      %4989 = vmatprep.subr.mxu0 0.0
      %4990 = vmatpush1.msra.mxu0 0.0
      %4991 = vmatprep.subr.mxu0 0.0
      %4992 = vmatpush1.msra.mxu0 0.0
      %4993 = vmatprep.subr.mxu0 0.0
      %4994 = vmatpush1.msra.mxu0 0.0
      %4995 = vmatprep.subr.mxu0 0.0
      %4996 = vmatpush1.msra.mxu0 0.0
      %4997 = vmatprep.subr.mxu0 0.0
      %4998 = vmatpush1.msra.mxu0 0.0
      %4999 = vmatprep.subr.mxu0 0.0
      %5000 = vmatpush1.msra.mxu0 0.0
      %5001 = vmatprep.subr.mxu0 0.0
      %5002 = vmatpush1.msra.mxu0 0.0
      %5003 = vmatprep.subr.mxu0 0.0
      %5004 = vmatpush1.msra.mxu0 0.0
      %5005 = vmatprep.subr.mxu0 0.0
      %5006 = vmatpush1.msra.mxu0 0.0
      %5007 = vmatprep.subr.mxu0 0.0
      %5008 = vmatpush1.msra.mxu0 0.0
      %5009 = vmatprep.subr.mxu0 0.0
      %5010 = vmatpush1.msra.mxu0 0.0
      %5011 = vmatprep.subr.mxu0 0.0
      %5012 = vmatpush1.msra.mxu0 0.0
      %5013 = vmatprep.subr.mxu0 0.0
      %5014 = vmatpush1.msra.mxu0 0.0
      %5015 = vmatprep.subr.mxu0 0.0
      %5016 = vmatpush1.msra.mxu0 0.0
      %5017 = vmatprep.subr.mxu0 0.0
      %5018 = vmatpush1.msra.mxu0 0.0
      %5019 = vmatprep.subr.mxu0 0.0
      %5020 = vmatpush1.msra.mxu0 0.0
      %5021 = vmatprep.subr.mxu0 0.0
      %5022 = vmatpush1.msra.mxu0 0.0
      %5023 = vmatprep.subr.mxu0 0.0
      %5024 = vmatpush1.msra.mxu0 0.0
      %5025 = vmatprep.subr.mxu0 0.0
      %5026 = vmatpush1.msra.mxu0 0.0
      %5027 = vmatprep.subr.mxu0 0.0
      %5028 = vmatpush1.msra.mxu0 0.0
      %5029 = vmatprep.subr.mxu0 0.0
      %5030 = vmatpush1.msra.mxu0 0.0
      %5031 = vmatprep.subr.mxu0 0.0
      %5032 = vmatpush1.msra.mxu0 0.0
      %5033 = vmatprep.mubr.f32.mxu0 0.0
      %5034 = vmatmul.mubr.f32.gmra.mrb[0].mxu0 %v4564
      %v5035 = vpop.f32.mrb[0].mxu0
      %v5036 = vadd.f32 0.0, %v5035
      %v5037 = vpop.f32.mrb[0].mxu0
      %v5038 = vadd.f32 0.0, %v5037
      %5039 = vdwg.mxu0
      %5040 = vmatprep.subr.mxu0 %v4512
      %5041 = vmatpush1.msra.mxu0 %v4511
      %5042 = vmatprep.subr.mxu0 %v4528
      %5043 = vmatpush1.msra.mxu0 %v4527
      %5044 = vmatprep.subr.mxu0 %v4544
      %5045 = vmatpush1.msra.mxu0 %v4543
      %5046 = vmatprep.subr.mxu0 %v4606
      %5047 = vmatpush1.msra.mxu0 %v4603
      %5048 = vmatprep.subr.mxu0 0.0
      %5049 = vmatpush1.msra.mxu0 0.0
      %5050 = vmatprep.subr.mxu0 0.0
      %5051 = vmatpush1.msra.mxu0 0.0
      %5052 = vmatprep.subr.mxu0 0.0
      %5053 = vmatpush1.msra.mxu0 0.0
      %5054 = vmatprep.subr.mxu0 0.0
      %5055 = vmatpush1.msra.mxu0 0.0
      %5056 = vmatprep.subr.mxu0 0.0
      %5057 = vmatpush1.msra.mxu0 0.0
      %5058 = vmatprep.subr.mxu0 0.0
      %5059 = vmatpush1.msra.mxu0 0.0
      %5060 = vmatprep.subr.mxu0 0.0
      %5061 = vmatpush1.msra.mxu0 0.0
      %5062 = vmatprep.subr.mxu0 0.0
      %5063 = vmatpush1.msra.mxu0 0.0
      %5064 = vmatprep.subr.mxu0 0.0
      %5065 = vmatpush1.msra.mxu0 0.0
      %5066 = vmatprep.subr.mxu0 0.0
      %5067 = vmatpush1.msra.mxu0 0.0
      %5068 = vmatprep.subr.mxu0 0.0
      %5069 = vmatpush1.msra.mxu0 0.0
      %5070 = vmatprep.subr.mxu0 0.0
      %5071 = vmatpush1.msra.mxu0 0.0
      %5072 = vmatprep.subr.mxu0 0.0
      %5073 = vmatpush1.msra.mxu0 0.0
      %5074 = vmatprep.subr.mxu0 0.0
      %5075 = vmatpush1.msra.mxu0 0.0
      %5076 = vmatprep.subr.mxu0 0.0
      %5077 = vmatpush1.msra.mxu0 0.0
      %5078 = vmatprep.subr.mxu0 0.0
      %5079 = vmatpush1.msra.mxu0 0.0
      %5080 = vmatprep.subr.mxu0 0.0
      %5081 = vmatpush1.msra.mxu0 0.0
      %5082 = vmatprep.subr.mxu0 0.0
      %5083 = vmatpush1.msra.mxu0 0.0
      %5084 = vmatprep.subr.mxu0 0.0
      %5085 = vmatpush1.msra.mxu0 0.0
      %5086 = vmatprep.subr.mxu0 0.0
      %5087 = vmatpush1.msra.mxu0 0.0
      %5088 = vmatprep.subr.mxu0 0.0
      %5089 = vmatpush1.msra.mxu0 0.0
      %5090 = vmatprep.subr.mxu0 0.0
      %5091 = vmatpush1.msra.mxu0 0.0
      %5092 = vmatprep.subr.mxu0 0.0
      %5093 = vmatpush1.msra.mxu0 0.0
      %5094 = vmatprep.subr.mxu0 0.0
      %5095 = vmatpush1.msra.mxu0 0.0
      %5096 = vmatprep.subr.mxu0 0.0
      %5097 = vmatpush1.msra.mxu0 0.0
      %5098 = vmatprep.subr.mxu0 0.0
      %5099 = vmatpush1.msra.mxu0 0.0
      %5100 = vmatprep.subr.mxu0 0.0
      %5101 = vmatpush1.msra.mxu0 0.0
      %5102 = vmatprep.subr.mxu0 0.0
      %5103 = vmatpush1.msra.mxu0 0.0
      %5104 = vmatprep.mubr.f32.mxu0 0.0
      %5105 = vmatmul.mubr.f32.gmra.mrb[0].mxu0 %v4564
      %v5106 = vpop.f32.mrb[0].mxu0
      %v5107 = vadd.f32 0.0, %v5106
      %v5108 = vpop.f32.mrb[0].mxu0
      %v5109 = vadd.f32 0.0, %v5108
      %5110 = vdwg.mxu0
      %5111 = vmatprep.subr.mxu0 %v4514
      %5112 = vmatpush1.msra.mxu0 %v4513
      %5113 = vmatprep.subr.mxu0 %v4530
      %5114 = vmatpush1.msra.mxu0 %v4529
      %5115 = vmatprep.subr.mxu0 %v4546
      %5116 = vmatpush1.msra.mxu0 %v4545
      %5117 = vmatprep.subr.mxu0 %v4612
      %5118 = vmatpush1.msra.mxu0 %v4609
      %5119 = vmatprep.subr.mxu0 0.0
      %5120 = vmatpush1.msra.mxu0 0.0
      %5121 = vmatprep.subr.mxu0 0.0
      %5122 = vmatpush1.msra.mxu0 0.0
      %5123 = vmatprep.subr.mxu0 0.0
      %5124 = vmatpush1.msra.mxu0 0.0
      %5125 = vmatprep.subr.mxu0 0.0
      %5126 = vmatpush1.msra.mxu0 0.0
      %5127 = vmatprep.subr.mxu0 0.0
      %5128 = vmatpush1.msra.mxu0 0.0
      %5129 = vmatprep.subr.mxu0 0.0
      %5130 = vmatpush1.msra.mxu0 0.0
      %5131 = vmatprep.subr.mxu0 0.0
      %5132 = vmatpush1.msra.mxu0 0.0
      %5133 = vmatprep.subr.mxu0 0.0
      %5134 = vmatpush1.msra.mxu0 0.0
      %5135 = vmatprep.subr.mxu0 0.0
      %5136 = vmatpush1.msra.mxu0 0.0
      %5137 = vmatprep.subr.mxu0 0.0
      %5138 = vmatpush1.msra.mxu0 0.0
      %5139 = vmatprep.subr.mxu0 0.0
      %5140 = vmatpush1.msra.mxu0 0.0
      %5141 = vmatprep.subr.mxu0 0.0
      %5142 = vmatpush1.msra.mxu0 0.0
      %5143 = vmatprep.subr.mxu0 0.0
      %5144 = vmatpush1.msra.mxu0 0.0
      %5145 = vmatprep.subr.mxu0 0.0
      %5146 = vmatpush1.msra.mxu0 0.0
      %5147 = vmatprep.subr.mxu0 0.0
      %5148 = vmatpush1.msra.mxu0 0.0
      %5149 = vmatprep.subr.mxu0 0.0
      %5150 = vmatpush1.msra.mxu0 0.0
      %5151 = vmatprep.subr.mxu0 0.0
      %5152 = vmatpush1.msra.mxu0 0.0
      %5153 = vmatprep.subr.mxu0 0.0
      %5154 = vmatpush1.msra.mxu0 0.0
      %5155 = vmatprep.subr.mxu0 0.0
      %5156 = vmatpush1.msra.mxu0 0.0
      %5157 = vmatprep.subr.mxu0 0.0
      %5158 = vmatpush1.msra.mxu0 0.0
      %5159 = vmatprep.subr.mxu0 0.0
      %5160 = vmatpush1.msra.mxu0 0.0
      %5161 = vmatprep.subr.mxu0 0.0
      %5162 = vmatpush1.msra.mxu0 0.0
      %5163 = vmatprep.subr.mxu0 0.0
      %5164 = vmatpush1.msra.mxu0 0.0
      %5165 = vmatprep.subr.mxu0 0.0
      %5166 = vmatpush1.msra.mxu0 0.0
      %5167 = vmatprep.subr.mxu0 0.0
      %5168 = vmatpush1.msra.mxu0 0.0
      %5169 = vmatprep.subr.mxu0 0.0
      %5170 = vmatpush1.msra.mxu0 0.0
      %5171 = vmatprep.subr.mxu0 0.0
      %5172 = vmatpush1.msra.mxu0 0.0
      %5173 = vmatprep.subr.mxu0 0.0
      %5174 = vmatpush1.msra.mxu0 0.0
      %5175 = vmatprep.mubr.f32.mxu0 0.0
      %5176 = vmatmul.mubr.f32.gmra.mrb[0].mxu0 %v4564
      %v5177 = vpop.f32.mrb[0].mxu0
      %v5178 = vadd.f32 0.0, %v5177
      %v5179 = vpop.f32.mrb[0].mxu0
      %v5180 = vadd.f32 0.0, %v5179
      %5181 = vdwg.mxu0
      %v5182 = vadd.f32 %v4481, %v4681
      %v5183 = vadd.f32 %v4482, %v4683
      %v5184 = vadd.f32 %v4483, %v4752
      %v5185 = vadd.f32 %v4484, %v4754
      %v5186 = vadd.f32 %v4485, %v4823
      %v5187 = vadd.f32 %v4486, %v4825
      %v5188 = vadd.f32 %v4487, %v4894
      %v5189 = vadd.f32 %v4488, %v4896
      %v5190 = vadd.f32 %v4489, %v4965
      %v5191 = vadd.f32 %v4490, %v4967
      %v5192 = vadd.f32 %v4491, %v5036
      %v5193 = vadd.f32 %v4492, %v5038
      %v5194 = vadd.f32 %v4493, %v5107
      %v5195 = vadd.f32 %v4494, %v5109
      %v5196 = vadd.f32 %v4495, %v5178
      %v5197 = vadd.f32 %v4496, %v5180
      %s5198 = scalar_lea.vmem %s1, 48
      %v5199 = vld [vmem:[%s5198] sm:$0xff]
      %v5200 = vld [vmem:[#allocation2 + $0x30] sm:$0xff]
      %v5201 = vld [vmem:[#allocation2 + $0x38] sm:$0xff]
      %v5202 = vld [vmem:[#allocation2 + $0x40] sm:$0xff]
      %v5203 = vld [vmem:[#allocation2 + $0x48] sm:$0xff]
      %v5204 = vld [vmem:[#allocation2 + $0x50] sm:$0xff]
      %v5205 = vld [vmem:[#allocation2 + $0x58] sm:$0xff]
      %v5206 = vld [vmem:[#allocation2 + $0x60] sm:$0xff]
      %v5207 = vld [vmem:[#allocation2 + $0x68] sm:$0xff]
      %v5208 = vld [vmem:[#allocation2 + $0x70] sm:$0xff]
      %v5209 = vld [vmem:[#allocation2 + $0x78] sm:$0xff]
      %v5210 = vld [vmem:[#allocation2 + $0x80] sm:$0xff]
      %v5211 = vld [vmem:[#allocation2 + $0x88] sm:$0xff]
      %v5212 = vld [vmem:[#allocation2 + $0x90] sm:$0xff]
      %v5213 = vld [vmem:[#allocation2 + $0x98] sm:$0xff]
      %v5214 = vld [vmem:[#allocation2 + $0xa0] sm:$0xff]
      %v5215 = vld [vmem:[#allocation2 + $0xa8] sm:$0xff]
      %v5216 = vld [vmem:[#allocation2 + $0xe0] sm:$0xff]
      %v5217 = vld [vmem:[#allocation2 + $0xe8] sm:$0xff]
      %v5218 = vld [vmem:[#allocation2 + $0xf0] sm:$0xff]
      %v5219 = vld [vmem:[#allocation2 + $0xf8] sm:$0xff]
      %v5220 = vld [vmem:[#allocation2 + $0x100] sm:$0xff]
      %v5221 = vld [vmem:[#allocation2 + $0x108] sm:$0xff]
      %v5222 = vld [vmem:[#allocation2 + $0x110] sm:$0xff]
      %v5223 = vld [vmem:[#allocation2 + $0x118] sm:$0xff]
      %v5224 = vld [vmem:[#allocation2 + $0x120] sm:$0xff]
      %v5225 = vld [vmem:[#allocation2 + $0x128] sm:$0xff]
      %v5226 = vld [vmem:[#allocation2 + $0x130] sm:$0xff]
      %v5227 = vld [vmem:[#allocation2 + $0x138] sm:$0xff]
      %v5228 = vld [vmem:[#allocation2 + $0x140] sm:$0xff]
      %v5229 = vld [vmem:[#allocation2 + $0x148] sm:$0xff]
      %v5230 = vld [vmem:[#allocation2 + $0x150] sm:$0xff]
      %v5231 = vld [vmem:[#allocation2 + $0x158] sm:$0xff]
      %v5232 = vld [vmem:[#allocation2 + $0x190] sm:$0xff]
      %v5233 = vld [vmem:[#allocation2 + $0x198] sm:$0xff]
      %v5234 = vld [vmem:[#allocation2 + $0x1a0] sm:$0xff]
      %v5235 = vld [vmem:[#allocation2 + $0x1a8] sm:$0xff]
      %v5236 = vld [vmem:[#allocation2 + $0x1b0] sm:$0xff]
      %v5237 = vld [vmem:[#allocation2 + $0x1b8] sm:$0xff]
      %v5238 = vld [vmem:[#allocation2 + $0x1c0] sm:$0xff]
      %v5239 = vld [vmem:[#allocation2 + $0x1c8] sm:$0xff]
      %v5240 = vld [vmem:[#allocation2 + $0x1d0] sm:$0xff]
      %v5241 = vld [vmem:[#allocation2 + $0x1d8] sm:$0xff]
      %v5242 = vld [vmem:[#allocation2 + $0x1e0] sm:$0xff]
      %v5243 = vld [vmem:[#allocation2 + $0x1e8] sm:$0xff]
      %v5244 = vld [vmem:[#allocation2 + $0x1f0] sm:$0xff]
      %v5245 = vld [vmem:[#allocation2 + $0x1f8] sm:$0xff]
      %v5246 = vld [vmem:[#allocation2 + $0x200] sm:$0xff]
      %v5247 = vld [vmem:[#allocation2 + $0x208] sm:$0xff]
      %v5248 = vld [vmem:[#allocation2 + $0x240] sm:$0xf]
      %v5249 = vld [vmem:[#allocation2 + $0x248] sm:$0xf]
      %v5250 = vld [vmem:[#allocation2 + $0x250] sm:$0xf]
      %v5251 = vld [vmem:[#allocation2 + $0x258] sm:$0xf]
      %v5252 = vld [vmem:[#allocation2 + $0x260] sm:$0xf]
      %v5253 = vld [vmem:[#allocation2 + $0x268] sm:$0xf]
      %v5254 = vld [vmem:[#allocation2 + $0x270] sm:$0xf]
      %v5255 = vld [vmem:[#allocation2 + $0x278] sm:$0xf]
      %v5256 = vld [vmem:[#allocation2 + $0x280] sm:$0xf]
      %v5257 = vld [vmem:[#allocation2 + $0x288] sm:$0xf]
      %v5258 = vld [vmem:[#allocation2 + $0x290] sm:$0xf]
      %v5259 = vld [vmem:[#allocation2 + $0x298] sm:$0xf]
      %v5260 = vld [vmem:[#allocation2 + $0x2a0] sm:$0xf]
      %v5261 = vld [vmem:[#allocation2 + $0x2a8] sm:$0xf]
      %v5262 = vld [vmem:[#allocation2 + $0x2b0] sm:$0xf]
      %v5263 = vld [vmem:[#allocation2 + $0x2b8] sm:$0xf]
      %v5265 = vsel %vm1199, %v5199, 0
      %v5268 = vsel %vm1203, %v5248, 0
      %v5271 = vsel %vm1203, %v5249, 0
      %v5274 = vsel %vm1203, %v5250, 0
      %v5277 = vsel %vm1203, %v5251, 0
      %v5280 = vsel %vm1203, %v5252, 0
      %v5283 = vsel %vm1203, %v5253, 0
      %v5286 = vsel %vm1203, %v5254, 0
      %v5289 = vsel %vm1203, %v5255, 0
      %v5292 = vsel %vm1203, %v5256, 0
      %v5295 = vsel %vm1203, %v5257, 0
      %v5298 = vsel %vm1203, %v5258, 0
      %v5301 = vsel %vm1203, %v5259, 0
      %v5304 = vsel %vm1203, %v5260, 0
      %v5307 = vsel %vm1203, %v5261, 0
      %v5310 = vsel %vm1203, %v5262, 0
      %v5313 = vsel %vm1203, %v5263, 0
      %5315 = vmatprep.subr.mxu0 %v5201
      %5316 = vmatpush1.msra.mxu0 %v5200
      %5317 = vmatprep.subr.mxu0 %v5217
      %5318 = vmatpush1.msra.mxu0 %v5216
      %5319 = vmatprep.subr.mxu0 %v5233
      %5320 = vmatpush1.msra.mxu0 %v5232
      %5321 = vmatprep.subr.mxu0 %v5271
      %5322 = vmatpush1.msra.mxu0 %v5268
      %5323 = vmatprep.subr.mxu0 0.0
      %5324 = vmatpush1.msra.mxu0 0.0
      %5325 = vmatprep.subr.mxu0 0.0
      %5326 = vmatpush1.msra.mxu0 0.0
      %5327 = vmatprep.subr.mxu0 0.0
      %5328 = vmatpush1.msra.mxu0 0.0
      %5329 = vmatprep.subr.mxu0 0.0
      %5330 = vmatpush1.msra.mxu0 0.0
      %5331 = vmatprep.subr.mxu0 0.0
      %5332 = vmatpush1.msra.mxu0 0.0
      %5333 = vmatprep.subr.mxu0 0.0
      %5334 = vmatpush1.msra.mxu0 0.0
      %5335 = vmatprep.subr.mxu0 0.0
      %5336 = vmatpush1.msra.mxu0 0.0
      %5337 = vmatprep.subr.mxu0 0.0
      %5338 = vmatpush1.msra.mxu0 0.0
      %5339 = vmatprep.subr.mxu0 0.0
      %5340 = vmatpush1.msra.mxu0 0.0
      %5341 = vmatprep.subr.mxu0 0.0
      %5342 = vmatpush1.msra.mxu0 0.0
      %5343 = vmatprep.subr.mxu0 0.0
      %5344 = vmatpush1.msra.mxu0 0.0
      %5345 = vmatprep.subr.mxu0 0.0
      %5346 = vmatpush1.msra.mxu0 0.0
      %5347 = vmatprep.subr.mxu0 0.0
      %5348 = vmatpush1.msra.mxu0 0.0
      %5349 = vmatprep.subr.mxu0 0.0
      %5350 = vmatpush1.msra.mxu0 0.0
      %5351 = vmatprep.subr.mxu0 0.0
      %5352 = vmatpush1.msra.mxu0 0.0
      %5353 = vmatprep.subr.mxu0 0.0
      %5354 = vmatpush1.msra.mxu0 0.0
      %5355 = vmatprep.subr.mxu0 0.0
      %5356 = vmatpush1.msra.mxu0 0.0
      %5357 = vmatprep.subr.mxu0 0.0
      %5358 = vmatpush1.msra.mxu0 0.0
      %5359 = vmatprep.subr.mxu0 0.0
      %5360 = vmatpush1.msra.mxu0 0.0
      %5361 = vmatprep.subr.mxu0 0.0
      %5362 = vmatpush1.msra.mxu0 0.0
      %5363 = vmatprep.subr.mxu0 0.0
      %5364 = vmatpush1.msra.mxu0 0.0
      %5365 = vmatprep.subr.mxu0 0.0
      %5366 = vmatpush1.msra.mxu0 0.0
      %5367 = vmatprep.subr.mxu0 0.0
      %5368 = vmatpush1.msra.mxu0 0.0
      %5369 = vmatprep.subr.mxu0 0.0
      %5370 = vmatpush1.msra.mxu0 0.0
      %5371 = vmatprep.subr.mxu0 0.0
      %5372 = vmatpush1.msra.mxu0 0.0
      %5373 = vmatprep.subr.mxu0 0.0
      %5374 = vmatpush1.msra.mxu0 0.0
      %5375 = vmatprep.subr.mxu0 0.0
      %5376 = vmatpush1.msra.mxu0 0.0
      %5377 = vmatprep.subr.mxu0 0.0
      %5378 = vmatpush1.msra.mxu0 0.0
      %5379 = vmatprep.mubr.f32.mxu0 0.0
      %5380 = vmatmul.mubr.f32.gmra.mrb[0].mxu0 %v5265
      %v5381 = vpop.f32.mrb[0].mxu0
      %v5382 = vadd.f32 0.0, %v5381
      %v5383 = vpop.f32.mrb[0].mxu0
      %v5384 = vadd.f32 0.0, %v5383
      %5385 = vdwg.mxu0
      %5386 = vmatprep.subr.mxu0 %v5203
      %5387 = vmatpush1.msra.mxu0 %v5202
      %5388 = vmatprep.subr.mxu0 %v5219
      %5389 = vmatpush1.msra.mxu0 %v5218
      %5390 = vmatprep.subr.mxu0 %v5235
      %5391 = vmatpush1.msra.mxu0 %v5234
      %5392 = vmatprep.subr.mxu0 %v5277
      %5393 = vmatpush1.msra.mxu0 %v5274
      %5394 = vmatprep.subr.mxu0 0.0
      %5395 = vmatpush1.msra.mxu0 0.0
      %5396 = vmatprep.subr.mxu0 0.0
      %5397 = vmatpush1.msra.mxu0 0.0
      %5398 = vmatprep.subr.mxu0 0.0
      %5399 = vmatpush1.msra.mxu0 0.0
      %5400 = vmatprep.subr.mxu0 0.0
      %5401 = vmatpush1.msra.mxu0 0.0
      %5402 = vmatprep.subr.mxu0 0.0
      %5403 = vmatpush1.msra.mxu0 0.0
      %5404 = vmatprep.subr.mxu0 0.0
      %5405 = vmatpush1.msra.mxu0 0.0
      %5406 = vmatprep.subr.mxu0 0.0
      %5407 = vmatpush1.msra.mxu0 0.0
      %5408 = vmatprep.subr.mxu0 0.0
      %5409 = vmatpush1.msra.mxu0 0.0
      %5410 = vmatprep.subr.mxu0 0.0
      %5411 = vmatpush1.msra.mxu0 0.0
      %5412 = vmatprep.subr.mxu0 0.0
      %5413 = vmatpush1.msra.mxu0 0.0
      %5414 = vmatprep.subr.mxu0 0.0
      %5415 = vmatpush1.msra.mxu0 0.0
      %5416 = vmatprep.subr.mxu0 0.0
      %5417 = vmatpush1.msra.mxu0 0.0
      %5418 = vmatprep.subr.mxu0 0.0
      %5419 = vmatpush1.msra.mxu0 0.0
      %5420 = vmatprep.subr.mxu0 0.0
      %5421 = vmatpush1.msra.mxu0 0.0
      %5422 = vmatprep.subr.mxu0 0.0
      %5423 = vmatpush1.msra.mxu0 0.0
      %5424 = vmatprep.subr.mxu0 0.0
      %5425 = vmatpush1.msra.mxu0 0.0
      %5426 = vmatprep.subr.mxu0 0.0
      %5427 = vmatpush1.msra.mxu0 0.0
      %5428 = vmatprep.subr.mxu0 0.0
      %5429 = vmatpush1.msra.mxu0 0.0
      %5430 = vmatprep.subr.mxu0 0.0
      %5431 = vmatpush1.msra.mxu0 0.0
      %5432 = vmatprep.subr.mxu0 0.0
      %5433 = vmatpush1.msra.mxu0 0.0
      %5434 = vmatprep.subr.mxu0 0.0
      %5435 = vmatpush1.msra.mxu0 0.0
      %5436 = vmatprep.subr.mxu0 0.0
      %5437 = vmatpush1.msra.mxu0 0.0
      %5438 = vmatprep.subr.mxu0 0.0
      %5439 = vmatpush1.msra.mxu0 0.0
      %5440 = vmatprep.subr.mxu0 0.0
      %5441 = vmatpush1.msra.mxu0 0.0
      %5442 = vmatprep.subr.mxu0 0.0
      %5443 = vmatpush1.msra.mxu0 0.0
      %5444 = vmatprep.subr.mxu0 0.0
      %5445 = vmatpush1.msra.mxu0 0.0
      %5446 = vmatprep.subr.mxu0 0.0
      %5447 = vmatpush1.msra.mxu0 0.0
      %5448 = vmatprep.subr.mxu0 0.0
      %5449 = vmatpush1.msra.mxu0 0.0
      %5450 = vmatprep.mubr.f32.mxu0 0.0
      %5451 = vmatmul.mubr.f32.gmra.mrb[0].mxu0 %v5265
      %v5452 = vpop.f32.mrb[0].mxu0
      %v5453 = vadd.f32 0.0, %v5452
      %v5454 = vpop.f32.mrb[0].mxu0
      %v5455 = vadd.f32 0.0, %v5454
      %5456 = vdwg.mxu0
      %5457 = vmatprep.subr.mxu0 %v5205
      %5458 = vmatpush1.msra.mxu0 %v5204
      %5459 = vmatprep.subr.mxu0 %v5221
      %5460 = vmatpush1.msra.mxu0 %v5220
      %5461 = vmatprep.subr.mxu0 %v5237
      %5462 = vmatpush1.msra.mxu0 %v5236
      %5463 = vmatprep.subr.mxu0 %v5283
      %5464 = vmatpush1.msra.mxu0 %v5280
      %5465 = vmatprep.subr.mxu0 0.0
      %5466 = vmatpush1.msra.mxu0 0.0
      %5467 = vmatprep.subr.mxu0 0.0
      %5468 = vmatpush1.msra.mxu0 0.0
      %5469 = vmatprep.subr.mxu0 0.0
      %5470 = vmatpush1.msra.mxu0 0.0
      %5471 = vmatprep.subr.mxu0 0.0
      %5472 = vmatpush1.msra.mxu0 0.0
      %5473 = vmatprep.subr.mxu0 0.0
      %5474 = vmatpush1.msra.mxu0 0.0
      %5475 = vmatprep.subr.mxu0 0.0
      %5476 = vmatpush1.msra.mxu0 0.0
      %5477 = vmatprep.subr.mxu0 0.0
      %5478 = vmatpush1.msra.mxu0 0.0
      %5479 = vmatprep.subr.mxu0 0.0
      %5480 = vmatpush1.msra.mxu0 0.0
      %5481 = vmatprep.subr.mxu0 0.0
      %5482 = vmatpush1.msra.mxu0 0.0
      %5483 = vmatprep.subr.mxu0 0.0
      %5484 = vmatpush1.msra.mxu0 0.0
      %5485 = vmatprep.subr.mxu0 0.0
      %5486 = vmatpush1.msra.mxu0 0.0
      %5487 = vmatprep.subr.mxu0 0.0
      %5488 = vmatpush1.msra.mxu0 0.0
      %5489 = vmatprep.subr.mxu0 0.0
      %5490 = vmatpush1.msra.mxu0 0.0
      %5491 = vmatprep.subr.mxu0 0.0
      %5492 = vmatpush1.msra.mxu0 0.0
      %5493 = vmatprep.subr.mxu0 0.0
      %5494 = vmatpush1.msra.mxu0 0.0
      %5495 = vmatprep.subr.mxu0 0.0
      %5496 = vmatpush1.msra.mxu0 0.0
      %5497 = vmatprep.subr.mxu0 0.0
      %5498 = vmatpush1.msra.mxu0 0.0
      %5499 = vmatprep.subr.mxu0 0.0
      %5500 = vmatpush1.msra.mxu0 0.0
      %5501 = vmatprep.subr.mxu0 0.0
      %5502 = vmatpush1.msra.mxu0 0.0
      %5503 = vmatprep.subr.mxu0 0.0
      %5504 = vmatpush1.msra.mxu0 0.0
      %5505 = vmatprep.subr.mxu0 0.0
      %5506 = vmatpush1.msra.mxu0 0.0
      %5507 = vmatprep.subr.mxu0 0.0
      %5508 = vmatpush1.msra.mxu0 0.0
      %5509 = vmatprep.subr.mxu0 0.0
      %5510 = vmatpush1.msra.mxu0 0.0
      %5511 = vmatprep.subr.mxu0 0.0
      %5512 = vmatpush1.msra.mxu0 0.0
      %5513 = vmatprep.subr.mxu0 0.0
      %5514 = vmatpush1.msra.mxu0 0.0
      %5515 = vmatprep.subr.mxu0 0.0
      %5516 = vmatpush1.msra.mxu0 0.0
      %5517 = vmatprep.subr.mxu0 0.0
      %5518 = vmatpush1.msra.mxu0 0.0
      %5519 = vmatprep.subr.mxu0 0.0
      %5520 = vmatpush1.msra.mxu0 0.0
      %5521 = vmatprep.mubr.f32.mxu0 0.0
      %5522 = vmatmul.mubr.f32.gmra.mrb[0].mxu0 %v5265
      %v5523 = vpop.f32.mrb[0].mxu0
      %v5524 = vadd.f32 0.0, %v5523
      %v5525 = vpop.f32.mrb[0].mxu0
      %v5526 = vadd.f32 0.0, %v5525
      %5527 = vdwg.mxu0
      %5528 = vmatprep.subr.mxu0 %v5207
      %5529 = vmatpush1.msra.mxu0 %v5206
      %5530 = vmatprep.subr.mxu0 %v5223
      %5531 = vmatpush1.msra.mxu0 %v5222
      %5532 = vmatprep.subr.mxu0 %v5239
      %5533 = vmatpush1.msra.mxu0 %v5238
      %5534 = vmatprep.subr.mxu0 %v5289
      %5535 = vmatpush1.msra.mxu0 %v5286
      %5536 = vmatprep.subr.mxu0 0.0
      %5537 = vmatpush1.msra.mxu0 0.0
      %5538 = vmatprep.subr.mxu0 0.0
      %5539 = vmatpush1.msra.mxu0 0.0
      %5540 = vmatprep.subr.mxu0 0.0
      %5541 = vmatpush1.msra.mxu0 0.0
      %5542 = vmatprep.subr.mxu0 0.0
      %5543 = vmatpush1.msra.mxu0 0.0
      %5544 = vmatprep.subr.mxu0 0.0
      %5545 = vmatpush1.msra.mxu0 0.0
      %5546 = vmatprep.subr.mxu0 0.0
      %5547 = vmatpush1.msra.mxu0 0.0
      %5548 = vmatprep.subr.mxu0 0.0
      %5549 = vmatpush1.msra.mxu0 0.0
      %5550 = vmatprep.subr.mxu0 0.0
      %5551 = vmatpush1.msra.mxu0 0.0
      %5552 = vmatprep.subr.mxu0 0.0
      %5553 = vmatpush1.msra.mxu0 0.0
      %5554 = vmatprep.subr.mxu0 0.0
      %5555 = vmatpush1.msra.mxu0 0.0
      %5556 = vmatprep.subr.mxu0 0.0
      %5557 = vmatpush1.msra.mxu0 0.0
      %5558 = vmatprep.subr.mxu0 0.0
      %5559 = vmatpush1.msra.mxu0 0.0
      %5560 = vmatprep.subr.mxu0 0.0
      %5561 = vmatpush1.msra.mxu0 0.0
      %5562 = vmatprep.subr.mxu0 0.0
      %5563 = vmatpush1.msra.mxu0 0.0
      %5564 = vmatprep.subr.mxu0 0.0
      %5565 = vmatpush1.msra.mxu0 0.0
      %5566 = vmatprep.subr.mxu0 0.0
      %5567 = vmatpush1.msra.mxu0 0.0
      %5568 = vmatprep.subr.mxu0 0.0
      %5569 = vmatpush1.msra.mxu0 0.0
      %5570 = vmatprep.subr.mxu0 0.0
      %5571 = vmatpush1.msra.mxu0 0.0
      %5572 = vmatprep.subr.mxu0 0.0
      %5573 = vmatpush1.msra.mxu0 0.0
      %5574 = vmatprep.subr.mxu0 0.0
      %5575 = vmatpush1.msra.mxu0 0.0
      %5576 = vmatprep.subr.mxu0 0.0
      %5577 = vmatpush1.msra.mxu0 0.0
      %5578 = vmatprep.subr.mxu0 0.0
      %5579 = vmatpush1.msra.mxu0 0.0
      %5580 = vmatprep.subr.mxu0 0.0
      %5581 = vmatpush1.msra.mxu0 0.0
      %5582 = vmatprep.subr.mxu0 0.0
      %5583 = vmatpush1.msra.mxu0 0.0
      %5584 = vmatprep.subr.mxu0 0.0
      %5585 = vmatpush1.msra.mxu0 0.0
      %5586 = vmatprep.subr.mxu0 0.0
      %5587 = vmatpush1.msra.mxu0 0.0
      %5588 = vmatprep.subr.mxu0 0.0
      %5589 = vmatpush1.msra.mxu0 0.0
      %5590 = vmatprep.subr.mxu0 0.0
      %5591 = vmatpush1.msra.mxu0 0.0
      %5592 = vmatprep.mubr.f32.mxu0 0.0
      %5593 = vmatmul.mubr.f32.gmra.mrb[0].mxu0 %v5265
      %v5594 = vpop.f32.mrb[0].mxu0
      %v5595 = vadd.f32 0.0, %v5594
      %v5596 = vpop.f32.mrb[0].mxu0
      %v5597 = vadd.f32 0.0, %v5596
      %5598 = vdwg.mxu0
      %5599 = vmatprep.subr.mxu0 %v5209
      %5600 = vmatpush1.msra.mxu0 %v5208
      %5601 = vmatprep.subr.mxu0 %v5225
      %5602 = vmatpush1.msra.mxu0 %v5224
      %5603 = vmatprep.subr.mxu0 %v5241
      %5604 = vmatpush1.msra.mxu0 %v5240
      %5605 = vmatprep.subr.mxu0 %v5295
      %5606 = vmatpush1.msra.mxu0 %v5292
      %5607 = vmatprep.subr.mxu0 0.0
      %5608 = vmatpush1.msra.mxu0 0.0
      %5609 = vmatprep.subr.mxu0 0.0
      %5610 = vmatpush1.msra.mxu0 0.0
      %5611 = vmatprep.subr.mxu0 0.0
      %5612 = vmatpush1.msra.mxu0 0.0
      %5613 = vmatprep.subr.mxu0 0.0
      %5614 = vmatpush1.msra.mxu0 0.0
      %5615 = vmatprep.subr.mxu0 0.0
      %5616 = vmatpush1.msra.mxu0 0.0
      %5617 = vmatprep.subr.mxu0 0.0
      %5618 = vmatpush1.msra.mxu0 0.0
      %5619 = vmatprep.subr.mxu0 0.0
      %5620 = vmatpush1.msra.mxu0 0.0
      %5621 = vmatprep.subr.mxu0 0.0
      %5622 = vmatpush1.msra.mxu0 0.0
      %5623 = vmatprep.subr.mxu0 0.0
      %5624 = vmatpush1.msra.mxu0 0.0
      %5625 = vmatprep.subr.mxu0 0.0
      %5626 = vmatpush1.msra.mxu0 0.0
      %5627 = vmatprep.subr.mxu0 0.0
      %5628 = vmatpush1.msra.mxu0 0.0
      %5629 = vmatprep.subr.mxu0 0.0
      %5630 = vmatpush1.msra.mxu0 0.0
      %5631 = vmatprep.subr.mxu0 0.0
      %5632 = vmatpush1.msra.mxu0 0.0
      %5633 = vmatprep.subr.mxu0 0.0
      %5634 = vmatpush1.msra.mxu0 0.0
      %5635 = vmatprep.subr.mxu0 0.0
      %5636 = vmatpush1.msra.mxu0 0.0
      %5637 = vmatprep.subr.mxu0 0.0
      %5638 = vmatpush1.msra.mxu0 0.0
      %5639 = vmatprep.subr.mxu0 0.0
      %5640 = vmatpush1.msra.mxu0 0.0
      %5641 = vmatprep.subr.mxu0 0.0
      %5642 = vmatpush1.msra.mxu0 0.0
      %5643 = vmatprep.subr.mxu0 0.0
      %5644 = vmatpush1.msra.mxu0 0.0
      %5645 = vmatprep.subr.mxu0 0.0
      %5646 = vmatpush1.msra.mxu0 0.0
      %5647 = vmatprep.subr.mxu0 0.0
      %5648 = vmatpush1.msra.mxu0 0.0
      %5649 = vmatprep.subr.mxu0 0.0
      %5650 = vmatpush1.msra.mxu0 0.0
      %5651 = vmatprep.subr.mxu0 0.0
      %5652 = vmatpush1.msra.mxu0 0.0
      %5653 = vmatprep.subr.mxu0 0.0
      %5654 = vmatpush1.msra.mxu0 0.0
      %5655 = vmatprep.subr.mxu0 0.0
      %5656 = vmatpush1.msra.mxu0 0.0
      %5657 = vmatprep.subr.mxu0 0.0
      %5658 = vmatpush1.msra.mxu0 0.0
      %5659 = vmatprep.subr.mxu0 0.0
      %5660 = vmatpush1.msra.mxu0 0.0
      %5661 = vmatprep.subr.mxu0 0.0
      %5662 = vmatpush1.msra.mxu0 0.0
      %5663 = vmatprep.mubr.f32.mxu0 0.0
      %5664 = vmatmul.mubr.f32.gmra.mrb[0].mxu0 %v5265
      %v5665 = vpop.f32.mrb[0].mxu0
      %v5666 = vadd.f32 0.0, %v5665
      %v5667 = vpop.f32.mrb[0].mxu0
      %v5668 = vadd.f32 0.0, %v5667
      %5669 = vdwg.mxu0
      %5670 = vmatprep.subr.mxu0 %v5211
      %5671 = vmatpush1.msra.mxu0 %v5210
      %5672 = vmatprep.subr.mxu0 %v5227
      %5673 = vmatpush1.msra.mxu0 %v5226
      %5674 = vmatprep.subr.mxu0 %v5243
      %5675 = vmatpush1.msra.mxu0 %v5242
      %5676 = vmatprep.subr.mxu0 %v5301
      %5677 = vmatpush1.msra.mxu0 %v5298
      %5678 = vmatprep.subr.mxu0 0.0
      %5679 = vmatpush1.msra.mxu0 0.0
      %5680 = vmatprep.subr.mxu0 0.0
      %5681 = vmatpush1.msra.mxu0 0.0
      %5682 = vmatprep.subr.mxu0 0.0
      %5683 = vmatpush1.msra.mxu0 0.0
      %5684 = vmatprep.subr.mxu0 0.0
      %5685 = vmatpush1.msra.mxu0 0.0
      %5686 = vmatprep.subr.mxu0 0.0
      %5687 = vmatpush1.msra.mxu0 0.0
      %5688 = vmatprep.subr.mxu0 0.0
      %5689 = vmatpush1.msra.mxu0 0.0
      %5690 = vmatprep.subr.mxu0 0.0
      %5691 = vmatpush1.msra.mxu0 0.0
      %5692 = vmatprep.subr.mxu0 0.0
      %5693 = vmatpush1.msra.mxu0 0.0
      %5694 = vmatprep.subr.mxu0 0.0
      %5695 = vmatpush1.msra.mxu0 0.0
      %5696 = vmatprep.subr.mxu0 0.0
      %5697 = vmatpush1.msra.mxu0 0.0
      %5698 = vmatprep.subr.mxu0 0.0
      %5699 = vmatpush1.msra.mxu0 0.0
      %5700 = vmatprep.subr.mxu0 0.0
      %5701 = vmatpush1.msra.mxu0 0.0
      %5702 = vmatprep.subr.mxu0 0.0
      %5703 = vmatpush1.msra.mxu0 0.0
      %5704 = vmatprep.subr.mxu0 0.0
      %5705 = vmatpush1.msra.mxu0 0.0
      %5706 = vmatprep.subr.mxu0 0.0
      %5707 = vmatpush1.msra.mxu0 0.0
      %5708 = vmatprep.subr.mxu0 0.0
      %5709 = vmatpush1.msra.mxu0 0.0
      %5710 = vmatprep.subr.mxu0 0.0
      %5711 = vmatpush1.msra.mxu0 0.0
      %5712 = vmatprep.subr.mxu0 0.0
      %5713 = vmatpush1.msra.mxu0 0.0
      %5714 = vmatprep.subr.mxu0 0.0
      %5715 = vmatpush1.msra.mxu0 0.0
      %5716 = vmatprep.subr.mxu0 0.0
      %5717 = vmatpush1.msra.mxu0 0.0
      %5718 = vmatprep.subr.mxu0 0.0
      %5719 = vmatpush1.msra.mxu0 0.0
      %5720 = vmatprep.subr.mxu0 0.0
      %5721 = vmatpush1.msra.mxu0 0.0
      %5722 = vmatprep.subr.mxu0 0.0
      %5723 = vmatpush1.msra.mxu0 0.0
      %5724 = vmatprep.subr.mxu0 0.0
      %5725 = vmatpush1.msra.mxu0 0.0
      %5726 = vmatprep.subr.mxu0 0.0
      %5727 = vmatpush1.msra.mxu0 0.0
      %5728 = vmatprep.subr.mxu0 0.0
      %5729 = vmatpush1.msra.mxu0 0.0
      %5730 = vmatprep.subr.mxu0 0.0
      %5731 = vmatpush1.msra.mxu0 0.0
      %5732 = vmatprep.subr.mxu0 0.0
      %5733 = vmatpush1.msra.mxu0 0.0
      %5734 = vmatprep.mubr.f32.mxu0 0.0
      %5735 = vmatmul.mubr.f32.gmra.mrb[0].mxu0 %v5265
      %v5736 = vpop.f32.mrb[0].mxu0
      %v5737 = vadd.f32 0.0, %v5736
      %v5738 = vpop.f32.mrb[0].mxu0
      %v5739 = vadd.f32 0.0, %v5738
      %5740 = vdwg.mxu0
      %5741 = vmatprep.subr.mxu0 %v5213
      %5742 = vmatpush1.msra.mxu0 %v5212
      %5743 = vmatprep.subr.mxu0 %v5229
      %5744 = vmatpush1.msra.mxu0 %v5228
      %5745 = vmatprep.subr.mxu0 %v5245
      %5746 = vmatpush1.msra.mxu0 %v5244
      %5747 = vmatprep.subr.mxu0 %v5307
      %5748 = vmatpush1.msra.mxu0 %v5304
      %5749 = vmatprep.subr.mxu0 0.0
      %5750 = vmatpush1.msra.mxu0 0.0
      %5751 = vmatprep.subr.mxu0 0.0
      %5752 = vmatpush1.msra.mxu0 0.0
      %5753 = vmatprep.subr.mxu0 0.0
      %5754 = vmatpush1.msra.mxu0 0.0
      %5755 = vmatprep.subr.mxu0 0.0
      %5756 = vmatpush1.msra.mxu0 0.0
      %5757 = vmatprep.subr.mxu0 0.0
      %5758 = vmatpush1.msra.mxu0 0.0
      %5759 = vmatprep.subr.mxu0 0.0
      %5760 = vmatpush1.msra.mxu0 0.0
      %5761 = vmatprep.subr.mxu0 0.0
      %5762 = vmatpush1.msra.mxu0 0.0
      %5763 = vmatprep.subr.mxu0 0.0
      %5764 = vmatpush1.msra.mxu0 0.0
      %5765 = vmatprep.subr.mxu0 0.0
      %5766 = vmatpush1.msra.mxu0 0.0
      %5767 = vmatprep.subr.mxu0 0.0
      %5768 = vmatpush1.msra.mxu0 0.0
      %5769 = vmatprep.subr.mxu0 0.0
      %5770 = vmatpush1.msra.mxu0 0.0
      %5771 = vmatprep.subr.mxu0 0.0
      %5772 = vmatpush1.msra.mxu0 0.0
      %5773 = vmatprep.subr.mxu0 0.0
      %5774 = vmatpush1.msra.mxu0 0.0
      %5775 = vmatprep.subr.mxu0 0.0
      %5776 = vmatpush1.msra.mxu0 0.0
      %5777 = vmatprep.subr.mxu0 0.0
      %5778 = vmatpush1.msra.mxu0 0.0
      %5779 = vmatprep.subr.mxu0 0.0
      %5780 = vmatpush1.msra.mxu0 0.0
      %5781 = vmatprep.subr.mxu0 0.0
      %5782 = vmatpush1.msra.mxu0 0.0
      %5783 = vmatprep.subr.mxu0 0.0
      %5784 = vmatpush1.msra.mxu0 0.0
      %5785 = vmatprep.subr.mxu0 0.0
      %5786 = vmatpush1.msra.mxu0 0.0
      %5787 = vmatprep.subr.mxu0 0.0
      %5788 = vmatpush1.msra.mxu0 0.0
      %5789 = vmatprep.subr.mxu0 0.0
      %5790 = vmatpush1.msra.mxu0 0.0
      %5791 = vmatprep.subr.mxu0 0.0
      %5792 = vmatpush1.msra.mxu0 0.0
      %5793 = vmatprep.subr.mxu0 0.0
      %5794 = vmatpush1.msra.mxu0 0.0
      %5795 = vmatprep.subr.mxu0 0.0
      %5796 = vmatpush1.msra.mxu0 0.0
      %5797 = vmatprep.subr.mxu0 0.0
      %5798 = vmatpush1.msra.mxu0 0.0
      %5799 = vmatprep.subr.mxu0 0.0
      %5800 = vmatpush1.msra.mxu0 0.0
      %5801 = vmatprep.subr.mxu0 0.0
      %5802 = vmatpush1.msra.mxu0 0.0
      %5803 = vmatprep.subr.mxu0 0.0
      %5804 = vmatpush1.msra.mxu0 0.0
      %5805 = vmatprep.mubr.f32.mxu0 0.0
      %5806 = vmatmul.mubr.f32.gmra.mrb[0].mxu0 %v5265
      %v5807 = vpop.f32.mrb[0].mxu0
      %v5808 = vadd.f32 0.0, %v5807
      %v5809 = vpop.f32.mrb[0].mxu0
      %v5810 = vadd.f32 0.0, %v5809
      %5811 = vdwg.mxu0
      %5812 = vmatprep.subr.mxu0 %v5215
      %5813 = vmatpush1.msra.mxu0 %v5214
      %5814 = vmatprep.subr.mxu0 %v5231
      %5815 = vmatpush1.msra.mxu0 %v5230
      %5816 = vmatprep.subr.mxu0 %v5247
      %5817 = vmatpush1.msra.mxu0 %v5246
      %5818 = vmatprep.subr.mxu0 %v5313
      %5819 = vmatpush1.msra.mxu0 %v5310
      %5820 = vmatprep.subr.mxu0 0.0
      %5821 = vmatpush1.msra.mxu0 0.0
      %5822 = vmatprep.subr.mxu0 0.0
      %5823 = vmatpush1.msra.mxu0 0.0
      %5824 = vmatprep.subr.mxu0 0.0
      %5825 = vmatpush1.msra.mxu0 0.0
      %5826 = vmatprep.subr.mxu0 0.0
      %5827 = vmatpush1.msra.mxu0 0.0
      %5828 = vmatprep.subr.mxu0 0.0
      %5829 = vmatpush1.msra.mxu0 0.0
      %5830 = vmatprep.subr.mxu0 0.0
      %5831 = vmatpush1.msra.mxu0 0.0
      %5832 = vmatprep.subr.mxu0 0.0
      %5833 = vmatpush1.msra.mxu0 0.0
      %5834 = vmatprep.subr.mxu0 0.0
      %5835 = vmatpush1.msra.mxu0 0.0
      %5836 = vmatprep.subr.mxu0 0.0
      %5837 = vmatpush1.msra.mxu0 0.0
      %5838 = vmatprep.subr.mxu0 0.0
      %5839 = vmatpush1.msra.mxu0 0.0
      %5840 = vmatprep.subr.mxu0 0.0
      %5841 = vmatpush1.msra.mxu0 0.0
      %5842 = vmatprep.subr.mxu0 0.0
      %5843 = vmatpush1.msra.mxu0 0.0
      %5844 = vmatprep.subr.mxu0 0.0
      %5845 = vmatpush1.msra.mxu0 0.0
      %5846 = vmatprep.subr.mxu0 0.0
      %5847 = vmatpush1.msra.mxu0 0.0
      %5848 = vmatprep.subr.mxu0 0.0
      %5849 = vmatpush1.msra.mxu0 0.0
      %5850 = vmatprep.subr.mxu0 0.0
      %5851 = vmatpush1.msra.mxu0 0.0
      %5852 = vmatprep.subr.mxu0 0.0
      %5853 = vmatpush1.msra.mxu0 0.0
      %5854 = vmatprep.subr.mxu0 0.0
      %5855 = vmatpush1.msra.mxu0 0.0
      %5856 = vmatprep.subr.mxu0 0.0
      %5857 = vmatpush1.msra.mxu0 0.0
      %5858 = vmatprep.subr.mxu0 0.0
      %5859 = vmatpush1.msra.mxu0 0.0
      %5860 = vmatprep.subr.mxu0 0.0
      %5861 = vmatpush1.msra.mxu0 0.0
      %5862 = vmatprep.subr.mxu0 0.0
      %5863 = vmatpush1.msra.mxu0 0.0
      %5864 = vmatprep.subr.mxu0 0.0
      %5865 = vmatpush1.msra.mxu0 0.0
      %5866 = vmatprep.subr.mxu0 0.0
      %5867 = vmatpush1.msra.mxu0 0.0
      %5868 = vmatprep.subr.mxu0 0.0
      %5869 = vmatpush1.msra.mxu0 0.0
      %5870 = vmatprep.subr.mxu0 0.0
      %5871 = vmatpush1.msra.mxu0 0.0
      %5872 = vmatprep.subr.mxu0 0.0
      %5873 = vmatpush1.msra.mxu0 0.0
      %5874 = vmatprep.subr.mxu0 0.0
      %5875 = vmatpush1.msra.mxu0 0.0
      %5876 = vmatprep.mubr.f32.mxu0 0.0
      %5877 = vmatmul.mubr.f32.gmra.mrb[0].mxu0 %v5265
      %v5878 = vpop.f32.mrb[0].mxu0
      %v5879 = vadd.f32 0.0, %v5878
      %v5880 = vpop.f32.mrb[0].mxu0
      %v5881 = vadd.f32 0.0, %v5880
      %5882 = vdwg.mxu0
      %v5883 = vadd.f32 %v5182, %v5382
      %v5884 = vadd.f32 %v5183, %v5384
      %v5885 = vadd.f32 %v5184, %v5453
      %v5886 = vadd.f32 %v5185, %v5455
      %v5887 = vadd.f32 %v5186, %v5524
      %v5888 = vadd.f32 %v5187, %v5526
      %v5889 = vadd.f32 %v5188, %v5595
      %v5890 = vadd.f32 %v5189, %v5597
      %v5891 = vadd.f32 %v5190, %v5666
      %v5892 = vadd.f32 %v5191, %v5668
      %v5893 = vadd.f32 %v5192, %v5737
      %v5894 = vadd.f32 %v5193, %v5739
      %v5895 = vadd.f32 %v5194, %v5808
      %v5896 = vadd.f32 %v5195, %v5810
      %v5897 = vadd.f32 %v5196, %v5879
      %v5898 = vadd.f32 %v5197, %v5881
      %v5899 = vld [vmem:[%s2] sm:$0xff]
      %5901 = vset.pattern.permute.xlu0 0
      %5902 = vperm.xlu0 %5901, %v5899
      %v5903 = vpop.permute.xlu0 %5902
      %v5905 = vadd.f32 %v5883, %v5903
      %v5906 = vadd.f32 %v5884, %v5903
      %v5907 = vadd.f32 %v5885, %v5903
      %v5908 = vadd.f32 %v5886, %v5903
      %v5909 = vadd.f32 %v5887, %v5903
      %v5910 = vadd.f32 %v5888, %v5903
      %v5911 = vadd.f32 %v5889, %v5903
      %v5912 = vadd.f32 %v5890, %v5903
      %v5913 = vadd.f32 %v5891, %v5903
      %v5914 = vadd.f32 %v5892, %v5903
      %v5915 = vadd.f32 %v5893, %v5903
      %v5916 = vadd.f32 %v5894, %v5903
      %v5917 = vadd.f32 %v5895, %v5903
      %v5918 = vadd.f32 %v5896, %v5903
      %v5919 = vadd.f32 %v5897, %v5903
      %v5920 = vadd.f32 %v5898, %v5903
      %5921 = vst [vmem:[%s170] sm:$0xff] %v5905
      %5922 = vst [vmem:[%s170 + $0x8] sm:$0xff] %v5906
      %5923 = vst [vmem:[%s170 + $0x10] sm:$0xff] %v5907
      %5924 = vst [vmem:[%s170 + $0x18] sm:$0xff] %v5908
      %5925 = vst [vmem:[%s170 + $0x20] sm:$0xff] %v5909
      %5926 = vst [vmem:[%s170 + $0x28] sm:$0xff] %v5910
      %5927 = vst [vmem:[%s170 + $0x30] sm:$0xff] %v5911
      %5928 = vst [vmem:[%s170 + $0x38] sm:$0xff] %v5912
      %5929 = vst [vmem:[%s170 + $0x40] sm:$0xff] %v5913
      %5930 = vst [vmem:[%s170 + $0x48] sm:$0xff] %v5914
      %5931 = vst [vmem:[%s170 + $0x50] sm:$0xff] %v5915
      %5932 = vst [vmem:[%s170 + $0x58] sm:$0xff] %v5916
      %5933 = vst [vmem:[%s170 + $0x60] sm:$0xff] %v5917
      %5934 = vst [vmem:[%s170 + $0x68] sm:$0xff] %v5918
      %5935 = vst [vmem:[%s170 + $0x70] sm:$0xff] %v5919
      %5936 = vst [vmem:[%s170 + $0x78] sm:$0xff] %v5920
      %p5937 = scmp.lt.s32.totalorder %s14, 1
      %s5938 = scalar_select %p5937, %s14, 1
      %s5939 = smul.addr %s5938, 16
      %s5940 = smul.addr %s5939, 8
      %s5941 = scalar_lea.vmem %s3, %s5940
      // Predicated region
      $region33: #{feature_map_block.1} parent=31 // pred_check
        %p5942 = pneg %p100
      $region34: #{feature_map_block.1} parent=31 // pred_check_branch
        %5944 = sbr.rel (%p5942) target = $region36
      $region35: #{feature_map_block.1} parent=31 // pred_region
        _
      $region36: #{feature_map_block.1} parent=31 // pred_fallthru
        _
    $region32: #{feature_map_block.1} parent=5 // pred_fallthru
      _
    %p5945 = scmp.le.s32.totalorder 2, %s9
    // Predicated region
    $region37: #{feature_map_block.1} parent=5 // pred_check
      %p5946 = pneg %p5945
    $region38: #{feature_map_block.1} parent=5 // pred_check_branch
      %5948 = sbr.rel (%p5946) target = $region40
    $region39: #{feature_map_block.1} parent=5 // pred_region
      %s5949 = ssub.s32 %s9, 2
      // Predicated region
      $region41: #{feature_map_block.1} parent=39 // pred_check
        %p5950 = pneg %p106
      $region42: #{feature_map_block.1} parent=39 // pred_check_branch
        %5952 = sbr.rel (%p5950) target = $region44
      $region43: #{feature_map_block.1} parent=39 // pred_region
        %p5953 = scmp.lt.s32.totalorder %s15, 1
        %s5954 = scalar_select %p5953, %s15, 1
        %s5955 = smul.addr %s5954, 16
        %s5956 = smul.addr %s5955, 8
        %s5957 = scalar_lea.vmem %s3, %s5956
      $region44: #{feature_map_block.1} parent=39 // pred_fallthru
        _
    $region40: #{feature_map_block.1} parent=5 // pred_fallthru
      _
  $region6: #{feature_map_block.1} parent=0 // loop_footer
    %s13 = sadd.s32 1, %s9
  $region7: #{feature_map_block.1} parent=0 // loop_footer_branch
    %8 = sbr.rel target = $region3
  $region8: #{feature_map_block.1} parent=0 // loop_exit
    _

</llo_original>
